<compile_context>
chip_gen: v7x
topology: tpu7x:2x2x1
jax: 0.10.0
libtpu: 0.0.40
codegen_flags: <defaults>
</compile_context>

<pallas_src>
import numpy as np

import jax
import jax.numpy as jnp
from jax import lax
from jax.experimental import pallas as pl
from jax.experimental.pallas import tpu as pltpu

IGNORE_INDEX = 0
_NO_EDGE_SENTINEL = 1e30  # squared-distance sentinel when a channel has no edge pixel
# TODO(synk): scipy's behavior for an all-zero edge channel (no zero pixel in
# 1 - edge_map) is ill-defined here; we use a large finite distance instead.


def _refined_reciprocal(x):
    """EUP approximate reciprocal + 2 Newton steps: keeps divides off the VALU while
    staying bit-close to exact division (error << 1e-5 relative)."""
    r = pl.reciprocal(x, approx=True)
    r = r * (2.0 - x * r)
    r = r * (2.0 - x * r)
    return r


def _boundary_loss_kernel(d2_ref, edge_ref, preds_ref, out_ref):
    """Fused kernel: EDT for all (b,c) + global-mean normalization + channel softmax
    + elementwise product.

    d2_ref:    (HW, HW) float32   pairwise squared pixel distances (constant table)
    edge_ref:  (B, C, HW) float32 edge maps, spatially flattened (lane-dense)
    preds_ref: (B, C, HW) float32 logits
    out_ref:   (B, C, HW) float32
    """
    B, C, HW = edge_ref.shape

    d2 = d2_ref[...]                                     # (HW, HW)
    edge = edge_ref[...]                                 # (B, C, HW)

    # --- 1) exact EDT: dist[b,c,p] = sqrt(min_{q : edge[b,c,q]==1} d2[p,q]) --------
    is_edge = edge[:, :, None, :] > 0.5                  # (B, C, 1, HW) -> bcast over p
    masked = jnp.where(is_edge, d2[None, None, :, :], _NO_EDGE_SENTINEL)  # (B,C,HW,HW)
    dist = jnp.sqrt(jnp.min(masked, axis=-1))            # (B, C, HW), last-axis reduce
    # TODO(synk): for large H*W, chunk the q axis of this min (or switch to a separable
    # Felzenszwalb EDT) so the (HW, HW) intermediates never have to fit in VMEM.

    # ignore channel stays zero (vector mask instead of a pl.when branch)
    ch = lax.broadcasted_iota(jnp.int32, (B, C, HW), 1)
    dist = jnp.where(ch == IGNORE_INDEX, 0.0, dist)

    # --- 2) global mean normalization (mean over all B*C*HW incl. the zero channel) -
    mean_d = jnp.sum(dist, keepdims=True) * (1.0 / (B * C * HW))    # (1, 1, 1)
    dm_norm = jnp.where(mean_d > 0.0, dist * _refined_reciprocal(mean_d), 0.0)

    # --- 3) softmax over channels (4-sublane reduce) * normalized distance ----------
    preds = preds_ref[...]                               # (B, C, HW)
    m = jnp.max(preds, axis=1, keepdims=True)            # (B, 1, HW)
    e = jnp.exp(preds - m)
    s = jnp.sum(e, axis=1, keepdims=True)                # (B, 1, HW)
    probs = e * _refined_reciprocal(s)

    out_ref[...] = dm_norm * probs


def _pairwise_sq_dist_table(H, W):
    """(H*W, H*W) float32 table of squared pixel distances. Built with numpy at trace
    time so it is a compile-time constant (hoisted out of all per-(b,c) work)."""
    ys, xs = np.meshgrid(np.arange(H), np.arange(W), indexing="ij")
    ys = ys.reshape(-1).astype(np.float32)
    xs = xs.reshape(-1).astype(np.float32)
    d2 = (ys[:, None] - ys[None, :]) ** 2 + (xs[:, None] - xs[None, :]) ** 2
    return jnp.asarray(d2, dtype=jnp.float32)


def boundary_loss(preds, edge_map):
    """JAX wrapper. preds, edge_map: (B, C, H, W) float32. Returns (B, C, H, W)."""
    preds = preds.astype(jnp.float32)
    edge_map = edge_map.astype(jnp.float32)
    B, C, H, W = preds.shape
    HW = H * W

    d2 = _pairwise_sq_dist_table(H, W)          # (HW, HW) constant
    preds_f = preds.reshape(B, C, HW)           # lane-dense last dim (256)
    edge_f = edge_map.reshape(B, C, HW)

    out = pl.pallas_call(
        _boundary_loss_kernel,
        out_shape=jax.ShapeDtypeStruct((B, C, HW), jnp.float32),
        grid=(1,),
        in_specs=[pl.BlockSpec((HW, HW), lambda i: (0, 0)),
                  pl.BlockSpec((B, C, HW), lambda i: (0, 0, 0)),
                  pl.BlockSpec((B, C, HW), lambda i: (0, 0, 0))],
        out_specs=pl.BlockSpec((B, C, HW), lambda i: (0, 0, 0)),
        compiler_params=pltpu.CompilerParams(
            dimension_semantics=("arbitrary",),
            vmem_limit_bytes=32 * 1024 * 1024),
    )(d2, edge_f, preds_f)
    return out.reshape(B, C, H, W)


def _reference(preds, edge_map):
    """Pure-numpy reference reproducing the PyTorch forward semantics."""
    preds = np.asarray(preds, np.float32)
    edge = np.asarray(edge_map, np.float32)
    B, C, H, W = edge.shape
    dist = np.zeros_like(edge)
    ys, xs = np.meshgrid(np.arange(H), np.arange(W), indexing="ij")
    for b in range(B):
        for c in range(C):
            if c == IGNORE_INDEX:
                continue
            pts = np.argwhere(edge[b, c] > 0.5)
            if len(pts) == 0:
                dist[b, c] = np.sqrt(np.float32(_NO_EDGE_SENTINEL))
                continue
            d2 = ((ys[..., None] - pts[:, 0]) ** 2 +
                  (xs[..., None] - pts[:, 1]) ** 2)
            dist[b, c] = np.sqrt(d2.min(axis=-1))
    mean = dist.mean()
    dm = dist / mean if mean > 0 else np.zeros_like(dist)
    x = preds - preds.max(axis=1, keepdims=True)
    e = np.exp(x)
    probs = e / e.sum(axis=1, keepdims=True)
    return dm * probs


if __name__ == "__main__":
    B, C, H, W = 2, 4, 16, 16
    key = jax.random.PRNGKey(0)
    k_preds, k_edge = jax.random.split(key)

    preds = jax.random.normal(k_preds, (B, C, H, W), dtype=jnp.float32)
    edge_map = (jax.random.uniform(k_edge, (B, C, H, W)) < 0.1).astype(jnp.float32)
    # guarantee at least one edge pixel per channel so distances are well defined
    edge_map = edge_map.at[:, :, 0, 0].set(1.0)

    out = jax.jit(boundary_loss)(preds, edge_map)
    out = jax.block_until_ready(out)

    ref = _reference(np.asarray(preds), np.asarray(edge_map))
    # tolerance covers the EUP approximate-reciprocal (+ Newton refinement) path
    np.testing.assert_allclose(np.asarray(out), ref, rtol=1e-4, atol=1e-4)

    print("KERNEL_OK")
</pallas_src>

<mosaic_0001>
module attributes {stable_mosaic.version = 11 : i64} {
  func.func @_boundary_loss_kernel(%arg0: i32, %arg1: memref<256x256xf32, #tpu.memory_space<vmem>>, %arg2: memref<2x4x256xf32, #tpu.memory_space<vmem>>, %arg3: memref<2x4x256xf32, #tpu.memory_space<vmem>>, %arg4: memref<2x4x256xf32, #tpu.memory_space<vmem>>) attributes {dimension_semantics = [#tpu.dimension_semantics<arbitrary>], iteration_bounds = array<i64: 1>, scalar_prefetch = 0 : i64, scratch_operands = 0 : i64, tpu.core_type = #tpu.core_type<tc>, window_params = [{pipeline_mode = #tpu.pipeline_mode<synchronous>, transform_indices = @transform_0, window_bounds = array<i64: 256, 256>}, {pipeline_mode = #tpu.pipeline_mode<synchronous>, transform_indices = @transform_1, window_bounds = array<i64: 2, 4, 256>}, {pipeline_mode = #tpu.pipeline_mode<synchronous>, transform_indices = @transform_2, window_bounds = array<i64: 2, 4, 256>}, {pipeline_mode = #tpu.pipeline_mode<synchronous>, transform_indices = @transform_3, window_bounds = array<i64: 2, 4, 256>}]} {
    %c0 = arith.constant 0 : index
    %c0_0 = arith.constant 0 : index
    %0 = vector.load %arg1[%c0, %c0_0] : memref<256x256xf32, #tpu.memory_space<vmem>>, vector<256x256xf32>
    %c0_1 = arith.constant 0 : index
    %c0_2 = arith.constant 0 : index
    %c0_3 = arith.constant 0 : index
    %1 = vector.load %arg2[%c0_1, %c0_2, %c0_3] : memref<2x4x256xf32, #tpu.memory_space<vmem>>, vector<2x4x256xf32>
    %2 = vector.shape_cast %1 : vector<2x4x256xf32> to vector<2x4x1x256xf32>
    %cst = arith.constant 5.000000e-01 : f32
    %3 = vector.broadcast %cst : f32 to vector<2x4x1x256xf32>
    %4 = arith.cmpf ogt, %2, %3 : vector<2x4x1x256xf32>
    %5 = vector.shape_cast %0 : vector<256x256xf32> to vector<1x1x256x256xf32>
    %cst_4 = arith.constant 1.000000e+30 : f32
    %6 = vector.shape_cast %4 : vector<2x4x1x256xi1> to vector<2x4x1x256xi1>
    %7 = vector.broadcast %6 : vector<2x4x1x256xi1> to vector<2x4x256x256xi1>
    %8 = vector.shape_cast %5 : vector<1x1x256x256xf32> to vector<1x1x256x256xf32>
    %9 = vector.broadcast %8 : vector<1x1x256x256xf32> to vector<2x4x256x256xf32>
    %10 = vector.broadcast %cst_4 : f32 to vector<2x4x256x256xf32>
    %11 = arith.select %7, %9, %10 : vector<2x4x256x256xi1>, vector<2x4x256x256xf32>
    %cst_5 = arith.constant dense<0x7F800000> : vector<2x4x256xf32>
    %12 = vector.multi_reduction <minimumf>, %11, %cst_5 [3] : vector<2x4x256x256xf32> to vector<2x4x256xf32>
    %13 = math.sqrt %12 : vector<2x4x256xf32>
    %14 = tpu.iota {dimensions = array<i32: 1>} : vector<2x4x256xi32>
    %c0_i32 = arith.constant 0 : i32
    %15 = vector.broadcast %c0_i32 : i32 to vector<2x4x256xi32>
    %16 = arith.cmpi eq, %14, %15 : vector<2x4x256xi32>
    %cst_6 = arith.constant 0.000000e+00 : f32
    %17 = vector.broadcast %cst_6 : f32 to vector<2x4x256xf32>
    %18 = arith.select %16, %17, %13 : vector<2x4x256xi1>, vector<2x4x256xf32>
    %19 = vector.shape_cast %18 : vector<2x4x256xf32> to vector<1x2x4x256xf32>
    %cst_7 = arith.constant dense<0.000000e+00> : vector<1xf32>
    %20 = vector.multi_reduction <add>, %19, %cst_7 [1, 2, 3] : vector<1x2x4x256xf32> to vector<1xf32>
    %21 = vector.shape_cast %20 : vector<1xf32> to vector<1x1x1x1xf32>
    %22 = vector.extract %21[0, 0, 0, 0] : f32 from vector<1x1x1x1xf32>
    %23 = vector.broadcast %22 : f32 to vector<1x1x1xf32>
    %cst_8 = arith.constant 4.8828125E-4 : f32
    %24 = vector.broadcast %cst_8 : f32 to vector<1x1x1xf32>
    %25 = arith.mulf %23, %24 : vector<1x1x1xf32>
    %cst_9 = arith.constant 0.000000e+00 : f32
    %26 = vector.broadcast %cst_9 : f32 to vector<1x1x1xf32>
    %27 = arith.cmpf ogt, %25, %26 : vector<1x1x1xf32>
    %28 = tpu.reciprocal %25 {approx = true} : vector<1x1x1xf32> -> vector<1x1x1xf32>
    %29 = arith.mulf %25, %28 : vector<1x1x1xf32>
    %cst_10 = arith.constant 2.000000e+00 : f32
    %30 = vector.broadcast %cst_10 : f32 to vector<1x1x1xf32>
    %31 = arith.subf %30, %29 : vector<1x1x1xf32>
    %32 = arith.mulf %28, %31 : vector<1x1x1xf32>
    %33 = arith.mulf %25, %32 : vector<1x1x1xf32>
    %cst_11 = arith.constant 2.000000e+00 : f32
    %34 = vector.broadcast %cst_11 : f32 to vector<1x1x1xf32>
    %35 = arith.subf %34, %33 : vector<1x1x1xf32>
    %36 = arith.mulf %32, %35 : vector<1x1x1xf32>
    %37 = vector.broadcast %36 : vector<1x1x1xf32> to vector<2x4x256xf32>
    %38 = arith.mulf %18, %37 : vector<2x4x256xf32>
    %cst_12 = arith.constant 0.000000e+00 : f32
    %39 = vector.shape_cast %27 : vector<1x1x1xi1> to vector<1x1x1xi1>
    %40 = vector.broadcast %39 : vector<1x1x1xi1> to vector<2x4x256xi1>
    %41 = vector.broadcast %cst_12 : f32 to vector<2x4x256xf32>
    %42 = arith.select %40, %38, %41 : vector<2x4x256xi1>, vector<2x4x256xf32>
    %c0_13 = arith.constant 0 : index
    %c0_14 = arith.constant 0 : index
    %c0_15 = arith.constant 0 : index
    %43 = vector.load %arg3[%c0_13, %c0_14, %c0_15] : memref<2x4x256xf32, #tpu.memory_space<vmem>>, vector<2x4x256xf32>
    %cst_16 = arith.constant dense<0xFF800000> : vector<2x256xf32>
    %44 = vector.multi_reduction <maximumf>, %43, %cst_16 [1] : vector<2x4x256xf32> to vector<2x256xf32>
    %45 = vector.shape_cast %44 : vector<2x256xf32> to vector<2x1x256xf32>
    %46 = vector.broadcast %45 : vector<2x1x256xf32> to vector<2x4x256xf32>
    %47 = arith.subf %43, %46 : vector<2x4x256xf32>
    %48 = math.exp %47 : vector<2x4x256xf32>
    %cst_17 = arith.constant dense<0.000000e+00> : vector<2x256xf32>
    %49 = vector.multi_reduction <add>, %48, %cst_17 [1] : vector<2x4x256xf32> to vector<2x256xf32>
    %50 = vector.shape_cast %49 : vector<2x256xf32> to vector<2x1x256xf32>
    %51 = tpu.reciprocal %50 {approx = true} : vector<2x1x256xf32> -> vector<2x1x256xf32>
    %52 = arith.mulf %50, %51 : vector<2x1x256xf32>
    %cst_18 = arith.constant 2.000000e+00 : f32
    %53 = vector.broadcast %cst_18 : f32 to vector<2x1x256xf32>
    %54 = arith.subf %53, %52 : vector<2x1x256xf32>
    %55 = arith.mulf %51, %54 : vector<2x1x256xf32>
    %56 = arith.mulf %50, %55 : vector<2x1x256xf32>
    %cst_19 = arith.constant 2.000000e+00 : f32
    %57 = vector.broadcast %cst_19 : f32 to vector<2x1x256xf32>
    %58 = arith.subf %57, %56 : vector<2x1x256xf32>
    %59 = arith.mulf %55, %58 : vector<2x1x256xf32>
    %60 = vector.broadcast %59 : vector<2x1x256xf32> to vector<2x4x256xf32>
    %61 = arith.mulf %48, %60 : vector<2x4x256xf32>
    %62 = arith.mulf %42, %61 : vector<2x4x256xf32>
    %c0_20 = arith.constant 0 : index
    %c0_21 = arith.constant 0 : index
    %c0_22 = arith.constant 0 : index
    %63 = vector.load %arg4[%c0_20, %c0_21, %c0_22] : memref<2x4x256xf32, #tpu.memory_space<vmem>>, vector<2x4x256xf32>
    tpu.vector_store %arg4[%c0_20, %c0_21, %c0_22], %62 {strides = array<i32>} : memref<2x4x256xf32, #tpu.memory_space<vmem>>, vector<2x4x256xf32>,
    return
  }
  func.func @transform_0(%arg0: i32) -> (i32, i32) {
    %c0_i32 = arith.constant 0 : i32
    %c0_i32_0 = arith.constant 0 : i32
    %c0_i32_1 = arith.constant 0 : i32
    return %c0_i32, %c0_i32_0 : i32, i32
  }
  func.func @transform_1(%arg0: i32) -> (i32, i32, i32) {
    %c0_i32 = arith.constant 0 : i32
    %c0_i32_0 = arith.constant 0 : i32
    %c0_i32_1 = arith.constant 0 : i32
    %c0_i32_2 = arith.constant 0 : i32
    return %c0_i32, %c0_i32_0, %c0_i32_1 : i32, i32, i32
  }
  func.func @transform_2(%arg0: i32) -> (i32, i32, i32) {
    %c0_i32 = arith.constant 0 : i32
    %c0_i32_0 = arith.constant 0 : i32
    %c0_i32_1 = arith.constant 0 : i32
    %c0_i32_2 = arith.constant 0 : i32
    return %c0_i32, %c0_i32_0, %c0_i32_1 : i32, i32, i32
  }
  func.func @transform_3(%arg0: i32) -> (i32, i32, i32) {
    %c0_i32 = arith.constant 0 : i32
    %c0_i32_0 = arith.constant 0 : i32
    %c0_i32_1 = arith.constant 0 : i32
    %c0_i32_2 = arith.constant 0 : i32
    return %c0_i32, %c0_i32_0, %c0_i32_1 : i32, i32, i32
  }
}

</mosaic_0001>

<llo_original>
// kernel: boundary_loss.1
$region0: #{boundary_loss.1}
  #allocation0 [shape = 'u32[]', space=smem, size = 0x4, offset = 0x4, fixed_abs, tag = 'smem constant byte address 0x4 - core index']
  #allocation1 [shape = 'u32[144,128]{1,0:T(1,128)}', space=vmem, size = 0x12000, scoped, tag = 'internal scratch']
  %s0 = inlined_call_operand.hbm [shape: f32[256,256], index: 0, kind: input, shape index: {}]
  %s1 = inlined_call_operand.vmem [shape: f32[2,4,256], index: 1, kind: input, shape index: {}]
  %s2 = inlined_call_operand.vmem [shape: f32[2,4,256], index: 2, kind: input, shape index: {}]
  %s3 = inlined_call_operand.vmem [shape: f32[2,4,256], index: 3, kind: output, shape index: {}]
  %s4 = sld [smem:[#allocation0]]
  $region26: #{boundary_loss.1} parent=0
    _
  %s6 = ssub.s32 1, %s4
  %s7 = scalar_select 0, %s6, %s4
  $region1: #{boundary_loss.1} parent=0
    #allocation2 [shape = 'u8[262144]{0}', space=vmem, size = 0x40000, scoped, tag = 'input window, operand 0, single buffered']
    #allocation3 [shape = 's32[1]{0}', space=sflag, size = 0x4, scoped, tag = 'scoped memory for boundary_loss.1']
    %8 = vsyncpa [#allocation3], 0
    // Predicated region
    $region2: #{boundary_loss.1} parent=1 // pred_check
      _
    $region3: #{boundary_loss.1} parent=1 // pred_check_branch
      %10 = sbr.rel (0) target = $region5
    $region4: #{boundary_loss.1} parent=1 // pred_region
      %s12 = ssub.s32 8192, 8192
      %13 = vsyncadd [#allocation3], %s12
      %s14 = sshll.u32 [#allocation2], 4
      %s15 = int_to_ptr.vmem [resolvable:$true] %s14
      %20 = dma.hbm_to_vmem [thread:$0]  %s0, 8192, %s15, [#allocation3], 256, 256, 16
    $region5: #{boundary_loss.1} parent=1 // pred_fallthru
      _
    // Predicated region
    $region6: #{boundary_loss.1} parent=1 // pred_check
      _
    $region7: #{boundary_loss.1} parent=1 // pred_check_branch
      %22 = sbr.rel (0) target = $region9
    $region8: #{boundary_loss.1} parent=1 // pred_region
      _
    $region9: #{boundary_loss.1} parent=1 // pred_fallthru
      _
    // Predicated region
    $region10: #{boundary_loss.1} parent=1 // pred_check
      _
    $region11: #{boundary_loss.1} parent=1 // pred_check_branch
      %24 = sbr.rel (0) target = $region13
    $region12: #{boundary_loss.1} parent=1 // pred_region
      _
    $region13: #{boundary_loss.1} parent=1 // pred_fallthru
      _
    // Predicated region
    $region14: #{boundary_loss.1} parent=1 // pred_check
      _
    $region15: #{boundary_loss.1} parent=1 // pred_check_branch
      %26 = sbr.rel (0) target = $region17
    $region16: #{boundary_loss.1} parent=1 // pred_region
      %27 = dma.done [#allocation3], 8192
    $region17: #{boundary_loss.1} parent=1 // pred_fallthru
      _
    %v28 = vld [vmem:[#allocation2] sm:$0xff]
    %v29 = vld [vmem:[#allocation2 + $0x8] sm:$0xff]
    %v30 = vld [vmem:[#allocation2 + $0x10] sm:$0xff]
    %v31 = vld [vmem:[#allocation2 + $0x18] sm:$0xff]
    %v32 = vld [vmem:[#allocation2 + $0x20] sm:$0xff]
    %v33 = vld [vmem:[#allocation2 + $0x28] sm:$0xff]
    %v34 = vld [vmem:[#allocation2 + $0x30] sm:$0xff]
    %v35 = vld [vmem:[#allocation2 + $0x38] sm:$0xff]
    %v36 = vld [vmem:[#allocation2 + $0x40] sm:$0xff]
    %v37 = vld [vmem:[#allocation2 + $0x48] sm:$0xff]
    %v38 = vld [vmem:[#allocation2 + $0x50] sm:$0xff]
    %v39 = vld [vmem:[#allocation2 + $0x58] sm:$0xff]
    %v40 = vld [vmem:[#allocation2 + $0x60] sm:$0xff]
    %v41 = vld [vmem:[#allocation2 + $0x68] sm:$0xff]
    %v42 = vld [vmem:[#allocation2 + $0x70] sm:$0xff]
    %v43 = vld [vmem:[#allocation2 + $0x78] sm:$0xff]
    %v44 = vld [vmem:[#allocation2 + $0x80] sm:$0xff]
    %v45 = vld [vmem:[#allocation2 + $0x88] sm:$0xff]
    %v46 = vld [vmem:[#allocation2 + $0x90] sm:$0xff]
    %v47 = vld [vmem:[#allocation2 + $0x98] sm:$0xff]
    %v48 = vld [vmem:[#allocation2 + $0xa0] sm:$0xff]
    %v49 = vld [vmem:[#allocation2 + $0xa8] sm:$0xff]
    %v50 = vld [vmem:[#allocation2 + $0xb0] sm:$0xff]
    %v51 = vld [vmem:[#allocation2 + $0xb8] sm:$0xff]
    %v52 = vld [vmem:[#allocation2 + $0xc0] sm:$0xff]
    %v53 = vld [vmem:[#allocation2 + $0xc8] sm:$0xff]
    %v54 = vld [vmem:[#allocation2 + $0xd0] sm:$0xff]
    %v55 = vld [vmem:[#allocation2 + $0xd8] sm:$0xff]
    %v56 = vld [vmem:[#allocation2 + $0xe0] sm:$0xff]
    %v57 = vld [vmem:[#allocation2 + $0xe8] sm:$0xff]
    %v58 = vld [vmem:[#allocation2 + $0xf0] sm:$0xff]
    %v59 = vld [vmem:[#allocation2 + $0xf8] sm:$0xff]
    %v60 = vld [vmem:[#allocation2 + $0x100] sm:$0xff]
    %v61 = vld [vmem:[#allocation2 + $0x108] sm:$0xff]
    %v62 = vld [vmem:[#allocation2 + $0x110] sm:$0xff]
    %v63 = vld [vmem:[#allocation2 + $0x118] sm:$0xff]
    %v64 = vld [vmem:[#allocation2 + $0x120] sm:$0xff]
    %v65 = vld [vmem:[#allocation2 + $0x128] sm:$0xff]
    %v66 = vld [vmem:[#allocation2 + $0x130] sm:$0xff]
    %v67 = vld [vmem:[#allocation2 + $0x138] sm:$0xff]
    %v68 = vld [vmem:[#allocation2 + $0x140] sm:$0xff]
    %v69 = vld [vmem:[#allocation2 + $0x148] sm:$0xff]
    %v70 = vld [vmem:[#allocation2 + $0x150] sm:$0xff]
    %v71 = vld [vmem:[#allocation2 + $0x158] sm:$0xff]
    %v72 = vld [vmem:[#allocation2 + $0x160] sm:$0xff]
    %v73 = vld [vmem:[#allocation2 + $0x168] sm:$0xff]
    %v74 = vld [vmem:[#allocation2 + $0x170] sm:$0xff]
    %v75 = vld [vmem:[#allocation2 + $0x178] sm:$0xff]
    %v76 = vld [vmem:[#allocation2 + $0x180] sm:$0xff]
    %v77 = vld [vmem:[#allocation2 + $0x188] sm:$0xff]
    %v78 = vld [vmem:[#allocation2 + $0x190] sm:$0xff]
    %v79 = vld [vmem:[#allocation2 + $0x198] sm:$0xff]
    %v80 = vld [vmem:[#allocation2 + $0x1a0] sm:$0xff]
    %v81 = vld [vmem:[#allocation2 + $0x1a8] sm:$0xff]
    %v82 = vld [vmem:[#allocation2 + $0x1b0] sm:$0xff]
    %v83 = vld [vmem:[#allocation2 + $0x1b8] sm:$0xff]
    %v84 = vld [vmem:[#allocation2 + $0x1c0] sm:$0xff]
    %v85 = vld [vmem:[#allocation2 + $0x1c8] sm:$0xff]
    %v86 = vld [vmem:[#allocation2 + $0x1d0] sm:$0xff]
    %v87 = vld [vmem:[#allocation2 + $0x1d8] sm:$0xff]
    %v88 = vld [vmem:[#allocation2 + $0x1e0] sm:$0xff]
    %v89 = vld [vmem:[#allocation2 + $0x1e8] sm:$0xff]
    %v90 = vld [vmem:[#allocation2 + $0x1f0] sm:$0xff]
    %v91 = vld [vmem:[#allocation2 + $0x1f8] sm:$0xff]
    %v92 = vld [vmem:[%s1] sm:$0xff]
    %v93 = vld [vmem:[%s1 + $0x8] sm:$0xff]
    %v97 = vunpack.c.l.s4 1966171168
    %v98 = vunpack.c.0.s8 %v97
    %v99 = vlaneseq
    %v100 = vshrl.u32 %v99, 7
    %v101 = vsub.s32 %v98, %v100
    %v102 = vrot.slane %v92, %v101
    %v103 = vcombine.high %v102, %v102
    %v105 = vunpack.c.l.s4 1966171168
    %v106 = vunpack.c.0.s8 %v105
    %v107 = vlaneseq
    %v108 = vshrl.u32 %v107, 7
    %v109 = vsub.s32 %v106, %v108
    %v110 = vrot.slane %v102, %v109
    %v112 = vunpack.c.l.s4 1966171168
    %v113 = vunpack.c.0.s8 %v112
    %v114 = vlaneseq
    %v115 = vshrl.u32 %v114, 7
    %v116 = vsub.s32 %v113, %v115
    %v117 = vrot.slane %v103, %v116
    %v118 = vcombine.high %v110, %v110
    %v119 = vcombine.high %v117, %v117
    %v121 = vunpack.c.l.s4 1966171168
    %v122 = vunpack.c.0.s8 %v121
    %v123 = vlaneseq
    %v124 = vshrl.u32 %v123, 7
    %v125 = vsub.s32 %v122, %v124
    %v126 = vrot.slane %v93, %v125
    %v127 = vcombine.high %v126, %v126
    %v129 = vunpack.c.l.s4 1966171168
    %v130 = vunpack.c.0.s8 %v129
    %v131 = vlaneseq
    %v132 = vshrl.u32 %v131, 7
    %v133 = vsub.s32 %v130, %v132
    %v134 = vrot.slane %v126, %v133
    %v136 = vunpack.c.l.s4 1966171168
    %v137 = vunpack.c.0.s8 %v136
    %v138 = vlaneseq
    %v139 = vshrl.u32 %v138, 7
    %v140 = vsub.s32 %v137, %v139
    %v141 = vrot.slane %v127, %v140
    %v142 = vcombine.high %v134, %v134
    %v143 = vcombine.high %v141, %v141
    %vm152 = vcmp.gt.f32.partialorder %v110, 0.5
    %vm153 = vcmp.gt.f32.partialorder %v117, 0.5
    %vm154 = vcmp.gt.f32.partialorder %v118, 0.5
    %vm155 = vcmp.gt.f32.partialorder %v119, 0.5
    %vm156 = vcmp.gt.f32.partialorder %v134, 0.5
    %vm157 = vcmp.gt.f32.partialorder %v141, 0.5
    %vm158 = vcmp.gt.f32.partialorder %v142, 0.5
    %vm159 = vcmp.gt.f32.partialorder %v143, 0.5
    %v160 = vsel %vm152, 1, 0
    %v161 = vsel %vm153, 1, 0
    %v162 = vsel %vm154, 1, 0
    %v163 = vsel %vm155, 1, 0
    %v164 = vsel %vm156, 1, 0
    %v165 = vsel %vm157, 1, 0
    %v166 = vsel %vm158, 1, 0
    %v167 = vsel %vm159, 1, 0
    %v168 = vlaneseq
    %v169 = vshrl.u32 %v168, 7
    %v170 = vsub.s32 0, %v169
    %v171 = vrot.slane %v160, %v170
    %v172 = vlaneseq
    %v173 = vshrl.u32 %v172, 7
    %v174 = vsub.s32 1, %v173
    %v175 = vrot.slane %v160, %v174
    %v176 = vlaneseq
    %v177 = vshrl.u32 %v176, 7
    %v178 = vsub.s32 0, %v177
    %v179 = vrot.slane %v161, %v178
    %v180 = vlaneseq
    %v181 = vshrl.u32 %v180, 7
    %v182 = vsub.s32 1, %v181
    %v183 = vrot.slane %v161, %v182
    %v184 = vlaneseq
    %v185 = vshrl.u32 %v184, 7
    %v186 = vsub.s32 0, %v185
    %v187 = vrot.slane %v162, %v186
    %v188 = vlaneseq
    %v189 = vshrl.u32 %v188, 7
    %v190 = vsub.s32 1, %v189
    %v191 = vrot.slane %v162, %v190
    %v192 = vlaneseq
    %v193 = vshrl.u32 %v192, 7
    %v194 = vsub.s32 0, %v193
    %v195 = vrot.slane %v163, %v194
    %v196 = vlaneseq
    %v197 = vshrl.u32 %v196, 7
    %v198 = vsub.s32 1, %v197
    %v199 = vrot.slane %v163, %v198
    %v200 = vlaneseq
    %v201 = vshrl.u32 %v200, 7
    %v202 = vsub.s32 0, %v201
    %v203 = vrot.slane %v164, %v202
    %v204 = vlaneseq
    %v205 = vshrl.u32 %v204, 7
    %v206 = vsub.s32 1, %v205
    %v207 = vrot.slane %v164, %v206
    %v208 = vlaneseq
    %v209 = vshrl.u32 %v208, 7
    %v210 = vsub.s32 0, %v209
    %v211 = vrot.slane %v165, %v210
    %v212 = vlaneseq
    %v213 = vshrl.u32 %v212, 7
    %v214 = vsub.s32 1, %v213
    %v215 = vrot.slane %v165, %v214
    %v216 = vlaneseq
    %v217 = vshrl.u32 %v216, 7
    %v218 = vsub.s32 0, %v217
    %v219 = vrot.slane %v166, %v218
    %v220 = vlaneseq
    %v221 = vshrl.u32 %v220, 7
    %v222 = vsub.s32 1, %v221
    %v223 = vrot.slane %v166, %v222
    %v224 = vlaneseq
    %v225 = vshrl.u32 %v224, 7
    %v226 = vsub.s32 0, %v225
    %v227 = vrot.slane %v167, %v226
    %v228 = vlaneseq
    %v229 = vshrl.u32 %v228, 7
    %v230 = vsub.s32 1, %v229
    %v231 = vrot.slane %v167, %v230
    %vm232 = vcmp.eq.s32.totalorder %v171, 1
    %vm233 = vcmp.eq.s32.totalorder %v175, 1
    %vm234 = vcmp.eq.s32.totalorder %v179, 1
    %vm235 = vcmp.eq.s32.totalorder %v183, 1
    %vm236 = vcmp.eq.s32.totalorder %v187, 1
    %vm237 = vcmp.eq.s32.totalorder %v191, 1
    %vm238 = vcmp.eq.s32.totalorder %v195, 1
    %vm239 = vcmp.eq.s32.totalorder %v199, 1
    %vm240 = vcmp.eq.s32.totalorder %v203, 1
    %vm241 = vcmp.eq.s32.totalorder %v207, 1
    %vm242 = vcmp.eq.s32.totalorder %v211, 1
    %vm243 = vcmp.eq.s32.totalorder %v215, 1
    %vm244 = vcmp.eq.s32.totalorder %v219, 1
    %vm245 = vcmp.eq.s32.totalorder %v223, 1
    %vm246 = vcmp.eq.s32.totalorder %v227, 1
    %vm247 = vcmp.eq.s32.totalorder %v231, 1
    %v248 = vsel %vm232, %v28, 1e+30
    %v249 = vsel %vm233, %v29, 1e+30
    %v250 = vsel %vm232, %v30, 1e+30
    %v251 = vsel %vm233, %v31, 1e+30
    %v252 = vsel %vm232, %v32, 1e+30
    %v253 = vsel %vm233, %v33, 1e+30
    %v254 = vsel %vm232, %v34, 1e+30
    %v255 = vsel %vm233, %v35, 1e+30
    %v256 = vsel %vm232, %v36, 1e+30
    %v257 = vsel %vm233, %v37, 1e+30
    %v258 = vsel %vm232, %v38, 1e+30
    %v259 = vsel %vm233, %v39, 1e+30
    %v260 = vsel %vm232, %v40, 1e+30
    %v261 = vsel %vm233, %v41, 1e+30
    %v262 = vsel %vm232, %v42, 1e+30
    %v263 = vsel %vm233, %v43, 1e+30
    %v264 = vsel %vm232, %v44, 1e+30
    %v265 = vsel %vm233, %v45, 1e+30
    %v266 = vsel %vm232, %v46, 1e+30
    %v267 = vsel %vm233, %v47, 1e+30
    %v268 = vsel %vm232, %v48, 1e+30
    %v269 = vsel %vm233, %v49, 1e+30
    %v270 = vsel %vm232, %v50, 1e+30
    %v271 = vsel %vm233, %v51, 1e+30
    %v272 = vsel %vm232, %v52, 1e+30
    %v273 = vsel %vm233, %v53, 1e+30
    %v274 = vsel %vm232, %v54, 1e+30
    %v275 = vsel %vm233, %v55, 1e+30
    %v276 = vsel %vm232, %v56, 1e+30
    %v277 = vsel %vm233, %v57, 1e+30
    %v278 = vsel %vm232, %v58, 1e+30
    %v279 = vsel %vm233, %v59, 1e+30
    %v280 = vsel %vm232, %v60, 1e+30
    %v281 = vsel %vm233, %v61, 1e+30
    %v282 = vsel %vm232, %v62, 1e+30
    %v283 = vsel %vm233, %v63, 1e+30
    %v284 = vsel %vm232, %v64, 1e+30
    %v285 = vsel %vm233, %v65, 1e+30
    %v286 = vsel %vm232, %v66, 1e+30
    %v287 = vsel %vm233, %v67, 1e+30
    %v288 = vsel %vm232, %v68, 1e+30
    %v289 = vsel %vm233, %v69, 1e+30
    %v290 = vsel %vm232, %v70, 1e+30
    %v291 = vsel %vm233, %v71, 1e+30
    %v292 = vsel %vm232, %v72, 1e+30
    %v293 = vsel %vm233, %v73, 1e+30
    %v294 = vsel %vm232, %v74, 1e+30
    %v295 = vsel %vm233, %v75, 1e+30
    %v296 = vsel %vm232, %v76, 1e+30
    %v297 = vsel %vm233, %v77, 1e+30
    %v298 = vsel %vm232, %v78, 1e+30
    %v299 = vsel %vm233, %v79, 1e+30
    %v300 = vsel %vm232, %v80, 1e+30
    %v301 = vsel %vm233, %v81, 1e+30
    %v302 = vsel %vm232, %v82, 1e+30
    %v303 = vsel %vm233, %v83, 1e+30
    %v304 = vsel %vm232, %v84, 1e+30
    %v305 = vsel %vm233, %v85, 1e+30
    %v306 = vsel %vm232, %v86, 1e+30
    %v307 = vsel %vm233, %v87, 1e+30
    %v308 = vsel %vm232, %v88, 1e+30
    %v309 = vsel %vm233, %v89, 1e+30
    %v310 = vsel %vm232, %v90, 1e+30
    %v311 = vsel %vm233, %v91, 1e+30
    %v312 = vsel %vm234, %v28, 1e+30
    %v313 = vsel %vm235, %v29, 1e+30
    %v314 = vsel %vm234, %v30, 1e+30
    %v315 = vsel %vm235, %v31, 1e+30
    %v316 = vsel %vm234, %v32, 1e+30
    %v317 = vsel %vm235, %v33, 1e+30
    %v318 = vsel %vm234, %v34, 1e+30
    %v319 = vsel %vm235, %v35, 1e+30
    %v320 = vsel %vm234, %v36, 1e+30
    %v321 = vsel %vm235, %v37, 1e+30
    %v322 = vsel %vm234, %v38, 1e+30
    %v323 = vsel %vm235, %v39, 1e+30
    %v324 = vsel %vm234, %v40, 1e+30
    %v325 = vsel %vm235, %v41, 1e+30
    %v326 = vsel %vm234, %v42, 1e+30
    %v327 = vsel %vm235, %v43, 1e+30
    %v328 = vsel %vm234, %v44, 1e+30
    %v329 = vsel %vm235, %v45, 1e+30
    %v330 = vsel %vm234, %v46, 1e+30
    %v331 = vsel %vm235, %v47, 1e+30
    %v332 = vsel %vm234, %v48, 1e+30
    %v333 = vsel %vm235, %v49, 1e+30
    %v334 = vsel %vm234, %v50, 1e+30
    %v335 = vsel %vm235, %v51, 1e+30
    %v336 = vsel %vm234, %v52, 1e+30
    %v337 = vsel %vm235, %v53, 1e+30
    %v338 = vsel %vm234, %v54, 1e+30
    %v339 = vsel %vm235, %v55, 1e+30
    %v340 = vsel %vm234, %v56, 1e+30
    %v341 = vsel %vm235, %v57, 1e+30
    %v342 = vsel %vm234, %v58, 1e+30
    %v343 = vsel %vm235, %v59, 1e+30
    %v344 = vsel %vm234, %v60, 1e+30
    %v345 = vsel %vm235, %v61, 1e+30
    %v346 = vsel %vm234, %v62, 1e+30
    %v347 = vsel %vm235, %v63, 1e+30
    %v348 = vsel %vm234, %v64, 1e+30
    %v349 = vsel %vm235, %v65, 1e+30
    %v350 = vsel %vm234, %v66, 1e+30
    %v351 = vsel %vm235, %v67, 1e+30
    %v352 = vsel %vm234, %v68, 1e+30
    %v353 = vsel %vm235, %v69, 1e+30
    %v354 = vsel %vm234, %v70, 1e+30
    %v355 = vsel %vm235, %v71, 1e+30
    %v356 = vsel %vm234, %v72, 1e+30
    %v357 = vsel %vm235, %v73, 1e+30
    %v358 = vsel %vm234, %v74, 1e+30
    %v359 = vsel %vm235, %v75, 1e+30
    %v360 = vsel %vm234, %v76, 1e+30
    %v361 = vsel %vm235, %v77, 1e+30
    %v362 = vsel %vm234, %v78, 1e+30
    %v363 = vsel %vm235, %v79, 1e+30
    %v364 = vsel %vm234, %v80, 1e+30
    %v365 = vsel %vm235, %v81, 1e+30
    %v366 = vsel %vm234, %v82, 1e+30
    %v367 = vsel %vm235, %v83, 1e+30
    %v368 = vsel %vm234, %v84, 1e+30
    %v369 = vsel %vm235, %v85, 1e+30
    %v370 = vsel %vm234, %v86, 1e+30
    %v371 = vsel %vm235, %v87, 1e+30
    %v372 = vsel %vm234, %v88, 1e+30
    %v373 = vsel %vm235, %v89, 1e+30
    %v374 = vsel %vm234, %v90, 1e+30
    %v375 = vsel %vm235, %v91, 1e+30
    %v376 = vsel %vm236, %v28, 1e+30
    %v377 = vsel %vm237, %v29, 1e+30
    %v378 = vsel %vm236, %v30, 1e+30
    %v379 = vsel %vm237, %v31, 1e+30
    %v380 = vsel %vm236, %v32, 1e+30
    %v381 = vsel %vm237, %v33, 1e+30
    %v382 = vsel %vm236, %v34, 1e+30
    %v383 = vsel %vm237, %v35, 1e+30
    %v384 = vsel %vm236, %v36, 1e+30
    %v385 = vsel %vm237, %v37, 1e+30
    %v386 = vsel %vm236, %v38, 1e+30
    %v387 = vsel %vm237, %v39, 1e+30
    %v388 = vsel %vm236, %v40, 1e+30
    %v389 = vsel %vm237, %v41, 1e+30
    %v390 = vsel %vm236, %v42, 1e+30
    %v391 = vsel %vm237, %v43, 1e+30
    %v392 = vsel %vm236, %v44, 1e+30
    %v393 = vsel %vm237, %v45, 1e+30
    %v394 = vsel %vm236, %v46, 1e+30
    %v395 = vsel %vm237, %v47, 1e+30
    %v396 = vsel %vm236, %v48, 1e+30
    %v397 = vsel %vm237, %v49, 1e+30
    %v398 = vsel %vm236, %v50, 1e+30
    %v399 = vsel %vm237, %v51, 1e+30
    %v400 = vsel %vm236, %v52, 1e+30
    %v401 = vsel %vm237, %v53, 1e+30
    %v402 = vsel %vm236, %v54, 1e+30
    %v403 = vsel %vm237, %v55, 1e+30
    %v404 = vsel %vm236, %v56, 1e+30
    %v405 = vsel %vm237, %v57, 1e+30
    %v406 = vsel %vm236, %v58, 1e+30
    %v407 = vsel %vm237, %v59, 1e+30
    %v408 = vsel %vm236, %v60, 1e+30
    %v409 = vsel %vm237, %v61, 1e+30
    %v410 = vsel %vm236, %v62, 1e+30
    %v411 = vsel %vm237, %v63, 1e+30
    %v412 = vsel %vm236, %v64, 1e+30
    %v413 = vsel %vm237, %v65, 1e+30
    %v414 = vsel %vm236, %v66, 1e+30
    %v415 = vsel %vm237, %v67, 1e+30
    %v416 = vsel %vm236, %v68, 1e+30
    %v417 = vsel %vm237, %v69, 1e+30
    %v418 = vsel %vm236, %v70, 1e+30
    %v419 = vsel %vm237, %v71, 1e+30
    %v420 = vsel %vm236, %v72, 1e+30
    %v421 = vsel %vm237, %v73, 1e+30
    %v422 = vsel %vm236, %v74, 1e+30
    %v423 = vsel %vm237, %v75, 1e+30
    %v424 = vsel %vm236, %v76, 1e+30
    %v425 = vsel %vm237, %v77, 1e+30
    %v426 = vsel %vm236, %v78, 1e+30
    %v427 = vsel %vm237, %v79, 1e+30
    %v428 = vsel %vm236, %v80, 1e+30
    %v429 = vsel %vm237, %v81, 1e+30
    %v430 = vsel %vm236, %v82, 1e+30
    %v431 = vsel %vm237, %v83, 1e+30
    %v432 = vsel %vm236, %v84, 1e+30
    %v433 = vsel %vm237, %v85, 1e+30
    %v434 = vsel %vm236, %v86, 1e+30
    %v435 = vsel %vm237, %v87, 1e+30
    %v436 = vsel %vm236, %v88, 1e+30
    %v437 = vsel %vm237, %v89, 1e+30
    %v438 = vsel %vm236, %v90, 1e+30
    %v439 = vsel %vm237, %v91, 1e+30
    %v440 = vsel %vm238, %v28, 1e+30
    %v441 = vsel %vm239, %v29, 1e+30
    %v442 = vsel %vm238, %v30, 1e+30
    %v443 = vsel %vm239, %v31, 1e+30
    %v444 = vsel %vm238, %v32, 1e+30
    %v445 = vsel %vm239, %v33, 1e+30
    %v446 = vsel %vm238, %v34, 1e+30
    %v447 = vsel %vm239, %v35, 1e+30
    %v448 = vsel %vm238, %v36, 1e+30
    %v449 = vsel %vm239, %v37, 1e+30
    %v450 = vsel %vm238, %v38, 1e+30
    %v451 = vsel %vm239, %v39, 1e+30
    %v452 = vsel %vm238, %v40, 1e+30
    %v453 = vsel %vm239, %v41, 1e+30
    %v454 = vsel %vm238, %v42, 1e+30
    %v455 = vsel %vm239, %v43, 1e+30
    %v456 = vsel %vm238, %v44, 1e+30
    %v457 = vsel %vm239, %v45, 1e+30
    %v458 = vsel %vm238, %v46, 1e+30
    %v459 = vsel %vm239, %v47, 1e+30
    %v460 = vsel %vm238, %v48, 1e+30
    %v461 = vsel %vm239, %v49, 1e+30
    %v462 = vsel %vm238, %v50, 1e+30
    %v463 = vsel %vm239, %v51, 1e+30
    %v464 = vsel %vm238, %v52, 1e+30
    %v465 = vsel %vm239, %v53, 1e+30
    %v466 = vsel %vm238, %v54, 1e+30
    %v467 = vsel %vm239, %v55, 1e+30
    %v468 = vsel %vm238, %v56, 1e+30
    %v469 = vsel %vm239, %v57, 1e+30
    %v470 = vsel %vm238, %v58, 1e+30
    %v471 = vsel %vm239, %v59, 1e+30
    %v472 = vsel %vm238, %v60, 1e+30
    %v473 = vsel %vm239, %v61, 1e+30
    %v474 = vsel %vm238, %v62, 1e+30
    %v475 = vsel %vm239, %v63, 1e+30
    %v476 = vsel %vm238, %v64, 1e+30
    %v477 = vsel %vm239, %v65, 1e+30
    %v478 = vsel %vm238, %v66, 1e+30
    %v479 = vsel %vm239, %v67, 1e+30
    %v480 = vsel %vm238, %v68, 1e+30
    %v481 = vsel %vm239, %v69, 1e+30
    %v482 = vsel %vm238, %v70, 1e+30
    %v483 = vsel %vm239, %v71, 1e+30
    %v484 = vsel %vm238, %v72, 1e+30
    %v485 = vsel %vm239, %v73, 1e+30
    %v486 = vsel %vm238, %v74, 1e+30
    %v487 = vsel %vm239, %v75, 1e+30
    %v488 = vsel %vm238, %v76, 1e+30
    %v489 = vsel %vm239, %v77, 1e+30
    %v490 = vsel %vm238, %v78, 1e+30
    %v491 = vsel %vm239, %v79, 1e+30
    %v492 = vsel %vm238, %v80, 1e+30
    %v493 = vsel %vm239, %v81, 1e+30
    %v494 = vsel %vm238, %v82, 1e+30
    %v495 = vsel %vm239, %v83, 1e+30
    %v496 = vsel %vm238, %v84, 1e+30
    %v497 = vsel %vm239, %v85, 1e+30
    %v498 = vsel %vm238, %v86, 1e+30
    %v499 = vsel %vm239, %v87, 1e+30
    %v500 = vsel %vm238, %v88, 1e+30
    %v501 = vsel %vm239, %v89, 1e+30
    %v502 = vsel %vm238, %v90, 1e+30
    %v503 = vsel %vm239, %v91, 1e+30
    %v504 = vsel %vm240, %v28, 1e+30
    %v505 = vsel %vm241, %v29, 1e+30
    %v506 = vsel %vm240, %v30, 1e+30
    %v507 = vsel %vm241, %v31, 1e+30
    %v508 = vsel %vm240, %v32, 1e+30
    %v509 = vsel %vm241, %v33, 1e+30
    %v510 = vsel %vm240, %v34, 1e+30
    %v511 = vsel %vm241, %v35, 1e+30
    %v512 = vsel %vm240, %v36, 1e+30
    %v513 = vsel %vm241, %v37, 1e+30
    %v514 = vsel %vm240, %v38, 1e+30
    %v515 = vsel %vm241, %v39, 1e+30
    %v516 = vsel %vm240, %v40, 1e+30
    %v517 = vsel %vm241, %v41, 1e+30
    %v518 = vsel %vm240, %v42, 1e+30
    %v519 = vsel %vm241, %v43, 1e+30
    %v520 = vsel %vm240, %v44, 1e+30
    %v521 = vsel %vm241, %v45, 1e+30
    %v522 = vsel %vm240, %v46, 1e+30
    %v523 = vsel %vm241, %v47, 1e+30
    %v524 = vsel %vm240, %v48, 1e+30
    %v525 = vsel %vm241, %v49, 1e+30
    %v526 = vsel %vm240, %v50, 1e+30
    %v527 = vsel %vm241, %v51, 1e+30
    %v528 = vsel %vm240, %v52, 1e+30
    %v529 = vsel %vm241, %v53, 1e+30
    %v530 = vsel %vm240, %v54, 1e+30
    %v531 = vsel %vm241, %v55, 1e+30
    %v532 = vsel %vm240, %v56, 1e+30
    %v533 = vsel %vm241, %v57, 1e+30
    %v534 = vsel %vm240, %v58, 1e+30
    %v535 = vsel %vm241, %v59, 1e+30
    %v536 = vsel %vm240, %v60, 1e+30
    %v537 = vsel %vm241, %v61, 1e+30
    %v538 = vsel %vm240, %v62, 1e+30
    %v539 = vsel %vm241, %v63, 1e+30
    %v540 = vsel %vm240, %v64, 1e+30
    %v541 = vsel %vm241, %v65, 1e+30
    %v542 = vsel %vm240, %v66, 1e+30
    %v543 = vsel %vm241, %v67, 1e+30
    %v544 = vsel %vm240, %v68, 1e+30
    %v545 = vsel %vm241, %v69, 1e+30
    %v546 = vsel %vm240, %v70, 1e+30
    %v547 = vsel %vm241, %v71, 1e+30
    %v548 = vsel %vm240, %v72, 1e+30
    %v549 = vsel %vm241, %v73, 1e+30
    %v550 = vsel %vm240, %v74, 1e+30
    %v551 = vsel %vm241, %v75, 1e+30
    %v552 = vsel %vm240, %v76, 1e+30
    %v553 = vsel %vm241, %v77, 1e+30
    %v554 = vsel %vm240, %v78, 1e+30
    %v555 = vsel %vm241, %v79, 1e+30
    %v556 = vsel %vm240, %v80, 1e+30
    %v557 = vsel %vm241, %v81, 1e+30
    %v558 = vsel %vm240, %v82, 1e+30
    %v559 = vsel %vm241, %v83, 1e+30
    %v560 = vsel %vm240, %v84, 1e+30
    %v561 = vsel %vm241, %v85, 1e+30
    %v562 = vsel %vm240, %v86, 1e+30
    %v563 = vsel %vm241, %v87, 1e+30
    %v564 = vsel %vm240, %v88, 1e+30
    %v565 = vsel %vm241, %v89, 1e+30
    %v566 = vsel %vm240, %v90, 1e+30
    %v567 = vsel %vm241, %v91, 1e+30
    %v568 = vsel %vm242, %v28, 1e+30
    %v569 = vsel %vm243, %v29, 1e+30
    %v570 = vsel %vm242, %v30, 1e+30
    %v571 = vsel %vm243, %v31, 1e+30
    %v572 = vsel %vm242, %v32, 1e+30
    %v573 = vsel %vm243, %v33, 1e+30
    %v574 = vsel %vm242, %v34, 1e+30
    %v575 = vsel %vm243, %v35, 1e+30
    %v576 = vsel %vm242, %v36, 1e+30
    %v577 = vsel %vm243, %v37, 1e+30
    %v578 = vsel %vm242, %v38, 1e+30
    %v579 = vsel %vm243, %v39, 1e+30
    %v580 = vsel %vm242, %v40, 1e+30
    %v581 = vsel %vm243, %v41, 1e+30
    %v582 = vsel %vm242, %v42, 1e+30
    %v583 = vsel %vm243, %v43, 1e+30
    %v584 = vsel %vm242, %v44, 1e+30
    %v585 = vsel %vm243, %v45, 1e+30
    %v586 = vsel %vm242, %v46, 1e+30
    %v587 = vsel %vm243, %v47, 1e+30
    %v588 = vsel %vm242, %v48, 1e+30
    %v589 = vsel %vm243, %v49, 1e+30
    %v590 = vsel %vm242, %v50, 1e+30
    %v591 = vsel %vm243, %v51, 1e+30
    %v592 = vsel %vm242, %v52, 1e+30
    %v593 = vsel %vm243, %v53, 1e+30
    %v594 = vsel %vm242, %v54, 1e+30
    %v595 = vsel %vm243, %v55, 1e+30
    %v596 = vsel %vm242, %v56, 1e+30
    %v597 = vsel %vm243, %v57, 1e+30
    %v598 = vsel %vm242, %v58, 1e+30
    %v599 = vsel %vm243, %v59, 1e+30
    %v600 = vsel %vm242, %v60, 1e+30
    %v601 = vsel %vm243, %v61, 1e+30
    %v602 = vsel %vm242, %v62, 1e+30
    %v603 = vsel %vm243, %v63, 1e+30
    %v604 = vsel %vm242, %v64, 1e+30
    %v605 = vsel %vm243, %v65, 1e+30
    %v606 = vsel %vm242, %v66, 1e+30
    %v607 = vsel %vm243, %v67, 1e+30
    %v608 = vsel %vm242, %v68, 1e+30
    %v609 = vsel %vm243, %v69, 1e+30
    %v610 = vsel %vm242, %v70, 1e+30
    %v611 = vsel %vm243, %v71, 1e+30
    %v612 = vsel %vm242, %v72, 1e+30
    %v613 = vsel %vm243, %v73, 1e+30
    %v614 = vsel %vm242, %v74, 1e+30
    %v615 = vsel %vm243, %v75, 1e+30
    %v616 = vsel %vm242, %v76, 1e+30
    %v617 = vsel %vm243, %v77, 1e+30
    %v618 = vsel %vm242, %v78, 1e+30
    %v619 = vsel %vm243, %v79, 1e+30
    %v620 = vsel %vm242, %v80, 1e+30
    %v621 = vsel %vm243, %v81, 1e+30
    %v622 = vsel %vm242, %v82, 1e+30
    %v623 = vsel %vm243, %v83, 1e+30
    %v624 = vsel %vm242, %v84, 1e+30
    %v625 = vsel %vm243, %v85, 1e+30
    %v626 = vsel %vm242, %v86, 1e+30
    %v627 = vsel %vm243, %v87, 1e+30
    %v628 = vsel %vm242, %v88, 1e+30
    %v629 = vsel %vm243, %v89, 1e+30
    %v630 = vsel %vm242, %v90, 1e+30
    %v631 = vsel %vm243, %v91, 1e+30
    %v632 = vsel %vm244, %v28, 1e+30
    %v633 = vsel %vm245, %v29, 1e+30
    %v634 = vsel %vm244, %v30, 1e+30
    %v635 = vsel %vm245, %v31, 1e+30
    %v636 = vsel %vm244, %v32, 1e+30
    %v637 = vsel %vm245, %v33, 1e+30
    %v638 = vsel %vm244, %v34, 1e+30
    %v639 = vsel %vm245, %v35, 1e+30
    %v640 = vsel %vm244, %v36, 1e+30
    %v641 = vsel %vm245, %v37, 1e+30
    %v642 = vsel %vm244, %v38, 1e+30
    %v643 = vsel %vm245, %v39, 1e+30
    %v644 = vsel %vm244, %v40, 1e+30
    %v645 = vsel %vm245, %v41, 1e+30
    %v646 = vsel %vm244, %v42, 1e+30
    %v647 = vsel %vm245, %v43, 1e+30
    %v648 = vsel %vm244, %v44, 1e+30
    %v649 = vsel %vm245, %v45, 1e+30
    %v650 = vsel %vm244, %v46, 1e+30
    %v651 = vsel %vm245, %v47, 1e+30
    %v652 = vsel %vm244, %v48, 1e+30
    %v653 = vsel %vm245, %v49, 1e+30
    %v654 = vsel %vm244, %v50, 1e+30
    %v655 = vsel %vm245, %v51, 1e+30
    %v656 = vsel %vm244, %v52, 1e+30
    %v657 = vsel %vm245, %v53, 1e+30
    %v658 = vsel %vm244, %v54, 1e+30
    %v659 = vsel %vm245, %v55, 1e+30
    %v660 = vsel %vm244, %v56, 1e+30
    %v661 = vsel %vm245, %v57, 1e+30
    %v662 = vsel %vm244, %v58, 1e+30
    %v663 = vsel %vm245, %v59, 1e+30
    %v664 = vsel %vm244, %v60, 1e+30
    %v665 = vsel %vm245, %v61, 1e+30
    %v666 = vsel %vm244, %v62, 1e+30
    %v667 = vsel %vm245, %v63, 1e+30
    %v668 = vsel %vm244, %v64, 1e+30
    %v669 = vsel %vm245, %v65, 1e+30
    %v670 = vsel %vm244, %v66, 1e+30
    %v671 = vsel %vm245, %v67, 1e+30
    %v672 = vsel %vm244, %v68, 1e+30
    %v673 = vsel %vm245, %v69, 1e+30
    %v674 = vsel %vm244, %v70, 1e+30
    %v675 = vsel %vm245, %v71, 1e+30
    %v676 = vsel %vm244, %v72, 1e+30
    %v677 = vsel %vm245, %v73, 1e+30
    %v678 = vsel %vm244, %v74, 1e+30
    %v679 = vsel %vm245, %v75, 1e+30
    %v680 = vsel %vm244, %v76, 1e+30
    %v681 = vsel %vm245, %v77, 1e+30
    %v682 = vsel %vm244, %v78, 1e+30
    %v683 = vsel %vm245, %v79, 1e+30
    %v684 = vsel %vm244, %v80, 1e+30
    %v685 = vsel %vm245, %v81, 1e+30
    %v686 = vsel %vm244, %v82, 1e+30
    %v687 = vsel %vm245, %v83, 1e+30
    %v688 = vsel %vm244, %v84, 1e+30
    %v689 = vsel %vm245, %v85, 1e+30
    %v690 = vsel %vm244, %v86, 1e+30
    %v691 = vsel %vm245, %v87, 1e+30
    %v692 = vsel %vm244, %v88, 1e+30
    %v693 = vsel %vm245, %v89, 1e+30
    %v694 = vsel %vm244, %v90, 1e+30
    %v695 = vsel %vm245, %v91, 1e+30
    %v696 = vsel %vm246, %v28, 1e+30
    %v697 = vsel %vm247, %v29, 1e+30
    %v698 = vsel %vm246, %v30, 1e+30
    %v699 = vsel %vm247, %v31, 1e+30
    %v700 = vsel %vm246, %v32, 1e+30
    %v701 = vsel %vm247, %v33, 1e+30
    %v702 = vsel %vm246, %v34, 1e+30
    %v703 = vsel %vm247, %v35, 1e+30
    %v704 = vsel %vm246, %v36, 1e+30
    %v705 = vsel %vm247, %v37, 1e+30
    %v706 = vsel %vm246, %v38, 1e+30
    %v707 = vsel %vm247, %v39, 1e+30
    %v708 = vsel %vm246, %v40, 1e+30
    %v709 = vsel %vm247, %v41, 1e+30
    %v710 = vsel %vm246, %v42, 1e+30
    %v711 = vsel %vm247, %v43, 1e+30
    %v712 = vsel %vm246, %v44, 1e+30
    %v713 = vsel %vm247, %v45, 1e+30
    %v714 = vsel %vm246, %v46, 1e+30
    %v715 = vsel %vm247, %v47, 1e+30
    %v716 = vsel %vm246, %v48, 1e+30
    %v717 = vsel %vm247, %v49, 1e+30
    %v718 = vsel %vm246, %v50, 1e+30
    %v719 = vsel %vm247, %v51, 1e+30
    %v720 = vsel %vm246, %v52, 1e+30
    %v721 = vsel %vm247, %v53, 1e+30
    %v722 = vsel %vm246, %v54, 1e+30
    %v723 = vsel %vm247, %v55, 1e+30
    %v724 = vsel %vm246, %v56, 1e+30
    %v725 = vsel %vm247, %v57, 1e+30
    %v726 = vsel %vm246, %v58, 1e+30
    %v727 = vsel %vm247, %v59, 1e+30
    %v728 = vsel %vm246, %v60, 1e+30
    %v729 = vsel %vm247, %v61, 1e+30
    %v730 = vsel %vm246, %v62, 1e+30
    %v731 = vsel %vm247, %v63, 1e+30
    %v732 = vsel %vm246, %v64, 1e+30
    %v733 = vsel %vm247, %v65, 1e+30
    %v734 = vsel %vm246, %v66, 1e+30
    %v735 = vsel %vm247, %v67, 1e+30
    %v736 = vsel %vm246, %v68, 1e+30
    %v737 = vsel %vm247, %v69, 1e+30
    %v738 = vsel %vm246, %v70, 1e+30
    %v739 = vsel %vm247, %v71, 1e+30
    %v740 = vsel %vm246, %v72, 1e+30
    %v741 = vsel %vm247, %v73, 1e+30
    %v742 = vsel %vm246, %v74, 1e+30
    %v743 = vsel %vm247, %v75, 1e+30
    %v744 = vsel %vm246, %v76, 1e+30
    %v745 = vsel %vm247, %v77, 1e+30
    %v746 = vsel %vm246, %v78, 1e+30
    %v747 = vsel %vm247, %v79, 1e+30
    %v748 = vsel %vm246, %v80, 1e+30
    %v749 = vsel %vm247, %v81, 1e+30
    %v750 = vsel %vm246, %v82, 1e+30
    %v751 = vsel %vm247, %v83, 1e+30
    %v752 = vsel %vm246, %v84, 1e+30
    %v753 = vsel %vm247, %v85, 1e+30
    %v754 = vsel %vm246, %v86, 1e+30
    %v755 = vsel %vm247, %v87, 1e+30
    %v756 = vsel %vm246, %v88, 1e+30
    %v757 = vsel %vm247, %v89, 1e+30
    %v758 = vsel %vm246, %v90, 1e+30
    %v759 = vsel %vm247, %v91, 1e+30
    %v760 = vmin.f32 %v248, %v249
    %761 = vmin.xlane.f32.xlu0 %v760
    %v762 = vpop.xlane.xlu0 %761
    %v763 = vmin.f32 %v250, %v251
    %764 = vmin.xlane.f32.xlu0 %v763
    %v765 = vpop.xlane.xlu0 %764
    %v766 = vmin.f32 %v252, %v253
    %767 = vmin.xlane.f32.xlu0 %v766
    %v768 = vpop.xlane.xlu0 %767
    %v769 = vmin.f32 %v254, %v255
    %770 = vmin.xlane.f32.xlu0 %v769
    %v771 = vpop.xlane.xlu0 %770
    %v772 = vmin.f32 %v256, %v257
    %773 = vmin.xlane.f32.xlu0 %v772
    %v774 = vpop.xlane.xlu0 %773
    %v775 = vmin.f32 %v258, %v259
    %776 = vmin.xlane.f32.xlu0 %v775
    %v777 = vpop.xlane.xlu0 %776
    %v778 = vmin.f32 %v260, %v261
    %779 = vmin.xlane.f32.xlu0 %v778
    %v780 = vpop.xlane.xlu0 %779
    %v781 = vmin.f32 %v262, %v263
    %782 = vmin.xlane.f32.xlu0 %v781
    %v783 = vpop.xlane.xlu0 %782
    %v784 = vmin.f32 %v264, %v265
    %785 = vmin.xlane.f32.xlu0 %v784
    %v786 = vpop.xlane.xlu0 %785
    %v787 = vmin.f32 %v266, %v267
    %788 = vmin.xlane.f32.xlu0 %v787
    %v789 = vpop.xlane.xlu0 %788
    %v790 = vmin.f32 %v268, %v269
    %791 = vmin.xlane.f32.xlu0 %v790
    %v792 = vpop.xlane.xlu0 %791
    %v793 = vmin.f32 %v270, %v271
    %794 = vmin.xlane.f32.xlu0 %v793
    %v795 = vpop.xlane.xlu0 %794
    %v796 = vmin.f32 %v272, %v273
    %797 = vmin.xlane.f32.xlu0 %v796
    %v798 = vpop.xlane.xlu0 %797
    %v799 = vmin.f32 %v274, %v275
    %800 = vmin.xlane.f32.xlu0 %v799
    %v801 = vpop.xlane.xlu0 %800
    %v802 = vmin.f32 %v276, %v277
    %803 = vmin.xlane.f32.xlu0 %v802
    %v804 = vpop.xlane.xlu0 %803
    %v805 = vmin.f32 %v278, %v279
    %806 = vmin.xlane.f32.xlu0 %v805
    %v807 = vpop.xlane.xlu0 %806
    %v808 = vmin.f32 %v280, %v281
    %809 = vmin.xlane.f32.xlu0 %v808
    %v810 = vpop.xlane.xlu0 %809
    %v811 = vmin.f32 %v282, %v283
    %812 = vmin.xlane.f32.xlu0 %v811
    %v813 = vpop.xlane.xlu0 %812
    %v814 = vmin.f32 %v284, %v285
    %815 = vmin.xlane.f32.xlu0 %v814
    %v816 = vpop.xlane.xlu0 %815
    %v817 = vmin.f32 %v286, %v287
    %818 = vmin.xlane.f32.xlu0 %v817
    %v819 = vpop.xlane.xlu0 %818
    %v820 = vmin.f32 %v288, %v289
    %821 = vmin.xlane.f32.xlu0 %v820
    %v822 = vpop.xlane.xlu0 %821
    %v823 = vmin.f32 %v290, %v291
    %824 = vmin.xlane.f32.xlu0 %v823
    %v825 = vpop.xlane.xlu0 %824
    %v826 = vmin.f32 %v292, %v293
    %827 = vmin.xlane.f32.xlu0 %v826
    %v828 = vpop.xlane.xlu0 %827
    %v829 = vmin.f32 %v294, %v295
    %830 = vmin.xlane.f32.xlu0 %v829
    %v831 = vpop.xlane.xlu0 %830
    %v832 = vmin.f32 %v296, %v297
    %833 = vmin.xlane.f32.xlu0 %v832
    %v834 = vpop.xlane.xlu0 %833
    %v835 = vmin.f32 %v298, %v299
    %836 = vmin.xlane.f32.xlu0 %v835
    %v837 = vpop.xlane.xlu0 %836
    %v838 = vmin.f32 %v300, %v301
    %839 = vmin.xlane.f32.xlu0 %v838
    %v840 = vpop.xlane.xlu0 %839
    %v841 = vmin.f32 %v302, %v303
    %842 = vmin.xlane.f32.xlu0 %v841
    %v843 = vpop.xlane.xlu0 %842
    %v844 = vmin.f32 %v304, %v305
    %845 = vmin.xlane.f32.xlu0 %v844
    %v846 = vpop.xlane.xlu0 %845
    %v847 = vmin.f32 %v306, %v307
    %848 = vmin.xlane.f32.xlu0 %v847
    %v849 = vpop.xlane.xlu0 %848
    %v850 = vmin.f32 %v308, %v309
    %851 = vmin.xlane.f32.xlu0 %v850
    %v852 = vpop.xlane.xlu0 %851
    %v853 = vmin.f32 %v310, %v311
    %854 = vmin.xlane.f32.xlu0 %v853
    %v855 = vpop.xlane.xlu0 %854
    %v856 = vmin.f32 %v312, %v313
    %857 = vmin.xlane.f32.xlu0 %v856
    %v858 = vpop.xlane.xlu0 %857
    %v859 = vmin.f32 %v314, %v315
    %860 = vmin.xlane.f32.xlu0 %v859
    %v861 = vpop.xlane.xlu0 %860
    %v862 = vmin.f32 %v316, %v317
    %863 = vmin.xlane.f32.xlu0 %v862
    %v864 = vpop.xlane.xlu0 %863
    %v865 = vmin.f32 %v318, %v319
    %866 = vmin.xlane.f32.xlu0 %v865
    %v867 = vpop.xlane.xlu0 %866
    %v868 = vmin.f32 %v320, %v321
    %869 = vmin.xlane.f32.xlu0 %v868
    %v870 = vpop.xlane.xlu0 %869
    %v871 = vmin.f32 %v322, %v323
    %872 = vmin.xlane.f32.xlu0 %v871
    %v873 = vpop.xlane.xlu0 %872
    %v874 = vmin.f32 %v324, %v325
    %875 = vmin.xlane.f32.xlu0 %v874
    %v876 = vpop.xlane.xlu0 %875
    %v877 = vmin.f32 %v326, %v327
    %878 = vmin.xlane.f32.xlu0 %v877
    %v879 = vpop.xlane.xlu0 %878
    %v880 = vmin.f32 %v328, %v329
    %881 = vmin.xlane.f32.xlu0 %v880
    %v882 = vpop.xlane.xlu0 %881
    %v883 = vmin.f32 %v330, %v331
    %884 = vmin.xlane.f32.xlu0 %v883
    %v885 = vpop.xlane.xlu0 %884
    %v886 = vmin.f32 %v332, %v333
    %887 = vmin.xlane.f32.xlu0 %v886
    %v888 = vpop.xlane.xlu0 %887
    %v889 = vmin.f32 %v334, %v335
    %890 = vmin.xlane.f32.xlu0 %v889
    %v891 = vpop.xlane.xlu0 %890
    %v892 = vmin.f32 %v336, %v337
    %893 = vmin.xlane.f32.xlu0 %v892
    %v894 = vpop.xlane.xlu0 %893
    %v895 = vmin.f32 %v338, %v339
    %896 = vmin.xlane.f32.xlu0 %v895
    %v897 = vpop.xlane.xlu0 %896
    %v898 = vmin.f32 %v340, %v341
    %899 = vmin.xlane.f32.xlu0 %v898
    %v900 = vpop.xlane.xlu0 %899
    %v901 = vmin.f32 %v342, %v343
    %902 = vmin.xlane.f32.xlu0 %v901
    %v903 = vpop.xlane.xlu0 %902
    %v904 = vmin.f32 %v344, %v345
    %905 = vmin.xlane.f32.xlu0 %v904
    %v906 = vpop.xlane.xlu0 %905
    %v907 = vmin.f32 %v346, %v347
    %908 = vmin.xlane.f32.xlu0 %v907
    %v909 = vpop.xlane.xlu0 %908
    %v910 = vmin.f32 %v348, %v349
    %911 = vmin.xlane.f32.xlu0 %v910
    %v912 = vpop.xlane.xlu0 %911
    %v913 = vmin.f32 %v350, %v351
    %914 = vmin.xlane.f32.xlu0 %v913
    %v915 = vpop.xlane.xlu0 %914
    %v916 = vmin.f32 %v352, %v353
    %917 = vmin.xlane.f32.xlu0 %v916
    %v918 = vpop.xlane.xlu0 %917
    %v919 = vmin.f32 %v354, %v355
    %920 = vmin.xlane.f32.xlu0 %v919
    %v921 = vpop.xlane.xlu0 %920
    %v922 = vmin.f32 %v356, %v357
    %923 = vmin.xlane.f32.xlu0 %v922
    %v924 = vpop.xlane.xlu0 %923
    %v925 = vmin.f32 %v358, %v359
    %926 = vmin.xlane.f32.xlu0 %v925
    %v927 = vpop.xlane.xlu0 %926
    %v928 = vmin.f32 %v360, %v361
    %929 = vmin.xlane.f32.xlu0 %v928
    %v930 = vpop.xlane.xlu0 %929
    %v931 = vmin.f32 %v362, %v363
    %932 = vmin.xlane.f32.xlu0 %v931
    %v933 = vpop.xlane.xlu0 %932
    %v934 = vmin.f32 %v364, %v365
    %935 = vmin.xlane.f32.xlu0 %v934
    %v936 = vpop.xlane.xlu0 %935
    %v937 = vmin.f32 %v366, %v367
    %938 = vmin.xlane.f32.xlu0 %v937
    %v939 = vpop.xlane.xlu0 %938
    %v940 = vmin.f32 %v368, %v369
    %941 = vmin.xlane.f32.xlu0 %v940
    %v942 = vpop.xlane.xlu0 %941
    %v943 = vmin.f32 %v370, %v371
    %944 = vmin.xlane.f32.xlu0 %v943
    %v945 = vpop.xlane.xlu0 %944
    %v946 = vmin.f32 %v372, %v373
    %947 = vmin.xlane.f32.xlu0 %v946
    %v948 = vpop.xlane.xlu0 %947
    %v949 = vmin.f32 %v374, %v375
    %950 = vmin.xlane.f32.xlu0 %v949
    %v951 = vpop.xlane.xlu0 %950
    %v952 = vmin.f32 %v376, %v377
    %953 = vmin.xlane.f32.xlu0 %v952
    %v954 = vpop.xlane.xlu0 %953
    %v955 = vmin.f32 %v378, %v379
    %956 = vmin.xlane.f32.xlu0 %v955
    %v957 = vpop.xlane.xlu0 %956
    %v958 = vmin.f32 %v380, %v381
    %959 = vmin.xlane.f32.xlu0 %v958
    %v960 = vpop.xlane.xlu0 %959
    %v961 = vmin.f32 %v382, %v383
    %962 = vmin.xlane.f32.xlu0 %v961
    %v963 = vpop.xlane.xlu0 %962
    %v964 = vmin.f32 %v384, %v385
    %965 = vmin.xlane.f32.xlu0 %v964
    %v966 = vpop.xlane.xlu0 %965
    %v967 = vmin.f32 %v386, %v387
    %968 = vmin.xlane.f32.xlu0 %v967
    %v969 = vpop.xlane.xlu0 %968
    %v970 = vmin.f32 %v388, %v389
    %971 = vmin.xlane.f32.xlu0 %v970
    %v972 = vpop.xlane.xlu0 %971
    %v973 = vmin.f32 %v390, %v391
    %974 = vmin.xlane.f32.xlu0 %v973
    %v975 = vpop.xlane.xlu0 %974
    %v976 = vmin.f32 %v392, %v393
    %977 = vmin.xlane.f32.xlu0 %v976
    %v978 = vpop.xlane.xlu0 %977
    %v979 = vmin.f32 %v394, %v395
    %980 = vmin.xlane.f32.xlu0 %v979
    %v981 = vpop.xlane.xlu0 %980
    %v982 = vmin.f32 %v396, %v397
    %983 = vmin.xlane.f32.xlu0 %v982
    %v984 = vpop.xlane.xlu0 %983
    %v985 = vmin.f32 %v398, %v399
    %986 = vmin.xlane.f32.xlu0 %v985
    %v987 = vpop.xlane.xlu0 %986
    %v988 = vmin.f32 %v400, %v401
    %989 = vmin.xlane.f32.xlu0 %v988
    %v990 = vpop.xlane.xlu0 %989
    %v991 = vmin.f32 %v402, %v403
    %992 = vmin.xlane.f32.xlu0 %v991
    %v993 = vpop.xlane.xlu0 %992
    %v994 = vmin.f32 %v404, %v405
    %995 = vmin.xlane.f32.xlu0 %v994
    %v996 = vpop.xlane.xlu0 %995
    %v997 = vmin.f32 %v406, %v407
    %998 = vmin.xlane.f32.xlu0 %v997
    %v999 = vpop.xlane.xlu0 %998
    %v1000 = vmin.f32 %v408, %v409
    %1001 = vmin.xlane.f32.xlu0 %v1000
    %v1002 = vpop.xlane.xlu0 %1001
    %v1003 = vmin.f32 %v410, %v411
    %1004 = vmin.xlane.f32.xlu0 %v1003
    %v1005 = vpop.xlane.xlu0 %1004
    %v1006 = vmin.f32 %v412, %v413
    %1007 = vmin.xlane.f32.xlu0 %v1006
    %v1008 = vpop.xlane.xlu0 %1007
    %v1009 = vmin.f32 %v414, %v415
    %1010 = vmin.xlane.f32.xlu0 %v1009
    %v1011 = vpop.xlane.xlu0 %1010
    %v1012 = vmin.f32 %v416, %v417
    %1013 = vmin.xlane.f32.xlu0 %v1012
    %v1014 = vpop.xlane.xlu0 %1013
    %v1015 = vmin.f32 %v418, %v419
    %1016 = vmin.xlane.f32.xlu0 %v1015
    %v1017 = vpop.xlane.xlu0 %1016
    %v1018 = vmin.f32 %v420, %v421
    %1019 = vmin.xlane.f32.xlu0 %v1018
    %v1020 = vpop.xlane.xlu0 %1019
    %v1021 = vmin.f32 %v422, %v423
    %1022 = vmin.xlane.f32.xlu0 %v1021
    %v1023 = vpop.xlane.xlu0 %1022
    %v1024 = vmin.f32 %v424, %v425
    %1025 = vmin.xlane.f32.xlu0 %v1024
    %v1026 = vpop.xlane.xlu0 %1025
    %v1027 = vmin.f32 %v426, %v427
    %1028 = vmin.xlane.f32.xlu0 %v1027
    %v1029 = vpop.xlane.xlu0 %1028
    %v1030 = vmin.f32 %v428, %v429
    %1031 = vmin.xlane.f32.xlu0 %v1030
    %v1032 = vpop.xlane.xlu0 %1031
    %v1033 = vmin.f32 %v430, %v431
    %1034 = vmin.xlane.f32.xlu0 %v1033
    %v1035 = vpop.xlane.xlu0 %1034
    %v1036 = vmin.f32 %v432, %v433
    %1037 = vmin.xlane.f32.xlu0 %v1036
    %v1038 = vpop.xlane.xlu0 %1037
    %v1039 = vmin.f32 %v434, %v435
    %1040 = vmin.xlane.f32.xlu0 %v1039
    %v1041 = vpop.xlane.xlu0 %1040
    %v1042 = vmin.f32 %v436, %v437
    %1043 = vmin.xlane.f32.xlu0 %v1042
    %v1044 = vpop.xlane.xlu0 %1043
    %v1045 = vmin.f32 %v438, %v439
    %1046 = vmin.xlane.f32.xlu0 %v1045
    %v1047 = vpop.xlane.xlu0 %1046
    %v1048 = vmin.f32 %v440, %v441
    %1049 = vmin.xlane.f32.xlu0 %v1048
    %v1050 = vpop.xlane.xlu0 %1049
    %v1051 = vmin.f32 %v442, %v443
    %1052 = vmin.xlane.f32.xlu0 %v1051
    %v1053 = vpop.xlane.xlu0 %1052
    %v1054 = vmin.f32 %v444, %v445
    %1055 = vmin.xlane.f32.xlu0 %v1054
    %v1056 = vpop.xlane.xlu0 %1055
    %v1057 = vmin.f32 %v446, %v447
    %1058 = vmin.xlane.f32.xlu0 %v1057
    %v1059 = vpop.xlane.xlu0 %1058
    %v1060 = vmin.f32 %v448, %v449
    %1061 = vmin.xlane.f32.xlu0 %v1060
    %v1062 = vpop.xlane.xlu0 %1061
    %v1063 = vmin.f32 %v450, %v451
    %1064 = vmin.xlane.f32.xlu0 %v1063
    %v1065 = vpop.xlane.xlu0 %1064
    %v1066 = vmin.f32 %v452, %v453
    %1067 = vmin.xlane.f32.xlu0 %v1066
    %v1068 = vpop.xlane.xlu0 %1067
    %v1069 = vmin.f32 %v454, %v455
    %1070 = vmin.xlane.f32.xlu0 %v1069
    %v1071 = vpop.xlane.xlu0 %1070
    %v1072 = vmin.f32 %v456, %v457
    %1073 = vmin.xlane.f32.xlu0 %v1072
    %v1074 = vpop.xlane.xlu0 %1073
    %v1075 = vmin.f32 %v458, %v459
    %1076 = vmin.xlane.f32.xlu0 %v1075
    %v1077 = vpop.xlane.xlu0 %1076
    %v1078 = vmin.f32 %v460, %v461
    %1079 = vmin.xlane.f32.xlu0 %v1078
    %v1080 = vpop.xlane.xlu0 %1079
    %v1081 = vmin.f32 %v462, %v463
    %1082 = vmin.xlane.f32.xlu0 %v1081
    %v1083 = vpop.xlane.xlu0 %1082
    %v1084 = vmin.f32 %v464, %v465
    %1085 = vmin.xlane.f32.xlu0 %v1084
    %v1086 = vpop.xlane.xlu0 %1085
    %v1087 = vmin.f32 %v466, %v467
    %1088 = vmin.xlane.f32.xlu0 %v1087
    %v1089 = vpop.xlane.xlu0 %1088
    %v1090 = vmin.f32 %v468, %v469
    %1091 = vmin.xlane.f32.xlu0 %v1090
    %v1092 = vpop.xlane.xlu0 %1091
    %v1093 = vmin.f32 %v470, %v471
    %1094 = vmin.xlane.f32.xlu0 %v1093
    %v1095 = vpop.xlane.xlu0 %1094
    %v1096 = vmin.f32 %v472, %v473
    %1097 = vmin.xlane.f32.xlu0 %v1096
    %v1098 = vpop.xlane.xlu0 %1097
    %v1099 = vmin.f32 %v474, %v475
    %1100 = vmin.xlane.f32.xlu0 %v1099
    %v1101 = vpop.xlane.xlu0 %1100
    %v1102 = vmin.f32 %v476, %v477
    %1103 = vmin.xlane.f32.xlu0 %v1102
    %v1104 = vpop.xlane.xlu0 %1103
    %v1105 = vmin.f32 %v478, %v479
    %1106 = vmin.xlane.f32.xlu0 %v1105
    %v1107 = vpop.xlane.xlu0 %1106
    %v1108 = vmin.f32 %v480, %v481
    %1109 = vmin.xlane.f32.xlu0 %v1108
    %v1110 = vpop.xlane.xlu0 %1109
    %v1111 = vmin.f32 %v482, %v483
    %1112 = vmin.xlane.f32.xlu0 %v1111
    %v1113 = vpop.xlane.xlu0 %1112
    %v1114 = vmin.f32 %v484, %v485
    %1115 = vmin.xlane.f32.xlu0 %v1114
    %v1116 = vpop.xlane.xlu0 %1115
    %v1117 = vmin.f32 %v486, %v487
    %1118 = vmin.xlane.f32.xlu0 %v1117
    %v1119 = vpop.xlane.xlu0 %1118
    %v1120 = vmin.f32 %v488, %v489
    %1121 = vmin.xlane.f32.xlu0 %v1120
    %v1122 = vpop.xlane.xlu0 %1121
    %v1123 = vmin.f32 %v490, %v491
    %1124 = vmin.xlane.f32.xlu0 %v1123
    %v1125 = vpop.xlane.xlu0 %1124
    %v1126 = vmin.f32 %v492, %v493
    %1127 = vmin.xlane.f32.xlu0 %v1126
    %v1128 = vpop.xlane.xlu0 %1127
    %v1129 = vmin.f32 %v494, %v495
    %1130 = vmin.xlane.f32.xlu0 %v1129
    %v1131 = vpop.xlane.xlu0 %1130
    %v1132 = vmin.f32 %v496, %v497
    %1133 = vmin.xlane.f32.xlu0 %v1132
    %v1134 = vpop.xlane.xlu0 %1133
    %v1135 = vmin.f32 %v498, %v499
    %1136 = vmin.xlane.f32.xlu0 %v1135
    %v1137 = vpop.xlane.xlu0 %1136
    %v1138 = vmin.f32 %v500, %v501
    %1139 = vmin.xlane.f32.xlu0 %v1138
    %v1140 = vpop.xlane.xlu0 %1139
    %v1141 = vmin.f32 %v502, %v503
    %1142 = vmin.xlane.f32.xlu0 %v1141
    %v1143 = vpop.xlane.xlu0 %1142
    %v1144 = vmin.f32 %v504, %v505
    %1145 = vmin.xlane.f32.xlu0 %v1144
    %v1146 = vpop.xlane.xlu0 %1145
    %v1147 = vmin.f32 %v506, %v507
    %1148 = vmin.xlane.f32.xlu0 %v1147
    %v1149 = vpop.xlane.xlu0 %1148
    %v1150 = vmin.f32 %v508, %v509
    %1151 = vmin.xlane.f32.xlu0 %v1150
    %v1152 = vpop.xlane.xlu0 %1151
    %v1153 = vmin.f32 %v510, %v511
    %1154 = vmin.xlane.f32.xlu0 %v1153
    %v1155 = vpop.xlane.xlu0 %1154
    %v1156 = vmin.f32 %v512, %v513
    %1157 = vmin.xlane.f32.xlu0 %v1156
    %v1158 = vpop.xlane.xlu0 %1157
    %v1159 = vmin.f32 %v514, %v515
    %1160 = vmin.xlane.f32.xlu0 %v1159
    %v1161 = vpop.xlane.xlu0 %1160
    %v1162 = vmin.f32 %v516, %v517
    %1163 = vmin.xlane.f32.xlu0 %v1162
    %v1164 = vpop.xlane.xlu0 %1163
    %v1165 = vmin.f32 %v518, %v519
    %1166 = vmin.xlane.f32.xlu0 %v1165
    %v1167 = vpop.xlane.xlu0 %1166
    %v1168 = vmin.f32 %v520, %v521
    %1169 = vmin.xlane.f32.xlu0 %v1168
    %v1170 = vpop.xlane.xlu0 %1169
    %v1171 = vmin.f32 %v522, %v523
    %1172 = vmin.xlane.f32.xlu0 %v1171
    %v1173 = vpop.xlane.xlu0 %1172
    %v1174 = vmin.f32 %v524, %v525
    %1175 = vmin.xlane.f32.xlu0 %v1174
    %v1176 = vpop.xlane.xlu0 %1175
    %v1177 = vmin.f32 %v526, %v527
    %1178 = vmin.xlane.f32.xlu0 %v1177
    %v1179 = vpop.xlane.xlu0 %1178
    %v1180 = vmin.f32 %v528, %v529
    %1181 = vmin.xlane.f32.xlu0 %v1180
    %v1182 = vpop.xlane.xlu0 %1181
    %v1183 = vmin.f32 %v530, %v531
    %1184 = vmin.xlane.f32.xlu0 %v1183
    %v1185 = vpop.xlane.xlu0 %1184
    %v1186 = vmin.f32 %v532, %v533
    %1187 = vmin.xlane.f32.xlu0 %v1186
    %v1188 = vpop.xlane.xlu0 %1187
    %v1189 = vmin.f32 %v534, %v535
    %1190 = vmin.xlane.f32.xlu0 %v1189
    %v1191 = vpop.xlane.xlu0 %1190
    %v1192 = vmin.f32 %v536, %v537
    %1193 = vmin.xlane.f32.xlu0 %v1192
    %v1194 = vpop.xlane.xlu0 %1193
    %v1195 = vmin.f32 %v538, %v539
    %1196 = vmin.xlane.f32.xlu0 %v1195
    %v1197 = vpop.xlane.xlu0 %1196
    %v1198 = vmin.f32 %v540, %v541
    %1199 = vmin.xlane.f32.xlu0 %v1198
    %v1200 = vpop.xlane.xlu0 %1199
    %v1201 = vmin.f32 %v542, %v543
    %1202 = vmin.xlane.f32.xlu0 %v1201
    %v1203 = vpop.xlane.xlu0 %1202
    %v1204 = vmin.f32 %v544, %v545
    %1205 = vmin.xlane.f32.xlu0 %v1204
    %v1206 = vpop.xlane.xlu0 %1205
    %v1207 = vmin.f32 %v546, %v547
    %1208 = vmin.xlane.f32.xlu0 %v1207
    %v1209 = vpop.xlane.xlu0 %1208
    %v1210 = vmin.f32 %v548, %v549
    %1211 = vmin.xlane.f32.xlu0 %v1210
    %v1212 = vpop.xlane.xlu0 %1211
    %v1213 = vmin.f32 %v550, %v551
    %1214 = vmin.xlane.f32.xlu0 %v1213
    %v1215 = vpop.xlane.xlu0 %1214
    %v1216 = vmin.f32 %v552, %v553
    %1217 = vmin.xlane.f32.xlu0 %v1216
    %v1218 = vpop.xlane.xlu0 %1217
    %v1219 = vmin.f32 %v554, %v555
    %1220 = vmin.xlane.f32.xlu0 %v1219
    %v1221 = vpop.xlane.xlu0 %1220
    %v1222 = vmin.f32 %v556, %v557
    %1223 = vmin.xlane.f32.xlu0 %v1222
    %v1224 = vpop.xlane.xlu0 %1223
    %v1225 = vmin.f32 %v558, %v559
    %1226 = vmin.xlane.f32.xlu0 %v1225
    %v1227 = vpop.xlane.xlu0 %1226
    %v1228 = vmin.f32 %v560, %v561
    %1229 = vmin.xlane.f32.xlu0 %v1228
    %v1230 = vpop.xlane.xlu0 %1229
    %v1231 = vmin.f32 %v562, %v563
    %1232 = vmin.xlane.f32.xlu0 %v1231
    %v1233 = vpop.xlane.xlu0 %1232
    %v1234 = vmin.f32 %v564, %v565
    %1235 = vmin.xlane.f32.xlu0 %v1234
    %v1236 = vpop.xlane.xlu0 %1235
    %v1237 = vmin.f32 %v566, %v567
    %1238 = vmin.xlane.f32.xlu0 %v1237
    %v1239 = vpop.xlane.xlu0 %1238
    %v1240 = vmin.f32 %v568, %v569
    %1241 = vmin.xlane.f32.xlu0 %v1240
    %v1242 = vpop.xlane.xlu0 %1241
    %v1243 = vmin.f32 %v570, %v571
    %1244 = vmin.xlane.f32.xlu0 %v1243
    %v1245 = vpop.xlane.xlu0 %1244
    %v1246 = vmin.f32 %v572, %v573
    %1247 = vmin.xlane.f32.xlu0 %v1246
    %v1248 = vpop.xlane.xlu0 %1247
    %v1249 = vmin.f32 %v574, %v575
    %1250 = vmin.xlane.f32.xlu0 %v1249
    %v1251 = vpop.xlane.xlu0 %1250
    %v1252 = vmin.f32 %v576, %v577
    %1253 = vmin.xlane.f32.xlu0 %v1252
    %v1254 = vpop.xlane.xlu0 %1253
    %v1255 = vmin.f32 %v578, %v579
    %1256 = vmin.xlane.f32.xlu0 %v1255
    %v1257 = vpop.xlane.xlu0 %1256
    %v1258 = vmin.f32 %v580, %v581
    %1259 = vmin.xlane.f32.xlu0 %v1258
    %v1260 = vpop.xlane.xlu0 %1259
    %v1261 = vmin.f32 %v582, %v583
    %1262 = vmin.xlane.f32.xlu0 %v1261
    %v1263 = vpop.xlane.xlu0 %1262
    %v1264 = vmin.f32 %v584, %v585
    %1265 = vmin.xlane.f32.xlu0 %v1264
    %v1266 = vpop.xlane.xlu0 %1265
    %v1267 = vmin.f32 %v586, %v587
    %1268 = vmin.xlane.f32.xlu0 %v1267
    %v1269 = vpop.xlane.xlu0 %1268
    %v1270 = vmin.f32 %v588, %v589
    %1271 = vmin.xlane.f32.xlu0 %v1270
    %v1272 = vpop.xlane.xlu0 %1271
    %v1273 = vmin.f32 %v590, %v591
    %1274 = vmin.xlane.f32.xlu0 %v1273
    %v1275 = vpop.xlane.xlu0 %1274
    %v1276 = vmin.f32 %v592, %v593
    %1277 = vmin.xlane.f32.xlu0 %v1276
    %v1278 = vpop.xlane.xlu0 %1277
    %v1279 = vmin.f32 %v594, %v595
    %1280 = vmin.xlane.f32.xlu0 %v1279
    %v1281 = vpop.xlane.xlu0 %1280
    %v1282 = vmin.f32 %v596, %v597
    %1283 = vmin.xlane.f32.xlu0 %v1282
    %v1284 = vpop.xlane.xlu0 %1283
    %v1285 = vmin.f32 %v598, %v599
    %1286 = vmin.xlane.f32.xlu0 %v1285
    %v1287 = vpop.xlane.xlu0 %1286
    %v1288 = vmin.f32 %v600, %v601
    %1289 = vmin.xlane.f32.xlu0 %v1288
    %v1290 = vpop.xlane.xlu0 %1289
    %v1291 = vmin.f32 %v602, %v603
    %1292 = vmin.xlane.f32.xlu0 %v1291
    %v1293 = vpop.xlane.xlu0 %1292
    %v1294 = vmin.f32 %v604, %v605
    %1295 = vmin.xlane.f32.xlu0 %v1294
    %v1296 = vpop.xlane.xlu0 %1295
    %v1297 = vmin.f32 %v606, %v607
    %1298 = vmin.xlane.f32.xlu0 %v1297
    %v1299 = vpop.xlane.xlu0 %1298
    %v1300 = vmin.f32 %v608, %v609
    %1301 = vmin.xlane.f32.xlu0 %v1300
    %v1302 = vpop.xlane.xlu0 %1301
    %v1303 = vmin.f32 %v610, %v611
    %1304 = vmin.xlane.f32.xlu0 %v1303
    %v1305 = vpop.xlane.xlu0 %1304
    %v1306 = vmin.f32 %v612, %v613
    %1307 = vmin.xlane.f32.xlu0 %v1306
    %v1308 = vpop.xlane.xlu0 %1307
    %v1309 = vmin.f32 %v614, %v615
    %1310 = vmin.xlane.f32.xlu0 %v1309
    %v1311 = vpop.xlane.xlu0 %1310
    %v1312 = vmin.f32 %v616, %v617
    %1313 = vmin.xlane.f32.xlu0 %v1312
    %v1314 = vpop.xlane.xlu0 %1313
    %v1315 = vmin.f32 %v618, %v619
    %1316 = vmin.xlane.f32.xlu0 %v1315
    %v1317 = vpop.xlane.xlu0 %1316
    %v1318 = vmin.f32 %v620, %v621
    %1319 = vmin.xlane.f32.xlu0 %v1318
    %v1320 = vpop.xlane.xlu0 %1319
    %v1321 = vmin.f32 %v622, %v623
    %1322 = vmin.xlane.f32.xlu0 %v1321
    %v1323 = vpop.xlane.xlu0 %1322
    %v1324 = vmin.f32 %v624, %v625
    %1325 = vmin.xlane.f32.xlu0 %v1324
    %v1326 = vpop.xlane.xlu0 %1325
    %v1327 = vmin.f32 %v626, %v627
    %1328 = vmin.xlane.f32.xlu0 %v1327
    %v1329 = vpop.xlane.xlu0 %1328
    %v1330 = vmin.f32 %v628, %v629
    %1331 = vmin.xlane.f32.xlu0 %v1330
    %v1332 = vpop.xlane.xlu0 %1331
    %v1333 = vmin.f32 %v630, %v631
    %1334 = vmin.xlane.f32.xlu0 %v1333
    %v1335 = vpop.xlane.xlu0 %1334
    %v1336 = vmin.f32 %v632, %v633
    %1337 = vmin.xlane.f32.xlu0 %v1336
    %v1338 = vpop.xlane.xlu0 %1337
    %v1339 = vmin.f32 %v634, %v635
    %1340 = vmin.xlane.f32.xlu0 %v1339
    %v1341 = vpop.xlane.xlu0 %1340
    %v1342 = vmin.f32 %v636, %v637
    %1343 = vmin.xlane.f32.xlu0 %v1342
    %v1344 = vpop.xlane.xlu0 %1343
    %v1345 = vmin.f32 %v638, %v639
    %1346 = vmin.xlane.f32.xlu0 %v1345
    %v1347 = vpop.xlane.xlu0 %1346
    %v1348 = vmin.f32 %v640, %v641
    %1349 = vmin.xlane.f32.xlu0 %v1348
    %v1350 = vpop.xlane.xlu0 %1349
    %v1351 = vmin.f32 %v642, %v643
    %1352 = vmin.xlane.f32.xlu0 %v1351
    %v1353 = vpop.xlane.xlu0 %1352
    %v1354 = vmin.f32 %v644, %v645
    %1355 = vmin.xlane.f32.xlu0 %v1354
    %v1356 = vpop.xlane.xlu0 %1355
    %v1357 = vmin.f32 %v646, %v647
    %1358 = vmin.xlane.f32.xlu0 %v1357
    %v1359 = vpop.xlane.xlu0 %1358
    %v1360 = vmin.f32 %v648, %v649
    %1361 = vmin.xlane.f32.xlu0 %v1360
    %v1362 = vpop.xlane.xlu0 %1361
    %v1363 = vmin.f32 %v650, %v651
    %1364 = vmin.xlane.f32.xlu0 %v1363
    %v1365 = vpop.xlane.xlu0 %1364
    %v1366 = vmin.f32 %v652, %v653
    %1367 = vmin.xlane.f32.xlu0 %v1366
    %v1368 = vpop.xlane.xlu0 %1367
    %v1369 = vmin.f32 %v654, %v655
    %1370 = vmin.xlane.f32.xlu0 %v1369
    %v1371 = vpop.xlane.xlu0 %1370
    %v1372 = vmin.f32 %v656, %v657
    %1373 = vmin.xlane.f32.xlu0 %v1372
    %v1374 = vpop.xlane.xlu0 %1373
    %v1375 = vmin.f32 %v658, %v659
    %1376 = vmin.xlane.f32.xlu0 %v1375
    %v1377 = vpop.xlane.xlu0 %1376
    %v1378 = vmin.f32 %v660, %v661
    %1379 = vmin.xlane.f32.xlu0 %v1378
    %v1380 = vpop.xlane.xlu0 %1379
    %v1381 = vmin.f32 %v662, %v663
    %1382 = vmin.xlane.f32.xlu0 %v1381
    %v1383 = vpop.xlane.xlu0 %1382
    %v1384 = vmin.f32 %v664, %v665
    %1385 = vmin.xlane.f32.xlu0 %v1384
    %v1386 = vpop.xlane.xlu0 %1385
    %v1387 = vmin.f32 %v666, %v667
    %1388 = vmin.xlane.f32.xlu0 %v1387
    %v1389 = vpop.xlane.xlu0 %1388
    %v1390 = vmin.f32 %v668, %v669
    %1391 = vmin.xlane.f32.xlu0 %v1390
    %v1392 = vpop.xlane.xlu0 %1391
    %v1393 = vmin.f32 %v670, %v671
    %1394 = vmin.xlane.f32.xlu0 %v1393
    %v1395 = vpop.xlane.xlu0 %1394
    %v1396 = vmin.f32 %v672, %v673
    %1397 = vmin.xlane.f32.xlu0 %v1396
    %v1398 = vpop.xlane.xlu0 %1397
    %v1399 = vmin.f32 %v674, %v675
    %1400 = vmin.xlane.f32.xlu0 %v1399
    %v1401 = vpop.xlane.xlu0 %1400
    %v1402 = vmin.f32 %v676, %v677
    %1403 = vmin.xlane.f32.xlu0 %v1402
    %v1404 = vpop.xlane.xlu0 %1403
    %v1405 = vmin.f32 %v678, %v679
    %1406 = vmin.xlane.f32.xlu0 %v1405
    %v1407 = vpop.xlane.xlu0 %1406
    %v1408 = vmin.f32 %v680, %v681
    %1409 = vmin.xlane.f32.xlu0 %v1408
    %v1410 = vpop.xlane.xlu0 %1409
    %v1411 = vmin.f32 %v682, %v683
    %1412 = vmin.xlane.f32.xlu0 %v1411
    %v1413 = vpop.xlane.xlu0 %1412
    %v1414 = vmin.f32 %v684, %v685
    %1415 = vmin.xlane.f32.xlu0 %v1414
    %v1416 = vpop.xlane.xlu0 %1415
    %v1417 = vmin.f32 %v686, %v687
    %1418 = vmin.xlane.f32.xlu0 %v1417
    %v1419 = vpop.xlane.xlu0 %1418
    %v1420 = vmin.f32 %v688, %v689
    %1421 = vmin.xlane.f32.xlu0 %v1420
    %v1422 = vpop.xlane.xlu0 %1421
    %v1423 = vmin.f32 %v690, %v691
    %1424 = vmin.xlane.f32.xlu0 %v1423
    %v1425 = vpop.xlane.xlu0 %1424
    %v1426 = vmin.f32 %v692, %v693
    %1427 = vmin.xlane.f32.xlu0 %v1426
    %v1428 = vpop.xlane.xlu0 %1427
    %v1429 = vmin.f32 %v694, %v695
    %1430 = vmin.xlane.f32.xlu0 %v1429
    %v1431 = vpop.xlane.xlu0 %1430
    %v1432 = vmin.f32 %v696, %v697
    %1433 = vmin.xlane.f32.xlu0 %v1432
    %v1434 = vpop.xlane.xlu0 %1433
    %v1435 = vmin.f32 %v698, %v699
    %1436 = vmin.xlane.f32.xlu0 %v1435
    %v1437 = vpop.xlane.xlu0 %1436
    %v1438 = vmin.f32 %v700, %v701
    %1439 = vmin.xlane.f32.xlu0 %v1438
    %v1440 = vpop.xlane.xlu0 %1439
    %v1441 = vmin.f32 %v702, %v703
    %1442 = vmin.xlane.f32.xlu0 %v1441
    %v1443 = vpop.xlane.xlu0 %1442
    %v1444 = vmin.f32 %v704, %v705
    %1445 = vmin.xlane.f32.xlu0 %v1444
    %v1446 = vpop.xlane.xlu0 %1445
    %v1447 = vmin.f32 %v706, %v707
    %1448 = vmin.xlane.f32.xlu0 %v1447
    %v1449 = vpop.xlane.xlu0 %1448
    %v1450 = vmin.f32 %v708, %v709
    %1451 = vmin.xlane.f32.xlu0 %v1450
    %v1452 = vpop.xlane.xlu0 %1451
    %v1453 = vmin.f32 %v710, %v711
    %1454 = vmin.xlane.f32.xlu0 %v1453
    %v1455 = vpop.xlane.xlu0 %1454
    %v1456 = vmin.f32 %v712, %v713
    %1457 = vmin.xlane.f32.xlu0 %v1456
    %v1458 = vpop.xlane.xlu0 %1457
    %v1459 = vmin.f32 %v714, %v715
    %1460 = vmin.xlane.f32.xlu0 %v1459
    %v1461 = vpop.xlane.xlu0 %1460
    %v1462 = vmin.f32 %v716, %v717
    %1463 = vmin.xlane.f32.xlu0 %v1462
    %v1464 = vpop.xlane.xlu0 %1463
    %v1465 = vmin.f32 %v718, %v719
    %1466 = vmin.xlane.f32.xlu0 %v1465
    %v1467 = vpop.xlane.xlu0 %1466
    %v1468 = vmin.f32 %v720, %v721
    %1469 = vmin.xlane.f32.xlu0 %v1468
    %v1470 = vpop.xlane.xlu0 %1469
    %v1471 = vmin.f32 %v722, %v723
    %1472 = vmin.xlane.f32.xlu0 %v1471
    %v1473 = vpop.xlane.xlu0 %1472
    %v1474 = vmin.f32 %v724, %v725
    %1475 = vmin.xlane.f32.xlu0 %v1474
    %v1476 = vpop.xlane.xlu0 %1475
    %v1477 = vmin.f32 %v726, %v727
    %1478 = vmin.xlane.f32.xlu0 %v1477
    %v1479 = vpop.xlane.xlu0 %1478
    %v1480 = vmin.f32 %v728, %v729
    %1481 = vmin.xlane.f32.xlu0 %v1480
    %v1482 = vpop.xlane.xlu0 %1481
    %v1483 = vmin.f32 %v730, %v731
    %1484 = vmin.xlane.f32.xlu0 %v1483
    %v1485 = vpop.xlane.xlu0 %1484
    %v1486 = vmin.f32 %v732, %v733
    %1487 = vmin.xlane.f32.xlu0 %v1486
    %v1488 = vpop.xlane.xlu0 %1487
    %v1489 = vmin.f32 %v734, %v735
    %1490 = vmin.xlane.f32.xlu0 %v1489
    %v1491 = vpop.xlane.xlu0 %1490
    %v1492 = vmin.f32 %v736, %v737
    %1493 = vmin.xlane.f32.xlu0 %v1492
    %v1494 = vpop.xlane.xlu0 %1493
    %v1495 = vmin.f32 %v738, %v739
    %1496 = vmin.xlane.f32.xlu0 %v1495
    %v1497 = vpop.xlane.xlu0 %1496
    %v1498 = vmin.f32 %v740, %v741
    %1499 = vmin.xlane.f32.xlu0 %v1498
    %v1500 = vpop.xlane.xlu0 %1499
    %v1501 = vmin.f32 %v742, %v743
    %1502 = vmin.xlane.f32.xlu0 %v1501
    %v1503 = vpop.xlane.xlu0 %1502
    %v1504 = vmin.f32 %v744, %v745
    %1505 = vmin.xlane.f32.xlu0 %v1504
    %v1506 = vpop.xlane.xlu0 %1505
    %v1507 = vmin.f32 %v746, %v747
    %1508 = vmin.xlane.f32.xlu0 %v1507
    %v1509 = vpop.xlane.xlu0 %1508
    %v1510 = vmin.f32 %v748, %v749
    %1511 = vmin.xlane.f32.xlu0 %v1510
    %v1512 = vpop.xlane.xlu0 %1511
    %v1513 = vmin.f32 %v750, %v751
    %1514 = vmin.xlane.f32.xlu0 %v1513
    %v1515 = vpop.xlane.xlu0 %1514
    %v1516 = vmin.f32 %v752, %v753
    %1517 = vmin.xlane.f32.xlu0 %v1516
    %v1518 = vpop.xlane.xlu0 %1517
    %v1519 = vmin.f32 %v754, %v755
    %1520 = vmin.xlane.f32.xlu0 %v1519
    %v1521 = vpop.xlane.xlu0 %1520
    %v1522 = vmin.f32 %v756, %v757
    %1523 = vmin.xlane.f32.xlu0 %v1522
    %v1524 = vpop.xlane.xlu0 %1523
    %v1525 = vmin.f32 %v758, %v759
    %1526 = vmin.xlane.f32.xlu0 %v1525
    %v1527 = vpop.xlane.xlu0 %1526
    %v1528 = vrsqrt.pop %v762
    %v1529 = vmul.f32 %v762, %v1528
    %vm1530 = vcmp.eq.f32.partialorder %v762, inf
    %v1531 = vsel %vm1530, %v762, %v1529
    %vm1532 = vcmp.eq.f32.partialorder %v762, 0.0
    %v1533 = vand.u32 %v762, 2147483648
    %v1534 = vsel %vm1532, %v1533, %v1531
    %v1535 = vrsqrt.pop %v765
    %v1536 = vmul.f32 %v765, %v1535
    %vm1537 = vcmp.eq.f32.partialorder %v765, inf
    %v1538 = vsel %vm1537, %v765, %v1536
    %vm1539 = vcmp.eq.f32.partialorder %v765, 0.0
    %v1540 = vand.u32 %v765, 2147483648
    %v1541 = vsel %vm1539, %v1540, %v1538
    %v1542 = vrsqrt.pop %v768
    %v1543 = vmul.f32 %v768, %v1542
    %vm1544 = vcmp.eq.f32.partialorder %v768, inf
    %v1545 = vsel %vm1544, %v768, %v1543
    %vm1546 = vcmp.eq.f32.partialorder %v768, 0.0
    %v1547 = vand.u32 %v768, 2147483648
    %v1548 = vsel %vm1546, %v1547, %v1545
    %v1549 = vrsqrt.pop %v771
    %v1550 = vmul.f32 %v771, %v1549
    %vm1551 = vcmp.eq.f32.partialorder %v771, inf
    %v1552 = vsel %vm1551, %v771, %v1550
    %vm1553 = vcmp.eq.f32.partialorder %v771, 0.0
    %v1554 = vand.u32 %v771, 2147483648
    %v1555 = vsel %vm1553, %v1554, %v1552
    %v1556 = vrsqrt.pop %v774
    %v1557 = vmul.f32 %v774, %v1556
    %vm1558 = vcmp.eq.f32.partialorder %v774, inf
    %v1559 = vsel %vm1558, %v774, %v1557
    %vm1560 = vcmp.eq.f32.partialorder %v774, 0.0
    %v1561 = vand.u32 %v774, 2147483648
    %v1562 = vsel %vm1560, %v1561, %v1559
    %v1563 = vrsqrt.pop %v777
    %v1564 = vmul.f32 %v777, %v1563
    %vm1565 = vcmp.eq.f32.partialorder %v777, inf
    %v1566 = vsel %vm1565, %v777, %v1564
    %vm1567 = vcmp.eq.f32.partialorder %v777, 0.0
    %v1568 = vand.u32 %v777, 2147483648
    %v1569 = vsel %vm1567, %v1568, %v1566
    %v1570 = vrsqrt.pop %v780
    %v1571 = vmul.f32 %v780, %v1570
    %vm1572 = vcmp.eq.f32.partialorder %v780, inf
    %v1573 = vsel %vm1572, %v780, %v1571
    %vm1574 = vcmp.eq.f32.partialorder %v780, 0.0
    %v1575 = vand.u32 %v780, 2147483648
    %v1576 = vsel %vm1574, %v1575, %v1573
    %v1577 = vrsqrt.pop %v783
    %v1578 = vmul.f32 %v783, %v1577
    %vm1579 = vcmp.eq.f32.partialorder %v783, inf
    %v1580 = vsel %vm1579, %v783, %v1578
    %vm1581 = vcmp.eq.f32.partialorder %v783, 0.0
    %v1582 = vand.u32 %v783, 2147483648
    %v1583 = vsel %vm1581, %v1582, %v1580
    %v1584 = vrsqrt.pop %v786
    %v1585 = vmul.f32 %v786, %v1584
    %vm1586 = vcmp.eq.f32.partialorder %v786, inf
    %v1587 = vsel %vm1586, %v786, %v1585
    %vm1588 = vcmp.eq.f32.partialorder %v786, 0.0
    %v1589 = vand.u32 %v786, 2147483648
    %v1590 = vsel %vm1588, %v1589, %v1587
    %v1591 = vrsqrt.pop %v789
    %v1592 = vmul.f32 %v789, %v1591
    %vm1593 = vcmp.eq.f32.partialorder %v789, inf
    %v1594 = vsel %vm1593, %v789, %v1592
    %vm1595 = vcmp.eq.f32.partialorder %v789, 0.0
    %v1596 = vand.u32 %v789, 2147483648
    %v1597 = vsel %vm1595, %v1596, %v1594
    %v1598 = vrsqrt.pop %v792
    %v1599 = vmul.f32 %v792, %v1598
    %vm1600 = vcmp.eq.f32.partialorder %v792, inf
    %v1601 = vsel %vm1600, %v792, %v1599
    %vm1602 = vcmp.eq.f32.partialorder %v792, 0.0
    %v1603 = vand.u32 %v792, 2147483648
    %v1604 = vsel %vm1602, %v1603, %v1601
    %v1605 = vrsqrt.pop %v795
    %v1606 = vmul.f32 %v795, %v1605
    %vm1607 = vcmp.eq.f32.partialorder %v795, inf
    %v1608 = vsel %vm1607, %v795, %v1606
    %vm1609 = vcmp.eq.f32.partialorder %v795, 0.0
    %v1610 = vand.u32 %v795, 2147483648
    %v1611 = vsel %vm1609, %v1610, %v1608
    %v1612 = vrsqrt.pop %v798
    %v1613 = vmul.f32 %v798, %v1612
    %vm1614 = vcmp.eq.f32.partialorder %v798, inf
    %v1615 = vsel %vm1614, %v798, %v1613
    %vm1616 = vcmp.eq.f32.partialorder %v798, 0.0
    %v1617 = vand.u32 %v798, 2147483648
    %v1618 = vsel %vm1616, %v1617, %v1615
    %v1619 = vrsqrt.pop %v801
    %v1620 = vmul.f32 %v801, %v1619
    %vm1621 = vcmp.eq.f32.partialorder %v801, inf
    %v1622 = vsel %vm1621, %v801, %v1620
    %vm1623 = vcmp.eq.f32.partialorder %v801, 0.0
    %v1624 = vand.u32 %v801, 2147483648
    %v1625 = vsel %vm1623, %v1624, %v1622
    %v1626 = vrsqrt.pop %v804
    %v1627 = vmul.f32 %v804, %v1626
    %vm1628 = vcmp.eq.f32.partialorder %v804, inf
    %v1629 = vsel %vm1628, %v804, %v1627
    %vm1630 = vcmp.eq.f32.partialorder %v804, 0.0
    %v1631 = vand.u32 %v804, 2147483648
    %v1632 = vsel %vm1630, %v1631, %v1629
    %v1633 = vrsqrt.pop %v807
    %v1634 = vmul.f32 %v807, %v1633
    %vm1635 = vcmp.eq.f32.partialorder %v807, inf
    %v1636 = vsel %vm1635, %v807, %v1634
    %vm1637 = vcmp.eq.f32.partialorder %v807, 0.0
    %v1638 = vand.u32 %v807, 2147483648
    %v1639 = vsel %vm1637, %v1638, %v1636
    %v1640 = vrsqrt.pop %v810
    %v1641 = vmul.f32 %v810, %v1640
    %vm1642 = vcmp.eq.f32.partialorder %v810, inf
    %v1643 = vsel %vm1642, %v810, %v1641
    %vm1644 = vcmp.eq.f32.partialorder %v810, 0.0
    %v1645 = vand.u32 %v810, 2147483648
    %v1646 = vsel %vm1644, %v1645, %v1643
    %v1647 = vrsqrt.pop %v813
    %v1648 = vmul.f32 %v813, %v1647
    %vm1649 = vcmp.eq.f32.partialorder %v813, inf
    %v1650 = vsel %vm1649, %v813, %v1648
    %vm1651 = vcmp.eq.f32.partialorder %v813, 0.0
    %v1652 = vand.u32 %v813, 2147483648
    %v1653 = vsel %vm1651, %v1652, %v1650
    %v1654 = vrsqrt.pop %v816
    %v1655 = vmul.f32 %v816, %v1654
    %vm1656 = vcmp.eq.f32.partialorder %v816, inf
    %v1657 = vsel %vm1656, %v816, %v1655
    %vm1658 = vcmp.eq.f32.partialorder %v816, 0.0
    %v1659 = vand.u32 %v816, 2147483648
    %v1660 = vsel %vm1658, %v1659, %v1657
    %v1661 = vrsqrt.pop %v819
    %v1662 = vmul.f32 %v819, %v1661
    %vm1663 = vcmp.eq.f32.partialorder %v819, inf
    %v1664 = vsel %vm1663, %v819, %v1662
    %vm1665 = vcmp.eq.f32.partialorder %v819, 0.0
    %v1666 = vand.u32 %v819, 2147483648
    %v1667 = vsel %vm1665, %v1666, %v1664
    %v1668 = vrsqrt.pop %v822
    %v1669 = vmul.f32 %v822, %v1668
    %vm1670 = vcmp.eq.f32.partialorder %v822, inf
    %v1671 = vsel %vm1670, %v822, %v1669
    %vm1672 = vcmp.eq.f32.partialorder %v822, 0.0
    %v1673 = vand.u32 %v822, 2147483648
    %v1674 = vsel %vm1672, %v1673, %v1671
    %v1675 = vrsqrt.pop %v825
    %v1676 = vmul.f32 %v825, %v1675
    %vm1677 = vcmp.eq.f32.partialorder %v825, inf
    %v1678 = vsel %vm1677, %v825, %v1676
    %vm1679 = vcmp.eq.f32.partialorder %v825, 0.0
    %v1680 = vand.u32 %v825, 2147483648
    %v1681 = vsel %vm1679, %v1680, %v1678
    %v1682 = vrsqrt.pop %v828
    %v1683 = vmul.f32 %v828, %v1682
    %vm1684 = vcmp.eq.f32.partialorder %v828, inf
    %v1685 = vsel %vm1684, %v828, %v1683
    %vm1686 = vcmp.eq.f32.partialorder %v828, 0.0
    %v1687 = vand.u32 %v828, 2147483648
    %v1688 = vsel %vm1686, %v1687, %v1685
    %v1689 = vrsqrt.pop %v831
    %v1690 = vmul.f32 %v831, %v1689
    %vm1691 = vcmp.eq.f32.partialorder %v831, inf
    %v1692 = vsel %vm1691, %v831, %v1690
    %vm1693 = vcmp.eq.f32.partialorder %v831, 0.0
    %v1694 = vand.u32 %v831, 2147483648
    %v1695 = vsel %vm1693, %v1694, %v1692
    %v1696 = vrsqrt.pop %v834
    %v1697 = vmul.f32 %v834, %v1696
    %vm1698 = vcmp.eq.f32.partialorder %v834, inf
    %v1699 = vsel %vm1698, %v834, %v1697
    %vm1700 = vcmp.eq.f32.partialorder %v834, 0.0
    %v1701 = vand.u32 %v834, 2147483648
    %v1702 = vsel %vm1700, %v1701, %v1699
    %v1703 = vrsqrt.pop %v837
    %v1704 = vmul.f32 %v837, %v1703
    %vm1705 = vcmp.eq.f32.partialorder %v837, inf
    %v1706 = vsel %vm1705, %v837, %v1704
    %vm1707 = vcmp.eq.f32.partialorder %v837, 0.0
    %v1708 = vand.u32 %v837, 2147483648
    %v1709 = vsel %vm1707, %v1708, %v1706
    %v1710 = vrsqrt.pop %v840
    %v1711 = vmul.f32 %v840, %v1710
    %vm1712 = vcmp.eq.f32.partialorder %v840, inf
    %v1713 = vsel %vm1712, %v840, %v1711
    %vm1714 = vcmp.eq.f32.partialorder %v840, 0.0
    %v1715 = vand.u32 %v840, 2147483648
    %v1716 = vsel %vm1714, %v1715, %v1713
    %v1717 = vrsqrt.pop %v843
    %v1718 = vmul.f32 %v843, %v1717
    %vm1719 = vcmp.eq.f32.partialorder %v843, inf
    %v1720 = vsel %vm1719, %v843, %v1718
    %vm1721 = vcmp.eq.f32.partialorder %v843, 0.0
    %v1722 = vand.u32 %v843, 2147483648
    %v1723 = vsel %vm1721, %v1722, %v1720
    %v1724 = vrsqrt.pop %v846
    %v1725 = vmul.f32 %v846, %v1724
    %vm1726 = vcmp.eq.f32.partialorder %v846, inf
    %v1727 = vsel %vm1726, %v846, %v1725
    %vm1728 = vcmp.eq.f32.partialorder %v846, 0.0
    %v1729 = vand.u32 %v846, 2147483648
    %v1730 = vsel %vm1728, %v1729, %v1727
    %v1731 = vrsqrt.pop %v849
    %v1732 = vmul.f32 %v849, %v1731
    %vm1733 = vcmp.eq.f32.partialorder %v849, inf
    %v1734 = vsel %vm1733, %v849, %v1732
    %vm1735 = vcmp.eq.f32.partialorder %v849, 0.0
    %v1736 = vand.u32 %v849, 2147483648
    %v1737 = vsel %vm1735, %v1736, %v1734
    %v1738 = vrsqrt.pop %v852
    %v1739 = vmul.f32 %v852, %v1738
    %vm1740 = vcmp.eq.f32.partialorder %v852, inf
    %v1741 = vsel %vm1740, %v852, %v1739
    %vm1742 = vcmp.eq.f32.partialorder %v852, 0.0
    %v1743 = vand.u32 %v852, 2147483648
    %v1744 = vsel %vm1742, %v1743, %v1741
    %v1745 = vrsqrt.pop %v855
    %v1746 = vmul.f32 %v855, %v1745
    %vm1747 = vcmp.eq.f32.partialorder %v855, inf
    %v1748 = vsel %vm1747, %v855, %v1746
    %vm1749 = vcmp.eq.f32.partialorder %v855, 0.0
    %v1750 = vand.u32 %v855, 2147483648
    %v1751 = vsel %vm1749, %v1750, %v1748
    %v1752 = vrsqrt.pop %v858
    %v1753 = vmul.f32 %v858, %v1752
    %vm1754 = vcmp.eq.f32.partialorder %v858, inf
    %v1755 = vsel %vm1754, %v858, %v1753
    %vm1756 = vcmp.eq.f32.partialorder %v858, 0.0
    %v1757 = vand.u32 %v858, 2147483648
    %v1758 = vsel %vm1756, %v1757, %v1755
    %v1759 = vrsqrt.pop %v861
    %v1760 = vmul.f32 %v861, %v1759
    %vm1761 = vcmp.eq.f32.partialorder %v861, inf
    %v1762 = vsel %vm1761, %v861, %v1760
    %vm1763 = vcmp.eq.f32.partialorder %v861, 0.0
    %v1764 = vand.u32 %v861, 2147483648
    %v1765 = vsel %vm1763, %v1764, %v1762
    %v1766 = vrsqrt.pop %v864
    %v1767 = vmul.f32 %v864, %v1766
    %vm1768 = vcmp.eq.f32.partialorder %v864, inf
    %v1769 = vsel %vm1768, %v864, %v1767
    %vm1770 = vcmp.eq.f32.partialorder %v864, 0.0
    %v1771 = vand.u32 %v864, 2147483648
    %v1772 = vsel %vm1770, %v1771, %v1769
    %v1773 = vrsqrt.pop %v867
    %v1774 = vmul.f32 %v867, %v1773
    %vm1775 = vcmp.eq.f32.partialorder %v867, inf
    %v1776 = vsel %vm1775, %v867, %v1774
    %vm1777 = vcmp.eq.f32.partialorder %v867, 0.0
    %v1778 = vand.u32 %v867, 2147483648
    %v1779 = vsel %vm1777, %v1778, %v1776
    %v1780 = vrsqrt.pop %v870
    %v1781 = vmul.f32 %v870, %v1780
    %vm1782 = vcmp.eq.f32.partialorder %v870, inf
    %v1783 = vsel %vm1782, %v870, %v1781
    %vm1784 = vcmp.eq.f32.partialorder %v870, 0.0
    %v1785 = vand.u32 %v870, 2147483648
    %v1786 = vsel %vm1784, %v1785, %v1783
    %v1787 = vrsqrt.pop %v873
    %v1788 = vmul.f32 %v873, %v1787
    %vm1789 = vcmp.eq.f32.partialorder %v873, inf
    %v1790 = vsel %vm1789, %v873, %v1788
    %vm1791 = vcmp.eq.f32.partialorder %v873, 0.0
    %v1792 = vand.u32 %v873, 2147483648
    %v1793 = vsel %vm1791, %v1792, %v1790
    %v1794 = vrsqrt.pop %v876
    %v1795 = vmul.f32 %v876, %v1794
    %vm1796 = vcmp.eq.f32.partialorder %v876, inf
    %v1797 = vsel %vm1796, %v876, %v1795
    %vm1798 = vcmp.eq.f32.partialorder %v876, 0.0
    %v1799 = vand.u32 %v876, 2147483648
    %v1800 = vsel %vm1798, %v1799, %v1797
    %v1801 = vrsqrt.pop %v879
    %v1802 = vmul.f32 %v879, %v1801
    %vm1803 = vcmp.eq.f32.partialorder %v879, inf
    %v1804 = vsel %vm1803, %v879, %v1802
    %vm1805 = vcmp.eq.f32.partialorder %v879, 0.0
    %v1806 = vand.u32 %v879, 2147483648
    %v1807 = vsel %vm1805, %v1806, %v1804
    %v1808 = vrsqrt.pop %v882
    %v1809 = vmul.f32 %v882, %v1808
    %vm1810 = vcmp.eq.f32.partialorder %v882, inf
    %v1811 = vsel %vm1810, %v882, %v1809
    %vm1812 = vcmp.eq.f32.partialorder %v882, 0.0
    %v1813 = vand.u32 %v882, 2147483648
    %v1814 = vsel %vm1812, %v1813, %v1811
    %v1815 = vrsqrt.pop %v885
    %v1816 = vmul.f32 %v885, %v1815
    %vm1817 = vcmp.eq.f32.partialorder %v885, inf
    %v1818 = vsel %vm1817, %v885, %v1816
    %vm1819 = vcmp.eq.f32.partialorder %v885, 0.0
    %v1820 = vand.u32 %v885, 2147483648
    %v1821 = vsel %vm1819, %v1820, %v1818
    %v1822 = vrsqrt.pop %v888
    %v1823 = vmul.f32 %v888, %v1822
    %vm1824 = vcmp.eq.f32.partialorder %v888, inf
    %v1825 = vsel %vm1824, %v888, %v1823
    %vm1826 = vcmp.eq.f32.partialorder %v888, 0.0
    %v1827 = vand.u32 %v888, 2147483648
    %v1828 = vsel %vm1826, %v1827, %v1825
    %v1829 = vrsqrt.pop %v891
    %v1830 = vmul.f32 %v891, %v1829
    %vm1831 = vcmp.eq.f32.partialorder %v891, inf
    %v1832 = vsel %vm1831, %v891, %v1830
    %vm1833 = vcmp.eq.f32.partialorder %v891, 0.0
    %v1834 = vand.u32 %v891, 2147483648
    %v1835 = vsel %vm1833, %v1834, %v1832
    %v1836 = vrsqrt.pop %v894
    %v1837 = vmul.f32 %v894, %v1836
    %vm1838 = vcmp.eq.f32.partialorder %v894, inf
    %v1839 = vsel %vm1838, %v894, %v1837
    %vm1840 = vcmp.eq.f32.partialorder %v894, 0.0
    %v1841 = vand.u32 %v894, 2147483648
    %v1842 = vsel %vm1840, %v1841, %v1839
    %v1843 = vrsqrt.pop %v897
    %v1844 = vmul.f32 %v897, %v1843
    %vm1845 = vcmp.eq.f32.partialorder %v897, inf
    %v1846 = vsel %vm1845, %v897, %v1844
    %vm1847 = vcmp.eq.f32.partialorder %v897, 0.0
    %v1848 = vand.u32 %v897, 2147483648
    %v1849 = vsel %vm1847, %v1848, %v1846
    %v1850 = vrsqrt.pop %v900
    %v1851 = vmul.f32 %v900, %v1850
    %vm1852 = vcmp.eq.f32.partialorder %v900, inf
    %v1853 = vsel %vm1852, %v900, %v1851
    %vm1854 = vcmp.eq.f32.partialorder %v900, 0.0
    %v1855 = vand.u32 %v900, 2147483648
    %v1856 = vsel %vm1854, %v1855, %v1853
    %v1857 = vrsqrt.pop %v903
    %v1858 = vmul.f32 %v903, %v1857
    %vm1859 = vcmp.eq.f32.partialorder %v903, inf
    %v1860 = vsel %vm1859, %v903, %v1858
    %vm1861 = vcmp.eq.f32.partialorder %v903, 0.0
    %v1862 = vand.u32 %v903, 2147483648
    %v1863 = vsel %vm1861, %v1862, %v1860
    %v1864 = vrsqrt.pop %v906
    %v1865 = vmul.f32 %v906, %v1864
    %vm1866 = vcmp.eq.f32.partialorder %v906, inf
    %v1867 = vsel %vm1866, %v906, %v1865
    %vm1868 = vcmp.eq.f32.partialorder %v906, 0.0
    %v1869 = vand.u32 %v906, 2147483648
    %v1870 = vsel %vm1868, %v1869, %v1867
    %v1871 = vrsqrt.pop %v909
    %v1872 = vmul.f32 %v909, %v1871
    %vm1873 = vcmp.eq.f32.partialorder %v909, inf
    %v1874 = vsel %vm1873, %v909, %v1872
    %vm1875 = vcmp.eq.f32.partialorder %v909, 0.0
    %v1876 = vand.u32 %v909, 2147483648
    %v1877 = vsel %vm1875, %v1876, %v1874
    %v1878 = vrsqrt.pop %v912
    %v1879 = vmul.f32 %v912, %v1878
    %vm1880 = vcmp.eq.f32.partialorder %v912, inf
    %v1881 = vsel %vm1880, %v912, %v1879
    %vm1882 = vcmp.eq.f32.partialorder %v912, 0.0
    %v1883 = vand.u32 %v912, 2147483648
    %v1884 = vsel %vm1882, %v1883, %v1881
    %v1885 = vrsqrt.pop %v915
    %v1886 = vmul.f32 %v915, %v1885
    %vm1887 = vcmp.eq.f32.partialorder %v915, inf
    %v1888 = vsel %vm1887, %v915, %v1886
    %vm1889 = vcmp.eq.f32.partialorder %v915, 0.0
    %v1890 = vand.u32 %v915, 2147483648
    %v1891 = vsel %vm1889, %v1890, %v1888
    %v1892 = vrsqrt.pop %v918
    %v1893 = vmul.f32 %v918, %v1892
    %vm1894 = vcmp.eq.f32.partialorder %v918, inf
    %v1895 = vsel %vm1894, %v918, %v1893
    %vm1896 = vcmp.eq.f32.partialorder %v918, 0.0
    %v1897 = vand.u32 %v918, 2147483648
    %v1898 = vsel %vm1896, %v1897, %v1895
    %v1899 = vrsqrt.pop %v921
    %v1900 = vmul.f32 %v921, %v1899
    %vm1901 = vcmp.eq.f32.partialorder %v921, inf
    %v1902 = vsel %vm1901, %v921, %v1900
    %vm1903 = vcmp.eq.f32.partialorder %v921, 0.0
    %v1904 = vand.u32 %v921, 2147483648
    %v1905 = vsel %vm1903, %v1904, %v1902
    %v1906 = vrsqrt.pop %v924
    %v1907 = vmul.f32 %v924, %v1906
    %vm1908 = vcmp.eq.f32.partialorder %v924, inf
    %v1909 = vsel %vm1908, %v924, %v1907
    %vm1910 = vcmp.eq.f32.partialorder %v924, 0.0
    %v1911 = vand.u32 %v924, 2147483648
    %v1912 = vsel %vm1910, %v1911, %v1909
    %v1913 = vrsqrt.pop %v927
    %v1914 = vmul.f32 %v927, %v1913
    %vm1915 = vcmp.eq.f32.partialorder %v927, inf
    %v1916 = vsel %vm1915, %v927, %v1914
    %vm1917 = vcmp.eq.f32.partialorder %v927, 0.0
    %v1918 = vand.u32 %v927, 2147483648
    %v1919 = vsel %vm1917, %v1918, %v1916
    %v1920 = vrsqrt.pop %v930
    %v1921 = vmul.f32 %v930, %v1920
    %vm1922 = vcmp.eq.f32.partialorder %v930, inf
    %v1923 = vsel %vm1922, %v930, %v1921
    %vm1924 = vcmp.eq.f32.partialorder %v930, 0.0
    %v1925 = vand.u32 %v930, 2147483648
    %v1926 = vsel %vm1924, %v1925, %v1923
    %v1927 = vrsqrt.pop %v933
    %v1928 = vmul.f32 %v933, %v1927
    %vm1929 = vcmp.eq.f32.partialorder %v933, inf
    %v1930 = vsel %vm1929, %v933, %v1928
    %vm1931 = vcmp.eq.f32.partialorder %v933, 0.0
    %v1932 = vand.u32 %v933, 2147483648
    %v1933 = vsel %vm1931, %v1932, %v1930
    %v1934 = vrsqrt.pop %v936
    %v1935 = vmul.f32 %v936, %v1934
    %vm1936 = vcmp.eq.f32.partialorder %v936, inf
    %v1937 = vsel %vm1936, %v936, %v1935
    %vm1938 = vcmp.eq.f32.partialorder %v936, 0.0
    %v1939 = vand.u32 %v936, 2147483648
    %v1940 = vsel %vm1938, %v1939, %v1937
    %v1941 = vrsqrt.pop %v939
    %v1942 = vmul.f32 %v939, %v1941
    %vm1943 = vcmp.eq.f32.partialorder %v939, inf
    %v1944 = vsel %vm1943, %v939, %v1942
    %vm1945 = vcmp.eq.f32.partialorder %v939, 0.0
    %v1946 = vand.u32 %v939, 2147483648
    %v1947 = vsel %vm1945, %v1946, %v1944
    %v1948 = vrsqrt.pop %v942
    %v1949 = vmul.f32 %v942, %v1948
    %vm1950 = vcmp.eq.f32.partialorder %v942, inf
    %v1951 = vsel %vm1950, %v942, %v1949
    %vm1952 = vcmp.eq.f32.partialorder %v942, 0.0
    %v1953 = vand.u32 %v942, 2147483648
    %v1954 = vsel %vm1952, %v1953, %v1951
    %v1955 = vrsqrt.pop %v945
    %v1956 = vmul.f32 %v945, %v1955
    %vm1957 = vcmp.eq.f32.partialorder %v945, inf
    %v1958 = vsel %vm1957, %v945, %v1956
    %vm1959 = vcmp.eq.f32.partialorder %v945, 0.0
    %v1960 = vand.u32 %v945, 2147483648
    %v1961 = vsel %vm1959, %v1960, %v1958
    %v1962 = vrsqrt.pop %v948
    %v1963 = vmul.f32 %v948, %v1962
    %vm1964 = vcmp.eq.f32.partialorder %v948, inf
    %v1965 = vsel %vm1964, %v948, %v1963
    %vm1966 = vcmp.eq.f32.partialorder %v948, 0.0
    %v1967 = vand.u32 %v948, 2147483648
    %v1968 = vsel %vm1966, %v1967, %v1965
    %v1969 = vrsqrt.pop %v951
    %v1970 = vmul.f32 %v951, %v1969
    %vm1971 = vcmp.eq.f32.partialorder %v951, inf
    %v1972 = vsel %vm1971, %v951, %v1970
    %vm1973 = vcmp.eq.f32.partialorder %v951, 0.0
    %v1974 = vand.u32 %v951, 2147483648
    %v1975 = vsel %vm1973, %v1974, %v1972
    %v1976 = vrsqrt.pop %v954
    %v1977 = vmul.f32 %v954, %v1976
    %vm1978 = vcmp.eq.f32.partialorder %v954, inf
    %v1979 = vsel %vm1978, %v954, %v1977
    %vm1980 = vcmp.eq.f32.partialorder %v954, 0.0
    %v1981 = vand.u32 %v954, 2147483648
    %v1982 = vsel %vm1980, %v1981, %v1979
    %v1983 = vrsqrt.pop %v957
    %v1984 = vmul.f32 %v957, %v1983
    %vm1985 = vcmp.eq.f32.partialorder %v957, inf
    %v1986 = vsel %vm1985, %v957, %v1984
    %vm1987 = vcmp.eq.f32.partialorder %v957, 0.0
    %v1988 = vand.u32 %v957, 2147483648
    %v1989 = vsel %vm1987, %v1988, %v1986
    %v1990 = vrsqrt.pop %v960
    %v1991 = vmul.f32 %v960, %v1990
    %vm1992 = vcmp.eq.f32.partialorder %v960, inf
    %v1993 = vsel %vm1992, %v960, %v1991
    %vm1994 = vcmp.eq.f32.partialorder %v960, 0.0
    %v1995 = vand.u32 %v960, 2147483648
    %v1996 = vsel %vm1994, %v1995, %v1993
    %v1997 = vrsqrt.pop %v963
    %v1998 = vmul.f32 %v963, %v1997
    %vm1999 = vcmp.eq.f32.partialorder %v963, inf
    %v2000 = vsel %vm1999, %v963, %v1998
    %vm2001 = vcmp.eq.f32.partialorder %v963, 0.0
    %v2002 = vand.u32 %v963, 2147483648
    %v2003 = vsel %vm2001, %v2002, %v2000
    %v2004 = vrsqrt.pop %v966
    %v2005 = vmul.f32 %v966, %v2004
    %vm2006 = vcmp.eq.f32.partialorder %v966, inf
    %v2007 = vsel %vm2006, %v966, %v2005
    %vm2008 = vcmp.eq.f32.partialorder %v966, 0.0
    %v2009 = vand.u32 %v966, 2147483648
    %v2010 = vsel %vm2008, %v2009, %v2007
    %v2011 = vrsqrt.pop %v969
    %v2012 = vmul.f32 %v969, %v2011
    %vm2013 = vcmp.eq.f32.partialorder %v969, inf
    %v2014 = vsel %vm2013, %v969, %v2012
    %vm2015 = vcmp.eq.f32.partialorder %v969, 0.0
    %v2016 = vand.u32 %v969, 2147483648
    %v2017 = vsel %vm2015, %v2016, %v2014
    %v2018 = vrsqrt.pop %v972
    %v2019 = vmul.f32 %v972, %v2018
    %vm2020 = vcmp.eq.f32.partialorder %v972, inf
    %v2021 = vsel %vm2020, %v972, %v2019
    %vm2022 = vcmp.eq.f32.partialorder %v972, 0.0
    %v2023 = vand.u32 %v972, 2147483648
    %v2024 = vsel %vm2022, %v2023, %v2021
    %v2025 = vrsqrt.pop %v975
    %v2026 = vmul.f32 %v975, %v2025
    %vm2027 = vcmp.eq.f32.partialorder %v975, inf
    %v2028 = vsel %vm2027, %v975, %v2026
    %vm2029 = vcmp.eq.f32.partialorder %v975, 0.0
    %v2030 = vand.u32 %v975, 2147483648
    %v2031 = vsel %vm2029, %v2030, %v2028
    %v2032 = vrsqrt.pop %v978
    %v2033 = vmul.f32 %v978, %v2032
    %vm2034 = vcmp.eq.f32.partialorder %v978, inf
    %v2035 = vsel %vm2034, %v978, %v2033
    %vm2036 = vcmp.eq.f32.partialorder %v978, 0.0
    %v2037 = vand.u32 %v978, 2147483648
    %v2038 = vsel %vm2036, %v2037, %v2035
    %v2039 = vrsqrt.pop %v981
    %v2040 = vmul.f32 %v981, %v2039
    %vm2041 = vcmp.eq.f32.partialorder %v981, inf
    %v2042 = vsel %vm2041, %v981, %v2040
    %vm2043 = vcmp.eq.f32.partialorder %v981, 0.0
    %v2044 = vand.u32 %v981, 2147483648
    %v2045 = vsel %vm2043, %v2044, %v2042
    %v2046 = vrsqrt.pop %v984
    %v2047 = vmul.f32 %v984, %v2046
    %vm2048 = vcmp.eq.f32.partialorder %v984, inf
    %v2049 = vsel %vm2048, %v984, %v2047
    %vm2050 = vcmp.eq.f32.partialorder %v984, 0.0
    %v2051 = vand.u32 %v984, 2147483648
    %v2052 = vsel %vm2050, %v2051, %v2049
    %v2053 = vrsqrt.pop %v987
    %v2054 = vmul.f32 %v987, %v2053
    %vm2055 = vcmp.eq.f32.partialorder %v987, inf
    %v2056 = vsel %vm2055, %v987, %v2054
    %vm2057 = vcmp.eq.f32.partialorder %v987, 0.0
    %v2058 = vand.u32 %v987, 2147483648
    %v2059 = vsel %vm2057, %v2058, %v2056
    %v2060 = vrsqrt.pop %v990
    %v2061 = vmul.f32 %v990, %v2060
    %vm2062 = vcmp.eq.f32.partialorder %v990, inf
    %v2063 = vsel %vm2062, %v990, %v2061
    %vm2064 = vcmp.eq.f32.partialorder %v990, 0.0
    %v2065 = vand.u32 %v990, 2147483648
    %v2066 = vsel %vm2064, %v2065, %v2063
    %v2067 = vrsqrt.pop %v993
    %v2068 = vmul.f32 %v993, %v2067
    %vm2069 = vcmp.eq.f32.partialorder %v993, inf
    %v2070 = vsel %vm2069, %v993, %v2068
    %vm2071 = vcmp.eq.f32.partialorder %v993, 0.0
    %v2072 = vand.u32 %v993, 2147483648
    %v2073 = vsel %vm2071, %v2072, %v2070
    %v2074 = vrsqrt.pop %v996
    %v2075 = vmul.f32 %v996, %v2074
    %vm2076 = vcmp.eq.f32.partialorder %v996, inf
    %v2077 = vsel %vm2076, %v996, %v2075
    %vm2078 = vcmp.eq.f32.partialorder %v996, 0.0
    %v2079 = vand.u32 %v996, 2147483648
    %v2080 = vsel %vm2078, %v2079, %v2077
    %v2081 = vrsqrt.pop %v999
    %v2082 = vmul.f32 %v999, %v2081
    %vm2083 = vcmp.eq.f32.partialorder %v999, inf
    %v2084 = vsel %vm2083, %v999, %v2082
    %vm2085 = vcmp.eq.f32.partialorder %v999, 0.0
    %v2086 = vand.u32 %v999, 2147483648
    %v2087 = vsel %vm2085, %v2086, %v2084
    %v2088 = vrsqrt.pop %v1002
    %v2089 = vmul.f32 %v1002, %v2088
    %vm2090 = vcmp.eq.f32.partialorder %v1002, inf
    %v2091 = vsel %vm2090, %v1002, %v2089
    %vm2092 = vcmp.eq.f32.partialorder %v1002, 0.0
    %v2093 = vand.u32 %v1002, 2147483648
    %v2094 = vsel %vm2092, %v2093, %v2091
    %v2095 = vrsqrt.pop %v1005
    %v2096 = vmul.f32 %v1005, %v2095
    %vm2097 = vcmp.eq.f32.partialorder %v1005, inf
    %v2098 = vsel %vm2097, %v1005, %v2096
    %vm2099 = vcmp.eq.f32.partialorder %v1005, 0.0
    %v2100 = vand.u32 %v1005, 2147483648
    %v2101 = vsel %vm2099, %v2100, %v2098
    %v2102 = vrsqrt.pop %v1008
    %v2103 = vmul.f32 %v1008, %v2102
    %vm2104 = vcmp.eq.f32.partialorder %v1008, inf
    %v2105 = vsel %vm2104, %v1008, %v2103
    %vm2106 = vcmp.eq.f32.partialorder %v1008, 0.0
    %v2107 = vand.u32 %v1008, 2147483648
    %v2108 = vsel %vm2106, %v2107, %v2105
    %v2109 = vrsqrt.pop %v1011
    %v2110 = vmul.f32 %v1011, %v2109
    %vm2111 = vcmp.eq.f32.partialorder %v1011, inf
    %v2112 = vsel %vm2111, %v1011, %v2110
    %vm2113 = vcmp.eq.f32.partialorder %v1011, 0.0
    %v2114 = vand.u32 %v1011, 2147483648
    %v2115 = vsel %vm2113, %v2114, %v2112
    %v2116 = vrsqrt.pop %v1014
    %v2117 = vmul.f32 %v1014, %v2116
    %vm2118 = vcmp.eq.f32.partialorder %v1014, inf
    %v2119 = vsel %vm2118, %v1014, %v2117
    %vm2120 = vcmp.eq.f32.partialorder %v1014, 0.0
    %v2121 = vand.u32 %v1014, 2147483648
    %v2122 = vsel %vm2120, %v2121, %v2119
    %v2123 = vrsqrt.pop %v1017
    %v2124 = vmul.f32 %v1017, %v2123
    %vm2125 = vcmp.eq.f32.partialorder %v1017, inf
    %v2126 = vsel %vm2125, %v1017, %v2124
    %vm2127 = vcmp.eq.f32.partialorder %v1017, 0.0
    %v2128 = vand.u32 %v1017, 2147483648
    %v2129 = vsel %vm2127, %v2128, %v2126
    %v2130 = vrsqrt.pop %v1020
    %v2131 = vmul.f32 %v1020, %v2130
    %vm2132 = vcmp.eq.f32.partialorder %v1020, inf
    %v2133 = vsel %vm2132, %v1020, %v2131
    %vm2134 = vcmp.eq.f32.partialorder %v1020, 0.0
    %v2135 = vand.u32 %v1020, 2147483648
    %v2136 = vsel %vm2134, %v2135, %v2133
    %v2137 = vrsqrt.pop %v1023
    %v2138 = vmul.f32 %v1023, %v2137
    %vm2139 = vcmp.eq.f32.partialorder %v1023, inf
    %v2140 = vsel %vm2139, %v1023, %v2138
    %vm2141 = vcmp.eq.f32.partialorder %v1023, 0.0
    %v2142 = vand.u32 %v1023, 2147483648
    %v2143 = vsel %vm2141, %v2142, %v2140
    %v2144 = vrsqrt.pop %v1026
    %v2145 = vmul.f32 %v1026, %v2144
    %vm2146 = vcmp.eq.f32.partialorder %v1026, inf
    %v2147 = vsel %vm2146, %v1026, %v2145
    %vm2148 = vcmp.eq.f32.partialorder %v1026, 0.0
    %v2149 = vand.u32 %v1026, 2147483648
    %v2150 = vsel %vm2148, %v2149, %v2147
    %v2151 = vrsqrt.pop %v1029
    %v2152 = vmul.f32 %v1029, %v2151
    %vm2153 = vcmp.eq.f32.partialorder %v1029, inf
    %v2154 = vsel %vm2153, %v1029, %v2152
    %vm2155 = vcmp.eq.f32.partialorder %v1029, 0.0
    %v2156 = vand.u32 %v1029, 2147483648
    %v2157 = vsel %vm2155, %v2156, %v2154
    %v2158 = vrsqrt.pop %v1032
    %v2159 = vmul.f32 %v1032, %v2158
    %vm2160 = vcmp.eq.f32.partialorder %v1032, inf
    %v2161 = vsel %vm2160, %v1032, %v2159
    %vm2162 = vcmp.eq.f32.partialorder %v1032, 0.0
    %v2163 = vand.u32 %v1032, 2147483648
    %v2164 = vsel %vm2162, %v2163, %v2161
    %v2165 = vrsqrt.pop %v1035
    %v2166 = vmul.f32 %v1035, %v2165
    %vm2167 = vcmp.eq.f32.partialorder %v1035, inf
    %v2168 = vsel %vm2167, %v1035, %v2166
    %vm2169 = vcmp.eq.f32.partialorder %v1035, 0.0
    %v2170 = vand.u32 %v1035, 2147483648
    %v2171 = vsel %vm2169, %v2170, %v2168
    %v2172 = vrsqrt.pop %v1038
    %v2173 = vmul.f32 %v1038, %v2172
    %vm2174 = vcmp.eq.f32.partialorder %v1038, inf
    %v2175 = vsel %vm2174, %v1038, %v2173
    %vm2176 = vcmp.eq.f32.partialorder %v1038, 0.0
    %v2177 = vand.u32 %v1038, 2147483648
    %v2178 = vsel %vm2176, %v2177, %v2175
    %v2179 = vrsqrt.pop %v1041
    %v2180 = vmul.f32 %v1041, %v2179
    %vm2181 = vcmp.eq.f32.partialorder %v1041, inf
    %v2182 = vsel %vm2181, %v1041, %v2180
    %vm2183 = vcmp.eq.f32.partialorder %v1041, 0.0
    %v2184 = vand.u32 %v1041, 2147483648
    %v2185 = vsel %vm2183, %v2184, %v2182
    %v2186 = vrsqrt.pop %v1044
    %v2187 = vmul.f32 %v1044, %v2186
    %vm2188 = vcmp.eq.f32.partialorder %v1044, inf
    %v2189 = vsel %vm2188, %v1044, %v2187
    %vm2190 = vcmp.eq.f32.partialorder %v1044, 0.0
    %v2191 = vand.u32 %v1044, 2147483648
    %v2192 = vsel %vm2190, %v2191, %v2189
    %v2193 = vrsqrt.pop %v1047
    %v2194 = vmul.f32 %v1047, %v2193
    %vm2195 = vcmp.eq.f32.partialorder %v1047, inf
    %v2196 = vsel %vm2195, %v1047, %v2194
    %vm2197 = vcmp.eq.f32.partialorder %v1047, 0.0
    %v2198 = vand.u32 %v1047, 2147483648
    %v2199 = vsel %vm2197, %v2198, %v2196
    %v2200 = vrsqrt.pop %v1050
    %v2201 = vmul.f32 %v1050, %v2200
    %vm2202 = vcmp.eq.f32.partialorder %v1050, inf
    %v2203 = vsel %vm2202, %v1050, %v2201
    %vm2204 = vcmp.eq.f32.partialorder %v1050, 0.0
    %v2205 = vand.u32 %v1050, 2147483648
    %v2206 = vsel %vm2204, %v2205, %v2203
    %v2207 = vrsqrt.pop %v1053
    %v2208 = vmul.f32 %v1053, %v2207
    %vm2209 = vcmp.eq.f32.partialorder %v1053, inf
    %v2210 = vsel %vm2209, %v1053, %v2208
    %vm2211 = vcmp.eq.f32.partialorder %v1053, 0.0
    %v2212 = vand.u32 %v1053, 2147483648
    %v2213 = vsel %vm2211, %v2212, %v2210
    %v2214 = vrsqrt.pop %v1056
    %v2215 = vmul.f32 %v1056, %v2214
    %vm2216 = vcmp.eq.f32.partialorder %v1056, inf
    %v2217 = vsel %vm2216, %v1056, %v2215
    %vm2218 = vcmp.eq.f32.partialorder %v1056, 0.0
    %v2219 = vand.u32 %v1056, 2147483648
    %v2220 = vsel %vm2218, %v2219, %v2217
    %v2221 = vrsqrt.pop %v1059
    %v2222 = vmul.f32 %v1059, %v2221
    %vm2223 = vcmp.eq.f32.partialorder %v1059, inf
    %v2224 = vsel %vm2223, %v1059, %v2222
    %vm2225 = vcmp.eq.f32.partialorder %v1059, 0.0
    %v2226 = vand.u32 %v1059, 2147483648
    %v2227 = vsel %vm2225, %v2226, %v2224
    %v2228 = vrsqrt.pop %v1062
    %v2229 = vmul.f32 %v1062, %v2228
    %vm2230 = vcmp.eq.f32.partialorder %v1062, inf
    %v2231 = vsel %vm2230, %v1062, %v2229
    %vm2232 = vcmp.eq.f32.partialorder %v1062, 0.0
    %v2233 = vand.u32 %v1062, 2147483648
    %v2234 = vsel %vm2232, %v2233, %v2231
    %v2235 = vrsqrt.pop %v1065
    %v2236 = vmul.f32 %v1065, %v2235
    %vm2237 = vcmp.eq.f32.partialorder %v1065, inf
    %v2238 = vsel %vm2237, %v1065, %v2236
    %vm2239 = vcmp.eq.f32.partialorder %v1065, 0.0
    %v2240 = vand.u32 %v1065, 2147483648
    %v2241 = vsel %vm2239, %v2240, %v2238
    %v2242 = vrsqrt.pop %v1068
    %v2243 = vmul.f32 %v1068, %v2242
    %vm2244 = vcmp.eq.f32.partialorder %v1068, inf
    %v2245 = vsel %vm2244, %v1068, %v2243
    %vm2246 = vcmp.eq.f32.partialorder %v1068, 0.0
    %v2247 = vand.u32 %v1068, 2147483648
    %v2248 = vsel %vm2246, %v2247, %v2245
    %v2249 = vrsqrt.pop %v1071
    %v2250 = vmul.f32 %v1071, %v2249
    %vm2251 = vcmp.eq.f32.partialorder %v1071, inf
    %v2252 = vsel %vm2251, %v1071, %v2250
    %vm2253 = vcmp.eq.f32.partialorder %v1071, 0.0
    %v2254 = vand.u32 %v1071, 2147483648
    %v2255 = vsel %vm2253, %v2254, %v2252
    %v2256 = vrsqrt.pop %v1074
    %v2257 = vmul.f32 %v1074, %v2256
    %vm2258 = vcmp.eq.f32.partialorder %v1074, inf
    %v2259 = vsel %vm2258, %v1074, %v2257
    %vm2260 = vcmp.eq.f32.partialorder %v1074, 0.0
    %v2261 = vand.u32 %v1074, 2147483648
    %v2262 = vsel %vm2260, %v2261, %v2259
    %v2263 = vrsqrt.pop %v1077
    %v2264 = vmul.f32 %v1077, %v2263
    %vm2265 = vcmp.eq.f32.partialorder %v1077, inf
    %v2266 = vsel %vm2265, %v1077, %v2264
    %vm2267 = vcmp.eq.f32.partialorder %v1077, 0.0
    %v2268 = vand.u32 %v1077, 2147483648
    %v2269 = vsel %vm2267, %v2268, %v2266
    %v2270 = vrsqrt.pop %v1080
    %v2271 = vmul.f32 %v1080, %v2270
    %vm2272 = vcmp.eq.f32.partialorder %v1080, inf
    %v2273 = vsel %vm2272, %v1080, %v2271
    %vm2274 = vcmp.eq.f32.partialorder %v1080, 0.0
    %v2275 = vand.u32 %v1080, 2147483648
    %v2276 = vsel %vm2274, %v2275, %v2273
    %v2277 = vrsqrt.pop %v1083
    %v2278 = vmul.f32 %v1083, %v2277
    %vm2279 = vcmp.eq.f32.partialorder %v1083, inf
    %v2280 = vsel %vm2279, %v1083, %v2278
    %vm2281 = vcmp.eq.f32.partialorder %v1083, 0.0
    %v2282 = vand.u32 %v1083, 2147483648
    %v2283 = vsel %vm2281, %v2282, %v2280
    %v2284 = vrsqrt.pop %v1086
    %v2285 = vmul.f32 %v1086, %v2284
    %vm2286 = vcmp.eq.f32.partialorder %v1086, inf
    %v2287 = vsel %vm2286, %v1086, %v2285
    %vm2288 = vcmp.eq.f32.partialorder %v1086, 0.0
    %v2289 = vand.u32 %v1086, 2147483648
    %v2290 = vsel %vm2288, %v2289, %v2287
    %v2291 = vrsqrt.pop %v1089
    %v2292 = vmul.f32 %v1089, %v2291
    %vm2293 = vcmp.eq.f32.partialorder %v1089, inf
    %v2294 = vsel %vm2293, %v1089, %v2292
    %vm2295 = vcmp.eq.f32.partialorder %v1089, 0.0
    %v2296 = vand.u32 %v1089, 2147483648
    %v2297 = vsel %vm2295, %v2296, %v2294
    %v2298 = vrsqrt.pop %v1092
    %v2299 = vmul.f32 %v1092, %v2298
    %vm2300 = vcmp.eq.f32.partialorder %v1092, inf
    %v2301 = vsel %vm2300, %v1092, %v2299
    %vm2302 = vcmp.eq.f32.partialorder %v1092, 0.0
    %v2303 = vand.u32 %v1092, 2147483648
    %v2304 = vsel %vm2302, %v2303, %v2301
    %v2305 = vrsqrt.pop %v1095
    %v2306 = vmul.f32 %v1095, %v2305
    %vm2307 = vcmp.eq.f32.partialorder %v1095, inf
    %v2308 = vsel %vm2307, %v1095, %v2306
    %vm2309 = vcmp.eq.f32.partialorder %v1095, 0.0
    %v2310 = vand.u32 %v1095, 2147483648
    %v2311 = vsel %vm2309, %v2310, %v2308
    %v2312 = vrsqrt.pop %v1098
    %v2313 = vmul.f32 %v1098, %v2312
    %vm2314 = vcmp.eq.f32.partialorder %v1098, inf
    %v2315 = vsel %vm2314, %v1098, %v2313
    %vm2316 = vcmp.eq.f32.partialorder %v1098, 0.0
    %v2317 = vand.u32 %v1098, 2147483648
    %v2318 = vsel %vm2316, %v2317, %v2315
    %v2319 = vrsqrt.pop %v1101
    %v2320 = vmul.f32 %v1101, %v2319
    %vm2321 = vcmp.eq.f32.partialorder %v1101, inf
    %v2322 = vsel %vm2321, %v1101, %v2320
    %vm2323 = vcmp.eq.f32.partialorder %v1101, 0.0
    %v2324 = vand.u32 %v1101, 2147483648
    %v2325 = vsel %vm2323, %v2324, %v2322
    %v2326 = vrsqrt.pop %v1104
    %v2327 = vmul.f32 %v1104, %v2326
    %vm2328 = vcmp.eq.f32.partialorder %v1104, inf
    %v2329 = vsel %vm2328, %v1104, %v2327
    %vm2330 = vcmp.eq.f32.partialorder %v1104, 0.0
    %v2331 = vand.u32 %v1104, 2147483648
    %v2332 = vsel %vm2330, %v2331, %v2329
    %v2333 = vrsqrt.pop %v1107
    %v2334 = vmul.f32 %v1107, %v2333
    %vm2335 = vcmp.eq.f32.partialorder %v1107, inf
    %v2336 = vsel %vm2335, %v1107, %v2334
    %vm2337 = vcmp.eq.f32.partialorder %v1107, 0.0
    %v2338 = vand.u32 %v1107, 2147483648
    %v2339 = vsel %vm2337, %v2338, %v2336
    %v2340 = vrsqrt.pop %v1110
    %v2341 = vmul.f32 %v1110, %v2340
    %vm2342 = vcmp.eq.f32.partialorder %v1110, inf
    %v2343 = vsel %vm2342, %v1110, %v2341
    %vm2344 = vcmp.eq.f32.partialorder %v1110, 0.0
    %v2345 = vand.u32 %v1110, 2147483648
    %v2346 = vsel %vm2344, %v2345, %v2343
    %v2347 = vrsqrt.pop %v1113
    %v2348 = vmul.f32 %v1113, %v2347
    %vm2349 = vcmp.eq.f32.partialorder %v1113, inf
    %v2350 = vsel %vm2349, %v1113, %v2348
    %vm2351 = vcmp.eq.f32.partialorder %v1113, 0.0
    %v2352 = vand.u32 %v1113, 2147483648
    %v2353 = vsel %vm2351, %v2352, %v2350
    %v2354 = vrsqrt.pop %v1116
    %v2355 = vmul.f32 %v1116, %v2354
    %vm2356 = vcmp.eq.f32.partialorder %v1116, inf
    %v2357 = vsel %vm2356, %v1116, %v2355
    %vm2358 = vcmp.eq.f32.partialorder %v1116, 0.0
    %v2359 = vand.u32 %v1116, 2147483648
    %v2360 = vsel %vm2358, %v2359, %v2357
    %v2361 = vrsqrt.pop %v1119
    %v2362 = vmul.f32 %v1119, %v2361
    %vm2363 = vcmp.eq.f32.partialorder %v1119, inf
    %v2364 = vsel %vm2363, %v1119, %v2362
    %vm2365 = vcmp.eq.f32.partialorder %v1119, 0.0
    %v2366 = vand.u32 %v1119, 2147483648
    %v2367 = vsel %vm2365, %v2366, %v2364
    %v2368 = vrsqrt.pop %v1122
    %v2369 = vmul.f32 %v1122, %v2368
    %vm2370 = vcmp.eq.f32.partialorder %v1122, inf
    %v2371 = vsel %vm2370, %v1122, %v2369
    %vm2372 = vcmp.eq.f32.partialorder %v1122, 0.0
    %v2373 = vand.u32 %v1122, 2147483648
    %v2374 = vsel %vm2372, %v2373, %v2371
    %v2375 = vrsqrt.pop %v1125
    %v2376 = vmul.f32 %v1125, %v2375
    %vm2377 = vcmp.eq.f32.partialorder %v1125, inf
    %v2378 = vsel %vm2377, %v1125, %v2376
    %vm2379 = vcmp.eq.f32.partialorder %v1125, 0.0
    %v2380 = vand.u32 %v1125, 2147483648
    %v2381 = vsel %vm2379, %v2380, %v2378
    %v2382 = vrsqrt.pop %v1128
    %v2383 = vmul.f32 %v1128, %v2382
    %vm2384 = vcmp.eq.f32.partialorder %v1128, inf
    %v2385 = vsel %vm2384, %v1128, %v2383
    %vm2386 = vcmp.eq.f32.partialorder %v1128, 0.0
    %v2387 = vand.u32 %v1128, 2147483648
    %v2388 = vsel %vm2386, %v2387, %v2385
    %v2389 = vrsqrt.pop %v1131
    %v2390 = vmul.f32 %v1131, %v2389
    %vm2391 = vcmp.eq.f32.partialorder %v1131, inf
    %v2392 = vsel %vm2391, %v1131, %v2390
    %vm2393 = vcmp.eq.f32.partialorder %v1131, 0.0
    %v2394 = vand.u32 %v1131, 2147483648
    %v2395 = vsel %vm2393, %v2394, %v2392
    %v2396 = vrsqrt.pop %v1134
    %v2397 = vmul.f32 %v1134, %v2396
    %vm2398 = vcmp.eq.f32.partialorder %v1134, inf
    %v2399 = vsel %vm2398, %v1134, %v2397
    %vm2400 = vcmp.eq.f32.partialorder %v1134, 0.0
    %v2401 = vand.u32 %v1134, 2147483648
    %v2402 = vsel %vm2400, %v2401, %v2399
    %v2403 = vrsqrt.pop %v1137
    %v2404 = vmul.f32 %v1137, %v2403
    %vm2405 = vcmp.eq.f32.partialorder %v1137, inf
    %v2406 = vsel %vm2405, %v1137, %v2404
    %vm2407 = vcmp.eq.f32.partialorder %v1137, 0.0
    %v2408 = vand.u32 %v1137, 2147483648
    %v2409 = vsel %vm2407, %v2408, %v2406
    %v2410 = vrsqrt.pop %v1140
    %v2411 = vmul.f32 %v1140, %v2410
    %vm2412 = vcmp.eq.f32.partialorder %v1140, inf
    %v2413 = vsel %vm2412, %v1140, %v2411
    %vm2414 = vcmp.eq.f32.partialorder %v1140, 0.0
    %v2415 = vand.u32 %v1140, 2147483648
    %v2416 = vsel %vm2414, %v2415, %v2413
    %v2417 = vrsqrt.pop %v1143
    %v2418 = vmul.f32 %v1143, %v2417
    %vm2419 = vcmp.eq.f32.partialorder %v1143, inf
    %v2420 = vsel %vm2419, %v1143, %v2418
    %vm2421 = vcmp.eq.f32.partialorder %v1143, 0.0
    %v2422 = vand.u32 %v1143, 2147483648
    %v2423 = vsel %vm2421, %v2422, %v2420
    %v2424 = vrsqrt.pop %v1146
    %v2425 = vmul.f32 %v1146, %v2424
    %vm2426 = vcmp.eq.f32.partialorder %v1146, inf
    %v2427 = vsel %vm2426, %v1146, %v2425
    %vm2428 = vcmp.eq.f32.partialorder %v1146, 0.0
    %v2429 = vand.u32 %v1146, 2147483648
    %v2430 = vsel %vm2428, %v2429, %v2427
    %v2431 = vrsqrt.pop %v1149
    %v2432 = vmul.f32 %v1149, %v2431
    %vm2433 = vcmp.eq.f32.partialorder %v1149, inf
    %v2434 = vsel %vm2433, %v1149, %v2432
    %vm2435 = vcmp.eq.f32.partialorder %v1149, 0.0
    %v2436 = vand.u32 %v1149, 2147483648
    %v2437 = vsel %vm2435, %v2436, %v2434
    %v2438 = vrsqrt.pop %v1152
    %v2439 = vmul.f32 %v1152, %v2438
    %vm2440 = vcmp.eq.f32.partialorder %v1152, inf
    %v2441 = vsel %vm2440, %v1152, %v2439
    %vm2442 = vcmp.eq.f32.partialorder %v1152, 0.0
    %v2443 = vand.u32 %v1152, 2147483648
    %v2444 = vsel %vm2442, %v2443, %v2441
    %v2445 = vrsqrt.pop %v1155
    %v2446 = vmul.f32 %v1155, %v2445
    %vm2447 = vcmp.eq.f32.partialorder %v1155, inf
    %v2448 = vsel %vm2447, %v1155, %v2446
    %vm2449 = vcmp.eq.f32.partialorder %v1155, 0.0
    %v2450 = vand.u32 %v1155, 2147483648
    %v2451 = vsel %vm2449, %v2450, %v2448
    %v2452 = vrsqrt.pop %v1158
    %v2453 = vmul.f32 %v1158, %v2452
    %vm2454 = vcmp.eq.f32.partialorder %v1158, inf
    %v2455 = vsel %vm2454, %v1158, %v2453
    %vm2456 = vcmp.eq.f32.partialorder %v1158, 0.0
    %v2457 = vand.u32 %v1158, 2147483648
    %v2458 = vsel %vm2456, %v2457, %v2455
    %v2459 = vrsqrt.pop %v1161
    %v2460 = vmul.f32 %v1161, %v2459
    %vm2461 = vcmp.eq.f32.partialorder %v1161, inf
    %v2462 = vsel %vm2461, %v1161, %v2460
    %vm2463 = vcmp.eq.f32.partialorder %v1161, 0.0
    %v2464 = vand.u32 %v1161, 2147483648
    %v2465 = vsel %vm2463, %v2464, %v2462
    %v2466 = vrsqrt.pop %v1164
    %v2467 = vmul.f32 %v1164, %v2466
    %vm2468 = vcmp.eq.f32.partialorder %v1164, inf
    %v2469 = vsel %vm2468, %v1164, %v2467
    %vm2470 = vcmp.eq.f32.partialorder %v1164, 0.0
    %v2471 = vand.u32 %v1164, 2147483648
    %v2472 = vsel %vm2470, %v2471, %v2469
    %v2473 = vrsqrt.pop %v1167
    %v2474 = vmul.f32 %v1167, %v2473
    %vm2475 = vcmp.eq.f32.partialorder %v1167, inf
    %v2476 = vsel %vm2475, %v1167, %v2474
    %vm2477 = vcmp.eq.f32.partialorder %v1167, 0.0
    %v2478 = vand.u32 %v1167, 2147483648
    %v2479 = vsel %vm2477, %v2478, %v2476
    %v2480 = vrsqrt.pop %v1170
    %v2481 = vmul.f32 %v1170, %v2480
    %vm2482 = vcmp.eq.f32.partialorder %v1170, inf
    %v2483 = vsel %vm2482, %v1170, %v2481
    %vm2484 = vcmp.eq.f32.partialorder %v1170, 0.0
    %v2485 = vand.u32 %v1170, 2147483648
    %v2486 = vsel %vm2484, %v2485, %v2483
    %v2487 = vrsqrt.pop %v1173
    %v2488 = vmul.f32 %v1173, %v2487
    %vm2489 = vcmp.eq.f32.partialorder %v1173, inf
    %v2490 = vsel %vm2489, %v1173, %v2488
    %vm2491 = vcmp.eq.f32.partialorder %v1173, 0.0
    %v2492 = vand.u32 %v1173, 2147483648
    %v2493 = vsel %vm2491, %v2492, %v2490
    %v2494 = vrsqrt.pop %v1176
    %v2495 = vmul.f32 %v1176, %v2494
    %vm2496 = vcmp.eq.f32.partialorder %v1176, inf
    %v2497 = vsel %vm2496, %v1176, %v2495
    %vm2498 = vcmp.eq.f32.partialorder %v1176, 0.0
    %v2499 = vand.u32 %v1176, 2147483648
    %v2500 = vsel %vm2498, %v2499, %v2497
    %v2501 = vrsqrt.pop %v1179
    %v2502 = vmul.f32 %v1179, %v2501
    %vm2503 = vcmp.eq.f32.partialorder %v1179, inf
    %v2504 = vsel %vm2503, %v1179, %v2502
    %vm2505 = vcmp.eq.f32.partialorder %v1179, 0.0
    %v2506 = vand.u32 %v1179, 2147483648
    %v2507 = vsel %vm2505, %v2506, %v2504
    %v2508 = vrsqrt.pop %v1182
    %v2509 = vmul.f32 %v1182, %v2508
    %vm2510 = vcmp.eq.f32.partialorder %v1182, inf
    %v2511 = vsel %vm2510, %v1182, %v2509
    %vm2512 = vcmp.eq.f32.partialorder %v1182, 0.0
    %v2513 = vand.u32 %v1182, 2147483648
    %v2514 = vsel %vm2512, %v2513, %v2511
    %v2515 = vrsqrt.pop %v1185
    %v2516 = vmul.f32 %v1185, %v2515
    %vm2517 = vcmp.eq.f32.partialorder %v1185, inf
    %v2518 = vsel %vm2517, %v1185, %v2516
    %vm2519 = vcmp.eq.f32.partialorder %v1185, 0.0
    %v2520 = vand.u32 %v1185, 2147483648
    %v2521 = vsel %vm2519, %v2520, %v2518
    %v2522 = vrsqrt.pop %v1188
    %v2523 = vmul.f32 %v1188, %v2522
    %vm2524 = vcmp.eq.f32.partialorder %v1188, inf
    %v2525 = vsel %vm2524, %v1188, %v2523
    %vm2526 = vcmp.eq.f32.partialorder %v1188, 0.0
    %v2527 = vand.u32 %v1188, 2147483648
    %v2528 = vsel %vm2526, %v2527, %v2525
    %v2529 = vrsqrt.pop %v1191
    %v2530 = vmul.f32 %v1191, %v2529
    %vm2531 = vcmp.eq.f32.partialorder %v1191, inf
    %v2532 = vsel %vm2531, %v1191, %v2530
    %vm2533 = vcmp.eq.f32.partialorder %v1191, 0.0
    %v2534 = vand.u32 %v1191, 2147483648
    %v2535 = vsel %vm2533, %v2534, %v2532
    %v2536 = vrsqrt.pop %v1194
    %v2537 = vmul.f32 %v1194, %v2536
    %vm2538 = vcmp.eq.f32.partialorder %v1194, inf
    %v2539 = vsel %vm2538, %v1194, %v2537
    %vm2540 = vcmp.eq.f32.partialorder %v1194, 0.0
    %v2541 = vand.u32 %v1194, 2147483648
    %v2542 = vsel %vm2540, %v2541, %v2539
    %v2543 = vrsqrt.pop %v1197
    %v2544 = vmul.f32 %v1197, %v2543
    %vm2545 = vcmp.eq.f32.partialorder %v1197, inf
    %v2546 = vsel %vm2545, %v1197, %v2544
    %vm2547 = vcmp.eq.f32.partialorder %v1197, 0.0
    %v2548 = vand.u32 %v1197, 2147483648
    %v2549 = vsel %vm2547, %v2548, %v2546
    %v2550 = vrsqrt.pop %v1200
    %v2551 = vmul.f32 %v1200, %v2550
    %vm2552 = vcmp.eq.f32.partialorder %v1200, inf
    %v2553 = vsel %vm2552, %v1200, %v2551
    %vm2554 = vcmp.eq.f32.partialorder %v1200, 0.0
    %v2555 = vand.u32 %v1200, 2147483648
    %v2556 = vsel %vm2554, %v2555, %v2553
    %v2557 = vrsqrt.pop %v1203
    %v2558 = vmul.f32 %v1203, %v2557
    %vm2559 = vcmp.eq.f32.partialorder %v1203, inf
    %v2560 = vsel %vm2559, %v1203, %v2558
    %vm2561 = vcmp.eq.f32.partialorder %v1203, 0.0
    %v2562 = vand.u32 %v1203, 2147483648
    %v2563 = vsel %vm2561, %v2562, %v2560
    %v2564 = vrsqrt.pop %v1206
    %v2565 = vmul.f32 %v1206, %v2564
    %vm2566 = vcmp.eq.f32.partialorder %v1206, inf
    %v2567 = vsel %vm2566, %v1206, %v2565
    %vm2568 = vcmp.eq.f32.partialorder %v1206, 0.0
    %v2569 = vand.u32 %v1206, 2147483648
    %v2570 = vsel %vm2568, %v2569, %v2567
    %v2571 = vrsqrt.pop %v1209
    %v2572 = vmul.f32 %v1209, %v2571
    %vm2573 = vcmp.eq.f32.partialorder %v1209, inf
    %v2574 = vsel %vm2573, %v1209, %v2572
    %vm2575 = vcmp.eq.f32.partialorder %v1209, 0.0
    %v2576 = vand.u32 %v1209, 2147483648
    %v2577 = vsel %vm2575, %v2576, %v2574
    %v2578 = vrsqrt.pop %v1212
    %v2579 = vmul.f32 %v1212, %v2578
    %vm2580 = vcmp.eq.f32.partialorder %v1212, inf
    %v2581 = vsel %vm2580, %v1212, %v2579
    %vm2582 = vcmp.eq.f32.partialorder %v1212, 0.0
    %v2583 = vand.u32 %v1212, 2147483648
    %v2584 = vsel %vm2582, %v2583, %v2581
    %v2585 = vrsqrt.pop %v1215
    %v2586 = vmul.f32 %v1215, %v2585
    %vm2587 = vcmp.eq.f32.partialorder %v1215, inf
    %v2588 = vsel %vm2587, %v1215, %v2586
    %vm2589 = vcmp.eq.f32.partialorder %v1215, 0.0
    %v2590 = vand.u32 %v1215, 2147483648
    %v2591 = vsel %vm2589, %v2590, %v2588
    %v2592 = vrsqrt.pop %v1218
    %v2593 = vmul.f32 %v1218, %v2592
    %vm2594 = vcmp.eq.f32.partialorder %v1218, inf
    %v2595 = vsel %vm2594, %v1218, %v2593
    %vm2596 = vcmp.eq.f32.partialorder %v1218, 0.0
    %v2597 = vand.u32 %v1218, 2147483648
    %v2598 = vsel %vm2596, %v2597, %v2595
    %v2599 = vrsqrt.pop %v1221
    %v2600 = vmul.f32 %v1221, %v2599
    %vm2601 = vcmp.eq.f32.partialorder %v1221, inf
    %v2602 = vsel %vm2601, %v1221, %v2600
    %vm2603 = vcmp.eq.f32.partialorder %v1221, 0.0
    %v2604 = vand.u32 %v1221, 2147483648
    %v2605 = vsel %vm2603, %v2604, %v2602
    %v2606 = vrsqrt.pop %v1224
    %v2607 = vmul.f32 %v1224, %v2606
    %vm2608 = vcmp.eq.f32.partialorder %v1224, inf
    %v2609 = vsel %vm2608, %v1224, %v2607
    %vm2610 = vcmp.eq.f32.partialorder %v1224, 0.0
    %v2611 = vand.u32 %v1224, 2147483648
    %v2612 = vsel %vm2610, %v2611, %v2609
    %v2613 = vrsqrt.pop %v1227
    %v2614 = vmul.f32 %v1227, %v2613
    %vm2615 = vcmp.eq.f32.partialorder %v1227, inf
    %v2616 = vsel %vm2615, %v1227, %v2614
    %vm2617 = vcmp.eq.f32.partialorder %v1227, 0.0
    %v2618 = vand.u32 %v1227, 2147483648
    %v2619 = vsel %vm2617, %v2618, %v2616
    %v2620 = vrsqrt.pop %v1230
    %v2621 = vmul.f32 %v1230, %v2620
    %vm2622 = vcmp.eq.f32.partialorder %v1230, inf
    %v2623 = vsel %vm2622, %v1230, %v2621
    %vm2624 = vcmp.eq.f32.partialorder %v1230, 0.0
    %v2625 = vand.u32 %v1230, 2147483648
    %v2626 = vsel %vm2624, %v2625, %v2623
    %v2627 = vrsqrt.pop %v1233
    %v2628 = vmul.f32 %v1233, %v2627
    %vm2629 = vcmp.eq.f32.partialorder %v1233, inf
    %v2630 = vsel %vm2629, %v1233, %v2628
    %vm2631 = vcmp.eq.f32.partialorder %v1233, 0.0
    %v2632 = vand.u32 %v1233, 2147483648
    %v2633 = vsel %vm2631, %v2632, %v2630
    %v2634 = vrsqrt.pop %v1236
    %v2635 = vmul.f32 %v1236, %v2634
    %vm2636 = vcmp.eq.f32.partialorder %v1236, inf
    %v2637 = vsel %vm2636, %v1236, %v2635
    %vm2638 = vcmp.eq.f32.partialorder %v1236, 0.0
    %v2639 = vand.u32 %v1236, 2147483648
    %v2640 = vsel %vm2638, %v2639, %v2637
    %v2641 = vrsqrt.pop %v1239
    %v2642 = vmul.f32 %v1239, %v2641
    %vm2643 = vcmp.eq.f32.partialorder %v1239, inf
    %v2644 = vsel %vm2643, %v1239, %v2642
    %vm2645 = vcmp.eq.f32.partialorder %v1239, 0.0
    %v2646 = vand.u32 %v1239, 2147483648
    %v2647 = vsel %vm2645, %v2646, %v2644
    %v2648 = vrsqrt.pop %v1242
    %v2649 = vmul.f32 %v1242, %v2648
    %vm2650 = vcmp.eq.f32.partialorder %v1242, inf
    %v2651 = vsel %vm2650, %v1242, %v2649
    %vm2652 = vcmp.eq.f32.partialorder %v1242, 0.0
    %v2653 = vand.u32 %v1242, 2147483648
    %v2654 = vsel %vm2652, %v2653, %v2651
    %v2655 = vrsqrt.pop %v1245
    %v2656 = vmul.f32 %v1245, %v2655
    %vm2657 = vcmp.eq.f32.partialorder %v1245, inf
    %v2658 = vsel %vm2657, %v1245, %v2656
    %vm2659 = vcmp.eq.f32.partialorder %v1245, 0.0
    %v2660 = vand.u32 %v1245, 2147483648
    %v2661 = vsel %vm2659, %v2660, %v2658
    %v2662 = vrsqrt.pop %v1248
    %v2663 = vmul.f32 %v1248, %v2662
    %vm2664 = vcmp.eq.f32.partialorder %v1248, inf
    %v2665 = vsel %vm2664, %v1248, %v2663
    %vm2666 = vcmp.eq.f32.partialorder %v1248, 0.0
    %v2667 = vand.u32 %v1248, 2147483648
    %v2668 = vsel %vm2666, %v2667, %v2665
    %v2669 = vrsqrt.pop %v1251
    %v2670 = vmul.f32 %v1251, %v2669
    %vm2671 = vcmp.eq.f32.partialorder %v1251, inf
    %v2672 = vsel %vm2671, %v1251, %v2670
    %vm2673 = vcmp.eq.f32.partialorder %v1251, 0.0
    %v2674 = vand.u32 %v1251, 2147483648
    %v2675 = vsel %vm2673, %v2674, %v2672
    %v2676 = vrsqrt.pop %v1254
    %v2677 = vmul.f32 %v1254, %v2676
    %vm2678 = vcmp.eq.f32.partialorder %v1254, inf
    %v2679 = vsel %vm2678, %v1254, %v2677
    %vm2680 = vcmp.eq.f32.partialorder %v1254, 0.0
    %v2681 = vand.u32 %v1254, 2147483648
    %v2682 = vsel %vm2680, %v2681, %v2679
    %v2683 = vrsqrt.pop %v1257
    %v2684 = vmul.f32 %v1257, %v2683
    %vm2685 = vcmp.eq.f32.partialorder %v1257, inf
    %v2686 = vsel %vm2685, %v1257, %v2684
    %vm2687 = vcmp.eq.f32.partialorder %v1257, 0.0
    %v2688 = vand.u32 %v1257, 2147483648
    %v2689 = vsel %vm2687, %v2688, %v2686
    %v2690 = vrsqrt.pop %v1260
    %v2691 = vmul.f32 %v1260, %v2690
    %vm2692 = vcmp.eq.f32.partialorder %v1260, inf
    %v2693 = vsel %vm2692, %v1260, %v2691
    %vm2694 = vcmp.eq.f32.partialorder %v1260, 0.0
    %v2695 = vand.u32 %v1260, 2147483648
    %v2696 = vsel %vm2694, %v2695, %v2693
    %v2697 = vrsqrt.pop %v1263
    %v2698 = vmul.f32 %v1263, %v2697
    %vm2699 = vcmp.eq.f32.partialorder %v1263, inf
    %v2700 = vsel %vm2699, %v1263, %v2698
    %vm2701 = vcmp.eq.f32.partialorder %v1263, 0.0
    %v2702 = vand.u32 %v1263, 2147483648
    %v2703 = vsel %vm2701, %v2702, %v2700
    %v2704 = vrsqrt.pop %v1266
    %v2705 = vmul.f32 %v1266, %v2704
    %vm2706 = vcmp.eq.f32.partialorder %v1266, inf
    %v2707 = vsel %vm2706, %v1266, %v2705
    %vm2708 = vcmp.eq.f32.partialorder %v1266, 0.0
    %v2709 = vand.u32 %v1266, 2147483648
    %v2710 = vsel %vm2708, %v2709, %v2707
    %v2711 = vrsqrt.pop %v1269
    %v2712 = vmul.f32 %v1269, %v2711
    %vm2713 = vcmp.eq.f32.partialorder %v1269, inf
    %v2714 = vsel %vm2713, %v1269, %v2712
    %vm2715 = vcmp.eq.f32.partialorder %v1269, 0.0
    %v2716 = vand.u32 %v1269, 2147483648
    %v2717 = vsel %vm2715, %v2716, %v2714
    %v2718 = vrsqrt.pop %v1272
    %v2719 = vmul.f32 %v1272, %v2718
    %vm2720 = vcmp.eq.f32.partialorder %v1272, inf
    %v2721 = vsel %vm2720, %v1272, %v2719
    %vm2722 = vcmp.eq.f32.partialorder %v1272, 0.0
    %v2723 = vand.u32 %v1272, 2147483648
    %v2724 = vsel %vm2722, %v2723, %v2721
    %v2725 = vrsqrt.pop %v1275
    %v2726 = vmul.f32 %v1275, %v2725
    %vm2727 = vcmp.eq.f32.partialorder %v1275, inf
    %v2728 = vsel %vm2727, %v1275, %v2726
    %vm2729 = vcmp.eq.f32.partialorder %v1275, 0.0
    %v2730 = vand.u32 %v1275, 2147483648
    %v2731 = vsel %vm2729, %v2730, %v2728
    %v2732 = vrsqrt.pop %v1278
    %v2733 = vmul.f32 %v1278, %v2732
    %vm2734 = vcmp.eq.f32.partialorder %v1278, inf
    %v2735 = vsel %vm2734, %v1278, %v2733
    %vm2736 = vcmp.eq.f32.partialorder %v1278, 0.0
    %v2737 = vand.u32 %v1278, 2147483648
    %v2738 = vsel %vm2736, %v2737, %v2735
    %v2739 = vrsqrt.pop %v1281
    %v2740 = vmul.f32 %v1281, %v2739
    %vm2741 = vcmp.eq.f32.partialorder %v1281, inf
    %v2742 = vsel %vm2741, %v1281, %v2740
    %vm2743 = vcmp.eq.f32.partialorder %v1281, 0.0
    %v2744 = vand.u32 %v1281, 2147483648
    %v2745 = vsel %vm2743, %v2744, %v2742
    %v2746 = vrsqrt.pop %v1284
    %v2747 = vmul.f32 %v1284, %v2746
    %vm2748 = vcmp.eq.f32.partialorder %v1284, inf
    %v2749 = vsel %vm2748, %v1284, %v2747
    %vm2750 = vcmp.eq.f32.partialorder %v1284, 0.0
    %v2751 = vand.u32 %v1284, 2147483648
    %v2752 = vsel %vm2750, %v2751, %v2749
    %v2753 = vrsqrt.pop %v1287
    %v2754 = vmul.f32 %v1287, %v2753
    %vm2755 = vcmp.eq.f32.partialorder %v1287, inf
    %v2756 = vsel %vm2755, %v1287, %v2754
    %vm2757 = vcmp.eq.f32.partialorder %v1287, 0.0
    %v2758 = vand.u32 %v1287, 2147483648
    %v2759 = vsel %vm2757, %v2758, %v2756
    %v2760 = vrsqrt.pop %v1290
    %v2761 = vmul.f32 %v1290, %v2760
    %vm2762 = vcmp.eq.f32.partialorder %v1290, inf
    %v2763 = vsel %vm2762, %v1290, %v2761
    %vm2764 = vcmp.eq.f32.partialorder %v1290, 0.0
    %v2765 = vand.u32 %v1290, 2147483648
    %v2766 = vsel %vm2764, %v2765, %v2763
    %v2767 = vrsqrt.pop %v1293
    %v2768 = vmul.f32 %v1293, %v2767
    %vm2769 = vcmp.eq.f32.partialorder %v1293, inf
    %v2770 = vsel %vm2769, %v1293, %v2768
    %vm2771 = vcmp.eq.f32.partialorder %v1293, 0.0
    %v2772 = vand.u32 %v1293, 2147483648
    %v2773 = vsel %vm2771, %v2772, %v2770
    %v2774 = vrsqrt.pop %v1296
    %v2775 = vmul.f32 %v1296, %v2774
    %vm2776 = vcmp.eq.f32.partialorder %v1296, inf
    %v2777 = vsel %vm2776, %v1296, %v2775
    %vm2778 = vcmp.eq.f32.partialorder %v1296, 0.0
    %v2779 = vand.u32 %v1296, 2147483648
    %v2780 = vsel %vm2778, %v2779, %v2777
    %v2781 = vrsqrt.pop %v1299
    %v2782 = vmul.f32 %v1299, %v2781
    %vm2783 = vcmp.eq.f32.partialorder %v1299, inf
    %v2784 = vsel %vm2783, %v1299, %v2782
    %vm2785 = vcmp.eq.f32.partialorder %v1299, 0.0
    %v2786 = vand.u32 %v1299, 2147483648
    %v2787 = vsel %vm2785, %v2786, %v2784
    %v2788 = vrsqrt.pop %v1302
    %v2789 = vmul.f32 %v1302, %v2788
    %vm2790 = vcmp.eq.f32.partialorder %v1302, inf
    %v2791 = vsel %vm2790, %v1302, %v2789
    %vm2792 = vcmp.eq.f32.partialorder %v1302, 0.0
    %v2793 = vand.u32 %v1302, 2147483648
    %v2794 = vsel %vm2792, %v2793, %v2791
    %v2795 = vrsqrt.pop %v1305
    %v2796 = vmul.f32 %v1305, %v2795
    %vm2797 = vcmp.eq.f32.partialorder %v1305, inf
    %v2798 = vsel %vm2797, %v1305, %v2796
    %vm2799 = vcmp.eq.f32.partialorder %v1305, 0.0
    %v2800 = vand.u32 %v1305, 2147483648
    %v2801 = vsel %vm2799, %v2800, %v2798
    %v2802 = vrsqrt.pop %v1308
    %v2803 = vmul.f32 %v1308, %v2802
    %vm2804 = vcmp.eq.f32.partialorder %v1308, inf
    %v2805 = vsel %vm2804, %v1308, %v2803
    %vm2806 = vcmp.eq.f32.partialorder %v1308, 0.0
    %v2807 = vand.u32 %v1308, 2147483648
    %v2808 = vsel %vm2806, %v2807, %v2805
    %v2809 = vrsqrt.pop %v1311
    %v2810 = vmul.f32 %v1311, %v2809
    %vm2811 = vcmp.eq.f32.partialorder %v1311, inf
    %v2812 = vsel %vm2811, %v1311, %v2810
    %vm2813 = vcmp.eq.f32.partialorder %v1311, 0.0
    %v2814 = vand.u32 %v1311, 2147483648
    %v2815 = vsel %vm2813, %v2814, %v2812
    %v2816 = vrsqrt.pop %v1314
    %v2817 = vmul.f32 %v1314, %v2816
    %vm2818 = vcmp.eq.f32.partialorder %v1314, inf
    %v2819 = vsel %vm2818, %v1314, %v2817
    %vm2820 = vcmp.eq.f32.partialorder %v1314, 0.0
    %v2821 = vand.u32 %v1314, 2147483648
    %v2822 = vsel %vm2820, %v2821, %v2819
    %v2823 = vrsqrt.pop %v1317
    %v2824 = vmul.f32 %v1317, %v2823
    %vm2825 = vcmp.eq.f32.partialorder %v1317, inf
    %v2826 = vsel %vm2825, %v1317, %v2824
    %vm2827 = vcmp.eq.f32.partialorder %v1317, 0.0
    %v2828 = vand.u32 %v1317, 2147483648
    %v2829 = vsel %vm2827, %v2828, %v2826
    %v2830 = vrsqrt.pop %v1320
    %v2831 = vmul.f32 %v1320, %v2830
    %vm2832 = vcmp.eq.f32.partialorder %v1320, inf
    %v2833 = vsel %vm2832, %v1320, %v2831
    %vm2834 = vcmp.eq.f32.partialorder %v1320, 0.0
    %v2835 = vand.u32 %v1320, 2147483648
    %v2836 = vsel %vm2834, %v2835, %v2833
    %v2837 = vrsqrt.pop %v1323
    %v2838 = vmul.f32 %v1323, %v2837
    %vm2839 = vcmp.eq.f32.partialorder %v1323, inf
    %v2840 = vsel %vm2839, %v1323, %v2838
    %vm2841 = vcmp.eq.f32.partialorder %v1323, 0.0
    %v2842 = vand.u32 %v1323, 2147483648
    %v2843 = vsel %vm2841, %v2842, %v2840
    %v2844 = vrsqrt.pop %v1326
    %v2845 = vmul.f32 %v1326, %v2844
    %vm2846 = vcmp.eq.f32.partialorder %v1326, inf
    %v2847 = vsel %vm2846, %v1326, %v2845
    %vm2848 = vcmp.eq.f32.partialorder %v1326, 0.0
    %v2849 = vand.u32 %v1326, 2147483648
    %v2850 = vsel %vm2848, %v2849, %v2847
    %v2851 = vrsqrt.pop %v1329
    %v2852 = vmul.f32 %v1329, %v2851
    %vm2853 = vcmp.eq.f32.partialorder %v1329, inf
    %v2854 = vsel %vm2853, %v1329, %v2852
    %vm2855 = vcmp.eq.f32.partialorder %v1329, 0.0
    %v2856 = vand.u32 %v1329, 2147483648
    %v2857 = vsel %vm2855, %v2856, %v2854
    %v2858 = vrsqrt.pop %v1332
    %v2859 = vmul.f32 %v1332, %v2858
    %vm2860 = vcmp.eq.f32.partialorder %v1332, inf
    %v2861 = vsel %vm2860, %v1332, %v2859
    %vm2862 = vcmp.eq.f32.partialorder %v1332, 0.0
    %v2863 = vand.u32 %v1332, 2147483648
    %v2864 = vsel %vm2862, %v2863, %v2861
    %v2865 = vrsqrt.pop %v1335
    %v2866 = vmul.f32 %v1335, %v2865
    %vm2867 = vcmp.eq.f32.partialorder %v1335, inf
    %v2868 = vsel %vm2867, %v1335, %v2866
    %vm2869 = vcmp.eq.f32.partialorder %v1335, 0.0
    %v2870 = vand.u32 %v1335, 2147483648
    %v2871 = vsel %vm2869, %v2870, %v2868
    %v2872 = vrsqrt.pop %v1338
    %v2873 = vmul.f32 %v1338, %v2872
    %vm2874 = vcmp.eq.f32.partialorder %v1338, inf
    %v2875 = vsel %vm2874, %v1338, %v2873
    %vm2876 = vcmp.eq.f32.partialorder %v1338, 0.0
    %v2877 = vand.u32 %v1338, 2147483648
    %v2878 = vsel %vm2876, %v2877, %v2875
    %v2879 = vrsqrt.pop %v1341
    %v2880 = vmul.f32 %v1341, %v2879
    %vm2881 = vcmp.eq.f32.partialorder %v1341, inf
    %v2882 = vsel %vm2881, %v1341, %v2880
    %vm2883 = vcmp.eq.f32.partialorder %v1341, 0.0
    %v2884 = vand.u32 %v1341, 2147483648
    %v2885 = vsel %vm2883, %v2884, %v2882
    %v2886 = vrsqrt.pop %v1344
    %v2887 = vmul.f32 %v1344, %v2886
    %vm2888 = vcmp.eq.f32.partialorder %v1344, inf
    %v2889 = vsel %vm2888, %v1344, %v2887
    %vm2890 = vcmp.eq.f32.partialorder %v1344, 0.0
    %v2891 = vand.u32 %v1344, 2147483648
    %v2892 = vsel %vm2890, %v2891, %v2889
    %v2893 = vrsqrt.pop %v1347
    %v2894 = vmul.f32 %v1347, %v2893
    %vm2895 = vcmp.eq.f32.partialorder %v1347, inf
    %v2896 = vsel %vm2895, %v1347, %v2894
    %vm2897 = vcmp.eq.f32.partialorder %v1347, 0.0
    %v2898 = vand.u32 %v1347, 2147483648
    %v2899 = vsel %vm2897, %v2898, %v2896
    %v2900 = vrsqrt.pop %v1350
    %v2901 = vmul.f32 %v1350, %v2900
    %vm2902 = vcmp.eq.f32.partialorder %v1350, inf
    %v2903 = vsel %vm2902, %v1350, %v2901
    %vm2904 = vcmp.eq.f32.partialorder %v1350, 0.0
    %v2905 = vand.u32 %v1350, 2147483648
    %v2906 = vsel %vm2904, %v2905, %v2903
    %v2907 = vrsqrt.pop %v1353
    %v2908 = vmul.f32 %v1353, %v2907
    %vm2909 = vcmp.eq.f32.partialorder %v1353, inf
    %v2910 = vsel %vm2909, %v1353, %v2908
    %vm2911 = vcmp.eq.f32.partialorder %v1353, 0.0
    %v2912 = vand.u32 %v1353, 2147483648
    %v2913 = vsel %vm2911, %v2912, %v2910
    %v2914 = vrsqrt.pop %v1356
    %v2915 = vmul.f32 %v1356, %v2914
    %vm2916 = vcmp.eq.f32.partialorder %v1356, inf
    %v2917 = vsel %vm2916, %v1356, %v2915
    %vm2918 = vcmp.eq.f32.partialorder %v1356, 0.0
    %v2919 = vand.u32 %v1356, 2147483648
    %v2920 = vsel %vm2918, %v2919, %v2917
    %v2921 = vrsqrt.pop %v1359
    %v2922 = vmul.f32 %v1359, %v2921
    %vm2923 = vcmp.eq.f32.partialorder %v1359, inf
    %v2924 = vsel %vm2923, %v1359, %v2922
    %vm2925 = vcmp.eq.f32.partialorder %v1359, 0.0
    %v2926 = vand.u32 %v1359, 2147483648
    %v2927 = vsel %vm2925, %v2926, %v2924
    %v2928 = vrsqrt.pop %v1362
    %v2929 = vmul.f32 %v1362, %v2928
    %vm2930 = vcmp.eq.f32.partialorder %v1362, inf
    %v2931 = vsel %vm2930, %v1362, %v2929
    %vm2932 = vcmp.eq.f32.partialorder %v1362, 0.0
    %v2933 = vand.u32 %v1362, 2147483648
    %v2934 = vsel %vm2932, %v2933, %v2931
    %v2935 = vrsqrt.pop %v1365
    %v2936 = vmul.f32 %v1365, %v2935
    %vm2937 = vcmp.eq.f32.partialorder %v1365, inf
    %v2938 = vsel %vm2937, %v1365, %v2936
    %vm2939 = vcmp.eq.f32.partialorder %v1365, 0.0
    %v2940 = vand.u32 %v1365, 2147483648
    %v2941 = vsel %vm2939, %v2940, %v2938
    %v2942 = vrsqrt.pop %v1368
    %v2943 = vmul.f32 %v1368, %v2942
    %vm2944 = vcmp.eq.f32.partialorder %v1368, inf
    %v2945 = vsel %vm2944, %v1368, %v2943
    %vm2946 = vcmp.eq.f32.partialorder %v1368, 0.0
    %v2947 = vand.u32 %v1368, 2147483648
    %v2948 = vsel %vm2946, %v2947, %v2945
    %v2949 = vrsqrt.pop %v1371
    %v2950 = vmul.f32 %v1371, %v2949
    %vm2951 = vcmp.eq.f32.partialorder %v1371, inf
    %v2952 = vsel %vm2951, %v1371, %v2950
    %vm2953 = vcmp.eq.f32.partialorder %v1371, 0.0
    %v2954 = vand.u32 %v1371, 2147483648
    %v2955 = vsel %vm2953, %v2954, %v2952
    %v2956 = vrsqrt.pop %v1374
    %v2957 = vmul.f32 %v1374, %v2956
    %vm2958 = vcmp.eq.f32.partialorder %v1374, inf
    %v2959 = vsel %vm2958, %v1374, %v2957
    %vm2960 = vcmp.eq.f32.partialorder %v1374, 0.0
    %v2961 = vand.u32 %v1374, 2147483648
    %v2962 = vsel %vm2960, %v2961, %v2959
    %v2963 = vrsqrt.pop %v1377
    %v2964 = vmul.f32 %v1377, %v2963
    %vm2965 = vcmp.eq.f32.partialorder %v1377, inf
    %v2966 = vsel %vm2965, %v1377, %v2964
    %vm2967 = vcmp.eq.f32.partialorder %v1377, 0.0
    %v2968 = vand.u32 %v1377, 2147483648
    %v2969 = vsel %vm2967, %v2968, %v2966
    %v2970 = vrsqrt.pop %v1380
    %v2971 = vmul.f32 %v1380, %v2970
    %vm2972 = vcmp.eq.f32.partialorder %v1380, inf
    %v2973 = vsel %vm2972, %v1380, %v2971
    %vm2974 = vcmp.eq.f32.partialorder %v1380, 0.0
    %v2975 = vand.u32 %v1380, 2147483648
    %v2976 = vsel %vm2974, %v2975, %v2973
    %v2977 = vrsqrt.pop %v1383
    %v2978 = vmul.f32 %v1383, %v2977
    %vm2979 = vcmp.eq.f32.partialorder %v1383, inf
    %v2980 = vsel %vm2979, %v1383, %v2978
    %vm2981 = vcmp.eq.f32.partialorder %v1383, 0.0
    %v2982 = vand.u32 %v1383, 2147483648
    %v2983 = vsel %vm2981, %v2982, %v2980
    %v2984 = vrsqrt.pop %v1386
    %v2985 = vmul.f32 %v1386, %v2984
    %vm2986 = vcmp.eq.f32.partialorder %v1386, inf
    %v2987 = vsel %vm2986, %v1386, %v2985
    %vm2988 = vcmp.eq.f32.partialorder %v1386, 0.0
    %v2989 = vand.u32 %v1386, 2147483648
    %v2990 = vsel %vm2988, %v2989, %v2987
    %v2991 = vrsqrt.pop %v1389
    %v2992 = vmul.f32 %v1389, %v2991
    %vm2993 = vcmp.eq.f32.partialorder %v1389, inf
    %v2994 = vsel %vm2993, %v1389, %v2992
    %vm2995 = vcmp.eq.f32.partialorder %v1389, 0.0
    %v2996 = vand.u32 %v1389, 2147483648
    %v2997 = vsel %vm2995, %v2996, %v2994
    %v2998 = vrsqrt.pop %v1392
    %v2999 = vmul.f32 %v1392, %v2998
    %vm3000 = vcmp.eq.f32.partialorder %v1392, inf
    %v3001 = vsel %vm3000, %v1392, %v2999
    %vm3002 = vcmp.eq.f32.partialorder %v1392, 0.0
    %v3003 = vand.u32 %v1392, 2147483648
    %v3004 = vsel %vm3002, %v3003, %v3001
    %v3005 = vrsqrt.pop %v1395
    %v3006 = vmul.f32 %v1395, %v3005
    %vm3007 = vcmp.eq.f32.partialorder %v1395, inf
    %v3008 = vsel %vm3007, %v1395, %v3006
    %vm3009 = vcmp.eq.f32.partialorder %v1395, 0.0
    %v3010 = vand.u32 %v1395, 2147483648
    %v3011 = vsel %vm3009, %v3010, %v3008
    %v3012 = vrsqrt.pop %v1398
    %v3013 = vmul.f32 %v1398, %v3012
    %vm3014 = vcmp.eq.f32.partialorder %v1398, inf
    %v3015 = vsel %vm3014, %v1398, %v3013
    %vm3016 = vcmp.eq.f32.partialorder %v1398, 0.0
    %v3017 = vand.u32 %v1398, 2147483648
    %v3018 = vsel %vm3016, %v3017, %v3015
    %v3019 = vrsqrt.pop %v1401
    %v3020 = vmul.f32 %v1401, %v3019
    %vm3021 = vcmp.eq.f32.partialorder %v1401, inf
    %v3022 = vsel %vm3021, %v1401, %v3020
    %vm3023 = vcmp.eq.f32.partialorder %v1401, 0.0
    %v3024 = vand.u32 %v1401, 2147483648
    %v3025 = vsel %vm3023, %v3024, %v3022
    %v3026 = vrsqrt.pop %v1404
    %v3027 = vmul.f32 %v1404, %v3026
    %vm3028 = vcmp.eq.f32.partialorder %v1404, inf
    %v3029 = vsel %vm3028, %v1404, %v3027
    %vm3030 = vcmp.eq.f32.partialorder %v1404, 0.0
    %v3031 = vand.u32 %v1404, 2147483648
    %v3032 = vsel %vm3030, %v3031, %v3029
    %v3033 = vrsqrt.pop %v1407
    %v3034 = vmul.f32 %v1407, %v3033
    %vm3035 = vcmp.eq.f32.partialorder %v1407, inf
    %v3036 = vsel %vm3035, %v1407, %v3034
    %vm3037 = vcmp.eq.f32.partialorder %v1407, 0.0
    %v3038 = vand.u32 %v1407, 2147483648
    %v3039 = vsel %vm3037, %v3038, %v3036
    %v3040 = vrsqrt.pop %v1410
    %v3041 = vmul.f32 %v1410, %v3040
    %vm3042 = vcmp.eq.f32.partialorder %v1410, inf
    %v3043 = vsel %vm3042, %v1410, %v3041
    %vm3044 = vcmp.eq.f32.partialorder %v1410, 0.0
    %v3045 = vand.u32 %v1410, 2147483648
    %v3046 = vsel %vm3044, %v3045, %v3043
    %v3047 = vrsqrt.pop %v1413
    %v3048 = vmul.f32 %v1413, %v3047
    %vm3049 = vcmp.eq.f32.partialorder %v1413, inf
    %v3050 = vsel %vm3049, %v1413, %v3048
    %vm3051 = vcmp.eq.f32.partialorder %v1413, 0.0
    %v3052 = vand.u32 %v1413, 2147483648
    %v3053 = vsel %vm3051, %v3052, %v3050
    %v3054 = vrsqrt.pop %v1416
    %v3055 = vmul.f32 %v1416, %v3054
    %vm3056 = vcmp.eq.f32.partialorder %v1416, inf
    %v3057 = vsel %vm3056, %v1416, %v3055
    %vm3058 = vcmp.eq.f32.partialorder %v1416, 0.0
    %v3059 = vand.u32 %v1416, 2147483648
    %v3060 = vsel %vm3058, %v3059, %v3057
    %v3061 = vrsqrt.pop %v1419
    %v3062 = vmul.f32 %v1419, %v3061
    %vm3063 = vcmp.eq.f32.partialorder %v1419, inf
    %v3064 = vsel %vm3063, %v1419, %v3062
    %vm3065 = vcmp.eq.f32.partialorder %v1419, 0.0
    %v3066 = vand.u32 %v1419, 2147483648
    %v3067 = vsel %vm3065, %v3066, %v3064
    %v3068 = vrsqrt.pop %v1422
    %v3069 = vmul.f32 %v1422, %v3068
    %vm3070 = vcmp.eq.f32.partialorder %v1422, inf
    %v3071 = vsel %vm3070, %v1422, %v3069
    %vm3072 = vcmp.eq.f32.partialorder %v1422, 0.0
    %v3073 = vand.u32 %v1422, 2147483648
    %v3074 = vsel %vm3072, %v3073, %v3071
    %v3075 = vrsqrt.pop %v1425
    %v3076 = vmul.f32 %v1425, %v3075
    %vm3077 = vcmp.eq.f32.partialorder %v1425, inf
    %v3078 = vsel %vm3077, %v1425, %v3076
    %vm3079 = vcmp.eq.f32.partialorder %v1425, 0.0
    %v3080 = vand.u32 %v1425, 2147483648
    %v3081 = vsel %vm3079, %v3080, %v3078
    %v3082 = vrsqrt.pop %v1428
    %v3083 = vmul.f32 %v1428, %v3082
    %vm3084 = vcmp.eq.f32.partialorder %v1428, inf
    %v3085 = vsel %vm3084, %v1428, %v3083
    %vm3086 = vcmp.eq.f32.partialorder %v1428, 0.0
    %v3087 = vand.u32 %v1428, 2147483648
    %v3088 = vsel %vm3086, %v3087, %v3085
    %v3089 = vrsqrt.pop %v1431
    %v3090 = vmul.f32 %v1431, %v3089
    %vm3091 = vcmp.eq.f32.partialorder %v1431, inf
    %v3092 = vsel %vm3091, %v1431, %v3090
    %vm3093 = vcmp.eq.f32.partialorder %v1431, 0.0
    %v3094 = vand.u32 %v1431, 2147483648
    %v3095 = vsel %vm3093, %v3094, %v3092
    %v3096 = vrsqrt.pop %v1434
    %v3097 = vmul.f32 %v1434, %v3096
    %vm3098 = vcmp.eq.f32.partialorder %v1434, inf
    %v3099 = vsel %vm3098, %v1434, %v3097
    %vm3100 = vcmp.eq.f32.partialorder %v1434, 0.0
    %v3101 = vand.u32 %v1434, 2147483648
    %v3102 = vsel %vm3100, %v3101, %v3099
    %v3103 = vrsqrt.pop %v1437
    %v3104 = vmul.f32 %v1437, %v3103
    %vm3105 = vcmp.eq.f32.partialorder %v1437, inf
    %v3106 = vsel %vm3105, %v1437, %v3104
    %vm3107 = vcmp.eq.f32.partialorder %v1437, 0.0
    %v3108 = vand.u32 %v1437, 2147483648
    %v3109 = vsel %vm3107, %v3108, %v3106
    %v3110 = vrsqrt.pop %v1440
    %v3111 = vmul.f32 %v1440, %v3110
    %vm3112 = vcmp.eq.f32.partialorder %v1440, inf
    %v3113 = vsel %vm3112, %v1440, %v3111
    %vm3114 = vcmp.eq.f32.partialorder %v1440, 0.0
    %v3115 = vand.u32 %v1440, 2147483648
    %v3116 = vsel %vm3114, %v3115, %v3113
    %v3117 = vrsqrt.pop %v1443
    %v3118 = vmul.f32 %v1443, %v3117
    %vm3119 = vcmp.eq.f32.partialorder %v1443, inf
    %v3120 = vsel %vm3119, %v1443, %v3118
    %vm3121 = vcmp.eq.f32.partialorder %v1443, 0.0
    %v3122 = vand.u32 %v1443, 2147483648
    %v3123 = vsel %vm3121, %v3122, %v3120
    %v3124 = vrsqrt.pop %v1446
    %v3125 = vmul.f32 %v1446, %v3124
    %vm3126 = vcmp.eq.f32.partialorder %v1446, inf
    %v3127 = vsel %vm3126, %v1446, %v3125
    %vm3128 = vcmp.eq.f32.partialorder %v1446, 0.0
    %v3129 = vand.u32 %v1446, 2147483648
    %v3130 = vsel %vm3128, %v3129, %v3127
    %v3131 = vrsqrt.pop %v1449
    %v3132 = vmul.f32 %v1449, %v3131
    %vm3133 = vcmp.eq.f32.partialorder %v1449, inf
    %v3134 = vsel %vm3133, %v1449, %v3132
    %vm3135 = vcmp.eq.f32.partialorder %v1449, 0.0
    %v3136 = vand.u32 %v1449, 2147483648
    %v3137 = vsel %vm3135, %v3136, %v3134
    %v3138 = vrsqrt.pop %v1452
    %v3139 = vmul.f32 %v1452, %v3138
    %vm3140 = vcmp.eq.f32.partialorder %v1452, inf
    %v3141 = vsel %vm3140, %v1452, %v3139
    %vm3142 = vcmp.eq.f32.partialorder %v1452, 0.0
    %v3143 = vand.u32 %v1452, 2147483648
    %v3144 = vsel %vm3142, %v3143, %v3141
    %v3145 = vrsqrt.pop %v1455
    %v3146 = vmul.f32 %v1455, %v3145
    %vm3147 = vcmp.eq.f32.partialorder %v1455, inf
    %v3148 = vsel %vm3147, %v1455, %v3146
    %vm3149 = vcmp.eq.f32.partialorder %v1455, 0.0
    %v3150 = vand.u32 %v1455, 2147483648
    %v3151 = vsel %vm3149, %v3150, %v3148
    %v3152 = vrsqrt.pop %v1458
    %v3153 = vmul.f32 %v1458, %v3152
    %vm3154 = vcmp.eq.f32.partialorder %v1458, inf
    %v3155 = vsel %vm3154, %v1458, %v3153
    %vm3156 = vcmp.eq.f32.partialorder %v1458, 0.0
    %v3157 = vand.u32 %v1458, 2147483648
    %v3158 = vsel %vm3156, %v3157, %v3155
    %v3159 = vrsqrt.pop %v1461
    %v3160 = vmul.f32 %v1461, %v3159
    %vm3161 = vcmp.eq.f32.partialorder %v1461, inf
    %v3162 = vsel %vm3161, %v1461, %v3160
    %vm3163 = vcmp.eq.f32.partialorder %v1461, 0.0
    %v3164 = vand.u32 %v1461, 2147483648
    %v3165 = vsel %vm3163, %v3164, %v3162
    %v3166 = vrsqrt.pop %v1464
    %v3167 = vmul.f32 %v1464, %v3166
    %vm3168 = vcmp.eq.f32.partialorder %v1464, inf
    %v3169 = vsel %vm3168, %v1464, %v3167
    %vm3170 = vcmp.eq.f32.partialorder %v1464, 0.0
    %v3171 = vand.u32 %v1464, 2147483648
    %v3172 = vsel %vm3170, %v3171, %v3169
    %v3173 = vrsqrt.pop %v1467
    %v3174 = vmul.f32 %v1467, %v3173
    %vm3175 = vcmp.eq.f32.partialorder %v1467, inf
    %v3176 = vsel %vm3175, %v1467, %v3174
    %vm3177 = vcmp.eq.f32.partialorder %v1467, 0.0
    %v3178 = vand.u32 %v1467, 2147483648
    %v3179 = vsel %vm3177, %v3178, %v3176
    %v3180 = vrsqrt.pop %v1470
    %v3181 = vmul.f32 %v1470, %v3180
    %vm3182 = vcmp.eq.f32.partialorder %v1470, inf
    %v3183 = vsel %vm3182, %v1470, %v3181
    %vm3184 = vcmp.eq.f32.partialorder %v1470, 0.0
    %v3185 = vand.u32 %v1470, 2147483648
    %v3186 = vsel %vm3184, %v3185, %v3183
    %v3187 = vrsqrt.pop %v1473
    %v3188 = vmul.f32 %v1473, %v3187
    %vm3189 = vcmp.eq.f32.partialorder %v1473, inf
    %v3190 = vsel %vm3189, %v1473, %v3188
    %vm3191 = vcmp.eq.f32.partialorder %v1473, 0.0
    %v3192 = vand.u32 %v1473, 2147483648
    %v3193 = vsel %vm3191, %v3192, %v3190
    %v3194 = vrsqrt.pop %v1476
    %v3195 = vmul.f32 %v1476, %v3194
    %vm3196 = vcmp.eq.f32.partialorder %v1476, inf
    %v3197 = vsel %vm3196, %v1476, %v3195
    %vm3198 = vcmp.eq.f32.partialorder %v1476, 0.0
    %v3199 = vand.u32 %v1476, 2147483648
    %v3200 = vsel %vm3198, %v3199, %v3197
    %v3201 = vrsqrt.pop %v1479
    %v3202 = vmul.f32 %v1479, %v3201
    %vm3203 = vcmp.eq.f32.partialorder %v1479, inf
    %v3204 = vsel %vm3203, %v1479, %v3202
    %vm3205 = vcmp.eq.f32.partialorder %v1479, 0.0
    %v3206 = vand.u32 %v1479, 2147483648
    %v3207 = vsel %vm3205, %v3206, %v3204
    %v3208 = vrsqrt.pop %v1482
    %v3209 = vmul.f32 %v1482, %v3208
    %vm3210 = vcmp.eq.f32.partialorder %v1482, inf
    %v3211 = vsel %vm3210, %v1482, %v3209
    %vm3212 = vcmp.eq.f32.partialorder %v1482, 0.0
    %v3213 = vand.u32 %v1482, 2147483648
    %v3214 = vsel %vm3212, %v3213, %v3211
    %v3215 = vrsqrt.pop %v1485
    %v3216 = vmul.f32 %v1485, %v3215
    %vm3217 = vcmp.eq.f32.partialorder %v1485, inf
    %v3218 = vsel %vm3217, %v1485, %v3216
    %vm3219 = vcmp.eq.f32.partialorder %v1485, 0.0
    %v3220 = vand.u32 %v1485, 2147483648
    %v3221 = vsel %vm3219, %v3220, %v3218
    %v3222 = vrsqrt.pop %v1488
    %v3223 = vmul.f32 %v1488, %v3222
    %vm3224 = vcmp.eq.f32.partialorder %v1488, inf
    %v3225 = vsel %vm3224, %v1488, %v3223
    %vm3226 = vcmp.eq.f32.partialorder %v1488, 0.0
    %v3227 = vand.u32 %v1488, 2147483648
    %v3228 = vsel %vm3226, %v3227, %v3225
    %v3229 = vrsqrt.pop %v1491
    %v3230 = vmul.f32 %v1491, %v3229
    %vm3231 = vcmp.eq.f32.partialorder %v1491, inf
    %v3232 = vsel %vm3231, %v1491, %v3230
    %vm3233 = vcmp.eq.f32.partialorder %v1491, 0.0
    %v3234 = vand.u32 %v1491, 2147483648
    %v3235 = vsel %vm3233, %v3234, %v3232
    %v3236 = vrsqrt.pop %v1494
    %v3237 = vmul.f32 %v1494, %v3236
    %vm3238 = vcmp.eq.f32.partialorder %v1494, inf
    %v3239 = vsel %vm3238, %v1494, %v3237
    %vm3240 = vcmp.eq.f32.partialorder %v1494, 0.0
    %v3241 = vand.u32 %v1494, 2147483648
    %v3242 = vsel %vm3240, %v3241, %v3239
    %v3243 = vrsqrt.pop %v1497
    %v3244 = vmul.f32 %v1497, %v3243
    %vm3245 = vcmp.eq.f32.partialorder %v1497, inf
    %v3246 = vsel %vm3245, %v1497, %v3244
    %vm3247 = vcmp.eq.f32.partialorder %v1497, 0.0
    %v3248 = vand.u32 %v1497, 2147483648
    %v3249 = vsel %vm3247, %v3248, %v3246
    %v3250 = vrsqrt.pop %v1500
    %v3251 = vmul.f32 %v1500, %v3250
    %vm3252 = vcmp.eq.f32.partialorder %v1500, inf
    %v3253 = vsel %vm3252, %v1500, %v3251
    %vm3254 = vcmp.eq.f32.partialorder %v1500, 0.0
    %v3255 = vand.u32 %v1500, 2147483648
    %v3256 = vsel %vm3254, %v3255, %v3253
    %v3257 = vrsqrt.pop %v1503
    %v3258 = vmul.f32 %v1503, %v3257
    %vm3259 = vcmp.eq.f32.partialorder %v1503, inf
    %v3260 = vsel %vm3259, %v1503, %v3258
    %vm3261 = vcmp.eq.f32.partialorder %v1503, 0.0
    %v3262 = vand.u32 %v1503, 2147483648
    %v3263 = vsel %vm3261, %v3262, %v3260
    %v3264 = vrsqrt.pop %v1506
    %v3265 = vmul.f32 %v1506, %v3264
    %vm3266 = vcmp.eq.f32.partialorder %v1506, inf
    %v3267 = vsel %vm3266, %v1506, %v3265
    %vm3268 = vcmp.eq.f32.partialorder %v1506, 0.0
    %v3269 = vand.u32 %v1506, 2147483648
    %v3270 = vsel %vm3268, %v3269, %v3267
    %v3271 = vrsqrt.pop %v1509
    %v3272 = vmul.f32 %v1509, %v3271
    %vm3273 = vcmp.eq.f32.partialorder %v1509, inf
    %v3274 = vsel %vm3273, %v1509, %v3272
    %vm3275 = vcmp.eq.f32.partialorder %v1509, 0.0
    %v3276 = vand.u32 %v1509, 2147483648
    %v3277 = vsel %vm3275, %v3276, %v3274
    %v3278 = vrsqrt.pop %v1512
    %v3279 = vmul.f32 %v1512, %v3278
    %vm3280 = vcmp.eq.f32.partialorder %v1512, inf
    %v3281 = vsel %vm3280, %v1512, %v3279
    %vm3282 = vcmp.eq.f32.partialorder %v1512, 0.0
    %v3283 = vand.u32 %v1512, 2147483648
    %v3284 = vsel %vm3282, %v3283, %v3281
    %v3285 = vrsqrt.pop %v1515
    %v3286 = vmul.f32 %v1515, %v3285
    %vm3287 = vcmp.eq.f32.partialorder %v1515, inf
    %v3288 = vsel %vm3287, %v1515, %v3286
    %vm3289 = vcmp.eq.f32.partialorder %v1515, 0.0
    %v3290 = vand.u32 %v1515, 2147483648
    %v3291 = vsel %vm3289, %v3290, %v3288
    %v3292 = vrsqrt.pop %v1518
    %v3293 = vmul.f32 %v1518, %v3292
    %vm3294 = vcmp.eq.f32.partialorder %v1518, inf
    %v3295 = vsel %vm3294, %v1518, %v3293
    %vm3296 = vcmp.eq.f32.partialorder %v1518, 0.0
    %v3297 = vand.u32 %v1518, 2147483648
    %v3298 = vsel %vm3296, %v3297, %v3295
    %v3299 = vrsqrt.pop %v1521
    %v3300 = vmul.f32 %v1521, %v3299
    %vm3301 = vcmp.eq.f32.partialorder %v1521, inf
    %v3302 = vsel %vm3301, %v1521, %v3300
    %vm3303 = vcmp.eq.f32.partialorder %v1521, 0.0
    %v3304 = vand.u32 %v1521, 2147483648
    %v3305 = vsel %vm3303, %v3304, %v3302
    %v3306 = vrsqrt.pop %v1524
    %v3307 = vmul.f32 %v1524, %v3306
    %vm3308 = vcmp.eq.f32.partialorder %v1524, inf
    %v3309 = vsel %vm3308, %v1524, %v3307
    %vm3310 = vcmp.eq.f32.partialorder %v1524, 0.0
    %v3311 = vand.u32 %v1524, 2147483648
    %v3312 = vsel %vm3310, %v3311, %v3309
    %v3313 = vrsqrt.pop %v1527
    %v3314 = vmul.f32 %v1527, %v3313
    %vm3315 = vcmp.eq.f32.partialorder %v1527, inf
    %v3316 = vsel %vm3315, %v1527, %v3314
    %vm3317 = vcmp.eq.f32.partialorder %v1527, 0.0
    %v3318 = vand.u32 %v1527, 2147483648
    %v3319 = vsel %vm3317, %v3318, %v3316
    %v3320 = vlaneseq
    %v3321 = vshrl.u32 %v3320, 7
    %vm3322 = vcmp.eq.s32.totalorder %v3321, 0
    %v3579 = vlaneseq
    %v3580 = vand.u32 %v3579, 127
    %v3581 = vlaneseq
    %v3582 = vshrl.u32 %v3581, 7
    %v3583 = vsub.s32 %v3580, %v3582
    %v3584 = vrot.slane %v1534, %v3583
    %v3585 = vadd.s32 %v3580, 4294967288
    %v3586 = vlaneseq
    %v3587 = vshrl.u32 %v3586, 7
    %v3588 = vsub.s32 %v3585, %v3587
    %v3589 = vrot.slane %v1541, %v3588
    %vm3590 = vcmask 130112
    %v3591 = vsel %vm3590, %v3589, %v3584
    %v3592 = vadd.s32 %v3580, 4294967280
    %v3593 = vlaneseq
    %v3594 = vshrl.u32 %v3593, 7
    %v3595 = vsub.s32 %v3592, %v3594
    %v3596 = vrot.slane %v1548, %v3595
    %vm3597 = vcmask 195712
    %v3598 = vsel %vm3597, %v3596, %v3591
    %v3599 = vadd.s32 %v3580, 4294967272
    %v3600 = vlaneseq
    %v3601 = vshrl.u32 %v3600, 7
    %v3602 = vsub.s32 %v3599, %v3601
    %v3603 = vrot.slane %v1555, %v3602
    %vm3604 = vcmask 261312
    %v3605 = vsel %vm3604, %v3603, %v3598
    %v3606 = vadd.s32 %v3580, 4294967264
    %v3607 = vlaneseq
    %v3608 = vshrl.u32 %v3607, 7
    %v3609 = vsub.s32 %v3606, %v3608
    %v3610 = vrot.slane %v1562, %v3609
    %vm3611 = vcmask 326912
    %v3612 = vsel %vm3611, %v3610, %v3605
    %v3613 = vadd.s32 %v3580, 4294967256
    %v3614 = vlaneseq
    %v3615 = vshrl.u32 %v3614, 7
    %v3616 = vsub.s32 %v3613, %v3615
    %v3617 = vrot.slane %v1569, %v3616
    %vm3618 = vcmask 392512
    %v3619 = vsel %vm3618, %v3617, %v3612
    %v3620 = vadd.s32 %v3580, 4294967248
    %v3621 = vlaneseq
    %v3622 = vshrl.u32 %v3621, 7
    %v3623 = vsub.s32 %v3620, %v3622
    %v3624 = vrot.slane %v1576, %v3623
    %vm3625 = vcmask 458112
    %v3626 = vsel %vm3625, %v3624, %v3619
    %v3627 = vadd.s32 %v3580, 4294967240
    %v3628 = vlaneseq
    %v3629 = vshrl.u32 %v3628, 7
    %v3630 = vsub.s32 %v3627, %v3629
    %v3631 = vrot.slane %v1583, %v3630
    %vm3632 = vcmask 523712
    %v3633 = vsel %vm3632, %v3631, %v3626
    %v3634 = vadd.s32 %v3580, 4294967232
    %v3635 = vlaneseq
    %v3636 = vshrl.u32 %v3635, 7
    %v3637 = vsub.s32 %v3634, %v3636
    %v3638 = vrot.slane %v1590, %v3637
    %vm3639 = vcmask 589312
    %v3640 = vsel %vm3639, %v3638, %v3633
    %v3641 = vadd.s32 %v3580, 4294967224
    %v3642 = vlaneseq
    %v3643 = vshrl.u32 %v3642, 7
    %v3644 = vsub.s32 %v3641, %v3643
    %v3645 = vrot.slane %v1597, %v3644
    %vm3646 = vcmask 654912
    %v3647 = vsel %vm3646, %v3645, %v3640
    %v3648 = vadd.s32 %v3580, 4294967216
    %v3649 = vlaneseq
    %v3650 = vshrl.u32 %v3649, 7
    %v3651 = vsub.s32 %v3648, %v3650
    %v3652 = vrot.slane %v1604, %v3651
    %vm3653 = vcmask 720512
    %v3654 = vsel %vm3653, %v3652, %v3647
    %v3655 = vadd.s32 %v3580, 4294967208
    %v3656 = vlaneseq
    %v3657 = vshrl.u32 %v3656, 7
    %v3658 = vsub.s32 %v3655, %v3657
    %v3659 = vrot.slane %v1611, %v3658
    %vm3660 = vcmask 786112
    %v3661 = vsel %vm3660, %v3659, %v3654
    %v3662 = vadd.s32 %v3580, 4294967200
    %v3663 = vlaneseq
    %v3664 = vshrl.u32 %v3663, 7
    %v3665 = vsub.s32 %v3662, %v3664
    %v3666 = vrot.slane %v1618, %v3665
    %vm3667 = vcmask 851712
    %v3668 = vsel %vm3667, %v3666, %v3661
    %v3669 = vadd.s32 %v3580, 4294967192
    %v3670 = vlaneseq
    %v3671 = vshrl.u32 %v3670, 7
    %v3672 = vsub.s32 %v3669, %v3671
    %v3673 = vrot.slane %v1625, %v3672
    %vm3674 = vcmask 917312
    %v3675 = vsel %vm3674, %v3673, %v3668
    %v3676 = vadd.s32 %v3580, 4294967184
    %v3677 = vlaneseq
    %v3678 = vshrl.u32 %v3677, 7
    %v3679 = vsub.s32 %v3676, %v3678
    %v3680 = vrot.slane %v1632, %v3679
    %vm3681 = vcmask 982912
    %v3682 = vsel %vm3681, %v3680, %v3675
    %v3683 = vadd.s32 %v3580, 4294967176
    %v3684 = vlaneseq
    %v3685 = vshrl.u32 %v3684, 7
    %v3686 = vsub.s32 %v3683, %v3685
    %v3687 = vrot.slane %v1639, %v3686
    %vm3688 = vcmask 1048512
    %v3689 = vsel %vm3688, %v3687, %v3682
    %v3690 = vlaneseq
    %v3691 = vshrl.u32 %v3690, 7
    %v3692 = vsub.s32 %v3580, %v3691
    %v3693 = vrot.slane %v1646, %v3692
    %v3694 = vlaneseq
    %v3695 = vshrl.u32 %v3694, 7
    %v3696 = vsub.s32 %v3585, %v3695
    %v3697 = vrot.slane %v1653, %v3696
    %v3698 = vsel %vm3590, %v3697, %v3693
    %v3699 = vlaneseq
    %v3700 = vshrl.u32 %v3699, 7
    %v3701 = vsub.s32 %v3592, %v3700
    %v3702 = vrot.slane %v1660, %v3701
    %v3703 = vsel %vm3597, %v3702, %v3698
    %v3704 = vlaneseq
    %v3705 = vshrl.u32 %v3704, 7
    %v3706 = vsub.s32 %v3599, %v3705
    %v3707 = vrot.slane %v1667, %v3706
    %v3708 = vsel %vm3604, %v3707, %v3703
    %v3709 = vlaneseq
    %v3710 = vshrl.u32 %v3709, 7
    %v3711 = vsub.s32 %v3606, %v3710
    %v3712 = vrot.slane %v1674, %v3711
    %v3713 = vsel %vm3611, %v3712, %v3708
    %v3714 = vlaneseq
    %v3715 = vshrl.u32 %v3714, 7
    %v3716 = vsub.s32 %v3613, %v3715
    %v3717 = vrot.slane %v1681, %v3716
    %v3718 = vsel %vm3618, %v3717, %v3713
    %v3719 = vlaneseq
    %v3720 = vshrl.u32 %v3719, 7
    %v3721 = vsub.s32 %v3620, %v3720
    %v3722 = vrot.slane %v1688, %v3721
    %v3723 = vsel %vm3625, %v3722, %v3718
    %v3724 = vlaneseq
    %v3725 = vshrl.u32 %v3724, 7
    %v3726 = vsub.s32 %v3627, %v3725
    %v3727 = vrot.slane %v1695, %v3726
    %v3728 = vsel %vm3632, %v3727, %v3723
    %v3729 = vlaneseq
    %v3730 = vshrl.u32 %v3729, 7
    %v3731 = vsub.s32 %v3634, %v3730
    %v3732 = vrot.slane %v1702, %v3731
    %v3733 = vsel %vm3639, %v3732, %v3728
    %v3734 = vlaneseq
    %v3735 = vshrl.u32 %v3734, 7
    %v3736 = vsub.s32 %v3641, %v3735
    %v3737 = vrot.slane %v1709, %v3736
    %v3738 = vsel %vm3646, %v3737, %v3733
    %v3739 = vlaneseq
    %v3740 = vshrl.u32 %v3739, 7
    %v3741 = vsub.s32 %v3648, %v3740
    %v3742 = vrot.slane %v1716, %v3741
    %v3743 = vsel %vm3653, %v3742, %v3738
    %v3744 = vlaneseq
    %v3745 = vshrl.u32 %v3744, 7
    %v3746 = vsub.s32 %v3655, %v3745
    %v3747 = vrot.slane %v1723, %v3746
    %v3748 = vsel %vm3660, %v3747, %v3743
    %v3749 = vlaneseq
    %v3750 = vshrl.u32 %v3749, 7
    %v3751 = vsub.s32 %v3662, %v3750
    %v3752 = vrot.slane %v1730, %v3751
    %v3753 = vsel %vm3667, %v3752, %v3748
    %v3754 = vlaneseq
    %v3755 = vshrl.u32 %v3754, 7
    %v3756 = vsub.s32 %v3669, %v3755
    %v3757 = vrot.slane %v1737, %v3756
    %v3758 = vsel %vm3674, %v3757, %v3753
    %v3759 = vlaneseq
    %v3760 = vshrl.u32 %v3759, 7
    %v3761 = vsub.s32 %v3676, %v3760
    %v3762 = vrot.slane %v1744, %v3761
    %v3763 = vsel %vm3681, %v3762, %v3758
    %v3764 = vlaneseq
    %v3765 = vshrl.u32 %v3764, 7
    %v3766 = vsub.s32 %v3683, %v3765
    %v3767 = vrot.slane %v1751, %v3766
    %v3768 = vsel %vm3688, %v3767, %v3763
    %v3769 = vlaneseq
    %v3770 = vshrl.u32 %v3769, 7
    %v3771 = vsub.s32 %v3580, %v3770
    %v3772 = vrot.slane %v1758, %v3771
    %v3773 = vlaneseq
    %v3774 = vshrl.u32 %v3773, 7
    %v3775 = vsub.s32 %v3585, %v3774
    %v3776 = vrot.slane %v1765, %v3775
    %v3777 = vsel %vm3590, %v3776, %v3772
    %v3778 = vlaneseq
    %v3779 = vshrl.u32 %v3778, 7
    %v3780 = vsub.s32 %v3592, %v3779
    %v3781 = vrot.slane %v1772, %v3780
    %v3782 = vsel %vm3597, %v3781, %v3777
    %v3783 = vlaneseq
    %v3784 = vshrl.u32 %v3783, 7
    %v3785 = vsub.s32 %v3599, %v3784
    %v3786 = vrot.slane %v1779, %v3785
    %v3787 = vsel %vm3604, %v3786, %v3782
    %v3788 = vlaneseq
    %v3789 = vshrl.u32 %v3788, 7
    %v3790 = vsub.s32 %v3606, %v3789
    %v3791 = vrot.slane %v1786, %v3790
    %v3792 = vsel %vm3611, %v3791, %v3787
    %v3793 = vlaneseq
    %v3794 = vshrl.u32 %v3793, 7
    %v3795 = vsub.s32 %v3613, %v3794
    %v3796 = vrot.slane %v1793, %v3795
    %v3797 = vsel %vm3618, %v3796, %v3792
    %v3798 = vlaneseq
    %v3799 = vshrl.u32 %v3798, 7
    %v3800 = vsub.s32 %v3620, %v3799
    %v3801 = vrot.slane %v1800, %v3800
    %v3802 = vsel %vm3625, %v3801, %v3797
    %v3803 = vlaneseq
    %v3804 = vshrl.u32 %v3803, 7
    %v3805 = vsub.s32 %v3627, %v3804
    %v3806 = vrot.slane %v1807, %v3805
    %v3807 = vsel %vm3632, %v3806, %v3802
    %v3808 = vlaneseq
    %v3809 = vshrl.u32 %v3808, 7
    %v3810 = vsub.s32 %v3634, %v3809
    %v3811 = vrot.slane %v1814, %v3810
    %v3812 = vsel %vm3639, %v3811, %v3807
    %v3813 = vlaneseq
    %v3814 = vshrl.u32 %v3813, 7
    %v3815 = vsub.s32 %v3641, %v3814
    %v3816 = vrot.slane %v1821, %v3815
    %v3817 = vsel %vm3646, %v3816, %v3812
    %v3818 = vlaneseq
    %v3819 = vshrl.u32 %v3818, 7
    %v3820 = vsub.s32 %v3648, %v3819
    %v3821 = vrot.slane %v1828, %v3820
    %v3822 = vsel %vm3653, %v3821, %v3817
    %v3823 = vlaneseq
    %v3824 = vshrl.u32 %v3823, 7
    %v3825 = vsub.s32 %v3655, %v3824
    %v3826 = vrot.slane %v1835, %v3825
    %v3827 = vsel %vm3660, %v3826, %v3822
    %v3828 = vlaneseq
    %v3829 = vshrl.u32 %v3828, 7
    %v3830 = vsub.s32 %v3662, %v3829
    %v3831 = vrot.slane %v1842, %v3830
    %v3832 = vsel %vm3667, %v3831, %v3827
    %v3833 = vlaneseq
    %v3834 = vshrl.u32 %v3833, 7
    %v3835 = vsub.s32 %v3669, %v3834
    %v3836 = vrot.slane %v1849, %v3835
    %v3837 = vsel %vm3674, %v3836, %v3832
    %v3838 = vlaneseq
    %v3839 = vshrl.u32 %v3838, 7
    %v3840 = vsub.s32 %v3676, %v3839
    %v3841 = vrot.slane %v1856, %v3840
    %v3842 = vsel %vm3681, %v3841, %v3837
    %v3843 = vlaneseq
    %v3844 = vshrl.u32 %v3843, 7
    %v3845 = vsub.s32 %v3683, %v3844
    %v3846 = vrot.slane %v1863, %v3845
    %v3847 = vsel %vm3688, %v3846, %v3842
    %v3848 = vlaneseq
    %v3849 = vshrl.u32 %v3848, 7
    %v3850 = vsub.s32 %v3580, %v3849
    %v3851 = vrot.slane %v1870, %v3850
    %v3852 = vlaneseq
    %v3853 = vshrl.u32 %v3852, 7
    %v3854 = vsub.s32 %v3585, %v3853
    %v3855 = vrot.slane %v1877, %v3854
    %v3856 = vsel %vm3590, %v3855, %v3851
    %v3857 = vlaneseq
    %v3858 = vshrl.u32 %v3857, 7
    %v3859 = vsub.s32 %v3592, %v3858
    %v3860 = vrot.slane %v1884, %v3859
    %v3861 = vsel %vm3597, %v3860, %v3856
    %v3862 = vlaneseq
    %v3863 = vshrl.u32 %v3862, 7
    %v3864 = vsub.s32 %v3599, %v3863
    %v3865 = vrot.slane %v1891, %v3864
    %v3866 = vsel %vm3604, %v3865, %v3861
    %v3867 = vlaneseq
    %v3868 = vshrl.u32 %v3867, 7
    %v3869 = vsub.s32 %v3606, %v3868
    %v3870 = vrot.slane %v1898, %v3869
    %v3871 = vsel %vm3611, %v3870, %v3866
    %v3872 = vlaneseq
    %v3873 = vshrl.u32 %v3872, 7
    %v3874 = vsub.s32 %v3613, %v3873
    %v3875 = vrot.slane %v1905, %v3874
    %v3876 = vsel %vm3618, %v3875, %v3871
    %v3877 = vlaneseq
    %v3878 = vshrl.u32 %v3877, 7
    %v3879 = vsub.s32 %v3620, %v3878
    %v3880 = vrot.slane %v1912, %v3879
    %v3881 = vsel %vm3625, %v3880, %v3876
    %v3882 = vlaneseq
    %v3883 = vshrl.u32 %v3882, 7
    %v3884 = vsub.s32 %v3627, %v3883
    %v3885 = vrot.slane %v1919, %v3884
    %v3886 = vsel %vm3632, %v3885, %v3881
    %v3887 = vlaneseq
    %v3888 = vshrl.u32 %v3887, 7
    %v3889 = vsub.s32 %v3634, %v3888
    %v3890 = vrot.slane %v1926, %v3889
    %v3891 = vsel %vm3639, %v3890, %v3886
    %v3892 = vlaneseq
    %v3893 = vshrl.u32 %v3892, 7
    %v3894 = vsub.s32 %v3641, %v3893
    %v3895 = vrot.slane %v1933, %v3894
    %v3896 = vsel %vm3646, %v3895, %v3891
    %v3897 = vlaneseq
    %v3898 = vshrl.u32 %v3897, 7
    %v3899 = vsub.s32 %v3648, %v3898
    %v3900 = vrot.slane %v1940, %v3899
    %v3901 = vsel %vm3653, %v3900, %v3896
    %v3902 = vlaneseq
    %v3903 = vshrl.u32 %v3902, 7
    %v3904 = vsub.s32 %v3655, %v3903
    %v3905 = vrot.slane %v1947, %v3904
    %v3906 = vsel %vm3660, %v3905, %v3901
    %v3907 = vlaneseq
    %v3908 = vshrl.u32 %v3907, 7
    %v3909 = vsub.s32 %v3662, %v3908
    %v3910 = vrot.slane %v1954, %v3909
    %v3911 = vsel %vm3667, %v3910, %v3906
    %v3912 = vlaneseq
    %v3913 = vshrl.u32 %v3912, 7
    %v3914 = vsub.s32 %v3669, %v3913
    %v3915 = vrot.slane %v1961, %v3914
    %v3916 = vsel %vm3674, %v3915, %v3911
    %v3917 = vlaneseq
    %v3918 = vshrl.u32 %v3917, 7
    %v3919 = vsub.s32 %v3676, %v3918
    %v3920 = vrot.slane %v1968, %v3919
    %v3921 = vsel %vm3681, %v3920, %v3916
    %v3922 = vlaneseq
    %v3923 = vshrl.u32 %v3922, 7
    %v3924 = vsub.s32 %v3683, %v3923
    %v3925 = vrot.slane %v1975, %v3924
    %v3926 = vsel %vm3688, %v3925, %v3921
    %v3927 = vlaneseq
    %v3928 = vshrl.u32 %v3927, 7
    %v3929 = vsub.s32 %v3580, %v3928
    %v3930 = vrot.slane %v1982, %v3929
    %v3931 = vlaneseq
    %v3932 = vshrl.u32 %v3931, 7
    %v3933 = vsub.s32 %v3585, %v3932
    %v3934 = vrot.slane %v1989, %v3933
    %v3935 = vsel %vm3590, %v3934, %v3930
    %v3936 = vlaneseq
    %v3937 = vshrl.u32 %v3936, 7
    %v3938 = vsub.s32 %v3592, %v3937
    %v3939 = vrot.slane %v1996, %v3938
    %v3940 = vsel %vm3597, %v3939, %v3935
    %v3941 = vlaneseq
    %v3942 = vshrl.u32 %v3941, 7
    %v3943 = vsub.s32 %v3599, %v3942
    %v3944 = vrot.slane %v2003, %v3943
    %v3945 = vsel %vm3604, %v3944, %v3940
    %v3946 = vlaneseq
    %v3947 = vshrl.u32 %v3946, 7
    %v3948 = vsub.s32 %v3606, %v3947
    %v3949 = vrot.slane %v2010, %v3948
    %v3950 = vsel %vm3611, %v3949, %v3945
    %v3951 = vlaneseq
    %v3952 = vshrl.u32 %v3951, 7
    %v3953 = vsub.s32 %v3613, %v3952
    %v3954 = vrot.slane %v2017, %v3953
    %v3955 = vsel %vm3618, %v3954, %v3950
    %v3956 = vlaneseq
    %v3957 = vshrl.u32 %v3956, 7
    %v3958 = vsub.s32 %v3620, %v3957
    %v3959 = vrot.slane %v2024, %v3958
    %v3960 = vsel %vm3625, %v3959, %v3955
    %v3961 = vlaneseq
    %v3962 = vshrl.u32 %v3961, 7
    %v3963 = vsub.s32 %v3627, %v3962
    %v3964 = vrot.slane %v2031, %v3963
    %v3965 = vsel %vm3632, %v3964, %v3960
    %v3966 = vlaneseq
    %v3967 = vshrl.u32 %v3966, 7
    %v3968 = vsub.s32 %v3634, %v3967
    %v3969 = vrot.slane %v2038, %v3968
    %v3970 = vsel %vm3639, %v3969, %v3965
    %v3971 = vlaneseq
    %v3972 = vshrl.u32 %v3971, 7
    %v3973 = vsub.s32 %v3641, %v3972
    %v3974 = vrot.slane %v2045, %v3973
    %v3975 = vsel %vm3646, %v3974, %v3970
    %v3976 = vlaneseq
    %v3977 = vshrl.u32 %v3976, 7
    %v3978 = vsub.s32 %v3648, %v3977
    %v3979 = vrot.slane %v2052, %v3978
    %v3980 = vsel %vm3653, %v3979, %v3975
    %v3981 = vlaneseq
    %v3982 = vshrl.u32 %v3981, 7
    %v3983 = vsub.s32 %v3655, %v3982
    %v3984 = vrot.slane %v2059, %v3983
    %v3985 = vsel %vm3660, %v3984, %v3980
    %v3986 = vlaneseq
    %v3987 = vshrl.u32 %v3986, 7
    %v3988 = vsub.s32 %v3662, %v3987
    %v3989 = vrot.slane %v2066, %v3988
    %v3990 = vsel %vm3667, %v3989, %v3985
    %v3991 = vlaneseq
    %v3992 = vshrl.u32 %v3991, 7
    %v3993 = vsub.s32 %v3669, %v3992
    %v3994 = vrot.slane %v2073, %v3993
    %v3995 = vsel %vm3674, %v3994, %v3990
    %v3996 = vlaneseq
    %v3997 = vshrl.u32 %v3996, 7
    %v3998 = vsub.s32 %v3676, %v3997
    %v3999 = vrot.slane %v2080, %v3998
    %v4000 = vsel %vm3681, %v3999, %v3995
    %v4001 = vlaneseq
    %v4002 = vshrl.u32 %v4001, 7
    %v4003 = vsub.s32 %v3683, %v4002
    %v4004 = vrot.slane %v2087, %v4003
    %v4005 = vsel %vm3688, %v4004, %v4000
    %v4006 = vlaneseq
    %v4007 = vshrl.u32 %v4006, 7
    %v4008 = vsub.s32 %v3580, %v4007
    %v4009 = vrot.slane %v2094, %v4008
    %v4010 = vlaneseq
    %v4011 = vshrl.u32 %v4010, 7
    %v4012 = vsub.s32 %v3585, %v4011
    %v4013 = vrot.slane %v2101, %v4012
    %v4014 = vsel %vm3590, %v4013, %v4009
    %v4015 = vlaneseq
    %v4016 = vshrl.u32 %v4015, 7
    %v4017 = vsub.s32 %v3592, %v4016
    %v4018 = vrot.slane %v2108, %v4017
    %v4019 = vsel %vm3597, %v4018, %v4014
    %v4020 = vlaneseq
    %v4021 = vshrl.u32 %v4020, 7
    %v4022 = vsub.s32 %v3599, %v4021
    %v4023 = vrot.slane %v2115, %v4022
    %v4024 = vsel %vm3604, %v4023, %v4019
    %v4025 = vlaneseq
    %v4026 = vshrl.u32 %v4025, 7
    %v4027 = vsub.s32 %v3606, %v4026
    %v4028 = vrot.slane %v2122, %v4027
    %v4029 = vsel %vm3611, %v4028, %v4024
    %v4030 = vlaneseq
    %v4031 = vshrl.u32 %v4030, 7
    %v4032 = vsub.s32 %v3613, %v4031
    %v4033 = vrot.slane %v2129, %v4032
    %v4034 = vsel %vm3618, %v4033, %v4029
    %v4035 = vlaneseq
    %v4036 = vshrl.u32 %v4035, 7
    %v4037 = vsub.s32 %v3620, %v4036
    %v4038 = vrot.slane %v2136, %v4037
    %v4039 = vsel %vm3625, %v4038, %v4034
    %v4040 = vlaneseq
    %v4041 = vshrl.u32 %v4040, 7
    %v4042 = vsub.s32 %v3627, %v4041
    %v4043 = vrot.slane %v2143, %v4042
    %v4044 = vsel %vm3632, %v4043, %v4039
    %v4045 = vlaneseq
    %v4046 = vshrl.u32 %v4045, 7
    %v4047 = vsub.s32 %v3634, %v4046
    %v4048 = vrot.slane %v2150, %v4047
    %v4049 = vsel %vm3639, %v4048, %v4044
    %v4050 = vlaneseq
    %v4051 = vshrl.u32 %v4050, 7
    %v4052 = vsub.s32 %v3641, %v4051
    %v4053 = vrot.slane %v2157, %v4052
    %v4054 = vsel %vm3646, %v4053, %v4049
    %v4055 = vlaneseq
    %v4056 = vshrl.u32 %v4055, 7
    %v4057 = vsub.s32 %v3648, %v4056
    %v4058 = vrot.slane %v2164, %v4057
    %v4059 = vsel %vm3653, %v4058, %v4054
    %v4060 = vlaneseq
    %v4061 = vshrl.u32 %v4060, 7
    %v4062 = vsub.s32 %v3655, %v4061
    %v4063 = vrot.slane %v2171, %v4062
    %v4064 = vsel %vm3660, %v4063, %v4059
    %v4065 = vlaneseq
    %v4066 = vshrl.u32 %v4065, 7
    %v4067 = vsub.s32 %v3662, %v4066
    %v4068 = vrot.slane %v2178, %v4067
    %v4069 = vsel %vm3667, %v4068, %v4064
    %v4070 = vlaneseq
    %v4071 = vshrl.u32 %v4070, 7
    %v4072 = vsub.s32 %v3669, %v4071
    %v4073 = vrot.slane %v2185, %v4072
    %v4074 = vsel %vm3674, %v4073, %v4069
    %v4075 = vlaneseq
    %v4076 = vshrl.u32 %v4075, 7
    %v4077 = vsub.s32 %v3676, %v4076
    %v4078 = vrot.slane %v2192, %v4077
    %v4079 = vsel %vm3681, %v4078, %v4074
    %v4080 = vlaneseq
    %v4081 = vshrl.u32 %v4080, 7
    %v4082 = vsub.s32 %v3683, %v4081
    %v4083 = vrot.slane %v2199, %v4082
    %v4084 = vsel %vm3688, %v4083, %v4079
    %v4085 = vlaneseq
    %v4086 = vshrl.u32 %v4085, 7
    %v4087 = vsub.s32 %v3580, %v4086
    %v4088 = vrot.slane %v2206, %v4087
    %v4089 = vlaneseq
    %v4090 = vshrl.u32 %v4089, 7
    %v4091 = vsub.s32 %v3585, %v4090
    %v4092 = vrot.slane %v2213, %v4091
    %v4093 = vsel %vm3590, %v4092, %v4088
    %v4094 = vlaneseq
    %v4095 = vshrl.u32 %v4094, 7
    %v4096 = vsub.s32 %v3592, %v4095
    %v4097 = vrot.slane %v2220, %v4096
    %v4098 = vsel %vm3597, %v4097, %v4093
    %v4099 = vlaneseq
    %v4100 = vshrl.u32 %v4099, 7
    %v4101 = vsub.s32 %v3599, %v4100
    %v4102 = vrot.slane %v2227, %v4101
    %v4103 = vsel %vm3604, %v4102, %v4098
    %v4104 = vlaneseq
    %v4105 = vshrl.u32 %v4104, 7
    %v4106 = vsub.s32 %v3606, %v4105
    %v4107 = vrot.slane %v2234, %v4106
    %v4108 = vsel %vm3611, %v4107, %v4103
    %v4109 = vlaneseq
    %v4110 = vshrl.u32 %v4109, 7
    %v4111 = vsub.s32 %v3613, %v4110
    %v4112 = vrot.slane %v2241, %v4111
    %v4113 = vsel %vm3618, %v4112, %v4108
    %v4114 = vlaneseq
    %v4115 = vshrl.u32 %v4114, 7
    %v4116 = vsub.s32 %v3620, %v4115
    %v4117 = vrot.slane %v2248, %v4116
    %v4118 = vsel %vm3625, %v4117, %v4113
    %v4119 = vlaneseq
    %v4120 = vshrl.u32 %v4119, 7
    %v4121 = vsub.s32 %v3627, %v4120
    %v4122 = vrot.slane %v2255, %v4121
    %v4123 = vsel %vm3632, %v4122, %v4118
    %v4124 = vlaneseq
    %v4125 = vshrl.u32 %v4124, 7
    %v4126 = vsub.s32 %v3634, %v4125
    %v4127 = vrot.slane %v2262, %v4126
    %v4128 = vsel %vm3639, %v4127, %v4123
    %v4129 = vlaneseq
    %v4130 = vshrl.u32 %v4129, 7
    %v4131 = vsub.s32 %v3641, %v4130
    %v4132 = vrot.slane %v2269, %v4131
    %v4133 = vsel %vm3646, %v4132, %v4128
    %v4134 = vlaneseq
    %v4135 = vshrl.u32 %v4134, 7
    %v4136 = vsub.s32 %v3648, %v4135
    %v4137 = vrot.slane %v2276, %v4136
    %v4138 = vsel %vm3653, %v4137, %v4133
    %v4139 = vlaneseq
    %v4140 = vshrl.u32 %v4139, 7
    %v4141 = vsub.s32 %v3655, %v4140
    %v4142 = vrot.slane %v2283, %v4141
    %v4143 = vsel %vm3660, %v4142, %v4138
    %v4144 = vlaneseq
    %v4145 = vshrl.u32 %v4144, 7
    %v4146 = vsub.s32 %v3662, %v4145
    %v4147 = vrot.slane %v2290, %v4146
    %v4148 = vsel %vm3667, %v4147, %v4143
    %v4149 = vlaneseq
    %v4150 = vshrl.u32 %v4149, 7
    %v4151 = vsub.s32 %v3669, %v4150
    %v4152 = vrot.slane %v2297, %v4151
    %v4153 = vsel %vm3674, %v4152, %v4148
    %v4154 = vlaneseq
    %v4155 = vshrl.u32 %v4154, 7
    %v4156 = vsub.s32 %v3676, %v4155
    %v4157 = vrot.slane %v2304, %v4156
    %v4158 = vsel %vm3681, %v4157, %v4153
    %v4159 = vlaneseq
    %v4160 = vshrl.u32 %v4159, 7
    %v4161 = vsub.s32 %v3683, %v4160
    %v4162 = vrot.slane %v2311, %v4161
    %v4163 = vsel %vm3688, %v4162, %v4158
    %v4164 = vlaneseq
    %v4165 = vshrl.u32 %v4164, 7
    %v4166 = vsub.s32 %v3580, %v4165
    %v4167 = vrot.slane %v2318, %v4166
    %v4168 = vlaneseq
    %v4169 = vshrl.u32 %v4168, 7
    %v4170 = vsub.s32 %v3585, %v4169
    %v4171 = vrot.slane %v2325, %v4170
    %v4172 = vsel %vm3590, %v4171, %v4167
    %v4173 = vlaneseq
    %v4174 = vshrl.u32 %v4173, 7
    %v4175 = vsub.s32 %v3592, %v4174
    %v4176 = vrot.slane %v2332, %v4175
    %v4177 = vsel %vm3597, %v4176, %v4172
    %v4178 = vlaneseq
    %v4179 = vshrl.u32 %v4178, 7
    %v4180 = vsub.s32 %v3599, %v4179
    %v4181 = vrot.slane %v2339, %v4180
    %v4182 = vsel %vm3604, %v4181, %v4177
    %v4183 = vlaneseq
    %v4184 = vshrl.u32 %v4183, 7
    %v4185 = vsub.s32 %v3606, %v4184
    %v4186 = vrot.slane %v2346, %v4185
    %v4187 = vsel %vm3611, %v4186, %v4182
    %v4188 = vlaneseq
    %v4189 = vshrl.u32 %v4188, 7
    %v4190 = vsub.s32 %v3613, %v4189
    %v4191 = vrot.slane %v2353, %v4190
    %v4192 = vsel %vm3618, %v4191, %v4187
    %v4193 = vlaneseq
    %v4194 = vshrl.u32 %v4193, 7
    %v4195 = vsub.s32 %v3620, %v4194
    %v4196 = vrot.slane %v2360, %v4195
    %v4197 = vsel %vm3625, %v4196, %v4192
    %v4198 = vlaneseq
    %v4199 = vshrl.u32 %v4198, 7
    %v4200 = vsub.s32 %v3627, %v4199
    %v4201 = vrot.slane %v2367, %v4200
    %v4202 = vsel %vm3632, %v4201, %v4197
    %v4203 = vlaneseq
    %v4204 = vshrl.u32 %v4203, 7
    %v4205 = vsub.s32 %v3634, %v4204
    %v4206 = vrot.slane %v2374, %v4205
    %v4207 = vsel %vm3639, %v4206, %v4202
    %v4208 = vlaneseq
    %v4209 = vshrl.u32 %v4208, 7
    %v4210 = vsub.s32 %v3641, %v4209
    %v4211 = vrot.slane %v2381, %v4210
    %v4212 = vsel %vm3646, %v4211, %v4207
    %v4213 = vlaneseq
    %v4214 = vshrl.u32 %v4213, 7
    %v4215 = vsub.s32 %v3648, %v4214
    %v4216 = vrot.slane %v2388, %v4215
    %v4217 = vsel %vm3653, %v4216, %v4212
    %v4218 = vlaneseq
    %v4219 = vshrl.u32 %v4218, 7
    %v4220 = vsub.s32 %v3655, %v4219
    %v4221 = vrot.slane %v2395, %v4220
    %v4222 = vsel %vm3660, %v4221, %v4217
    %v4223 = vlaneseq
    %v4224 = vshrl.u32 %v4223, 7
    %v4225 = vsub.s32 %v3662, %v4224
    %v4226 = vrot.slane %v2402, %v4225
    %v4227 = vsel %vm3667, %v4226, %v4222
    %v4228 = vlaneseq
    %v4229 = vshrl.u32 %v4228, 7
    %v4230 = vsub.s32 %v3669, %v4229
    %v4231 = vrot.slane %v2409, %v4230
    %v4232 = vsel %vm3674, %v4231, %v4227
    %v4233 = vlaneseq
    %v4234 = vshrl.u32 %v4233, 7
    %v4235 = vsub.s32 %v3676, %v4234
    %v4236 = vrot.slane %v2416, %v4235
    %v4237 = vsel %vm3681, %v4236, %v4232
    %v4238 = vlaneseq
    %v4239 = vshrl.u32 %v4238, 7
    %v4240 = vsub.s32 %v3683, %v4239
    %v4241 = vrot.slane %v2423, %v4240
    %v4242 = vsel %vm3688, %v4241, %v4237
    %v4243 = vlaneseq
    %v4244 = vshrl.u32 %v4243, 7
    %v4245 = vsub.s32 %v3580, %v4244
    %v4246 = vrot.slane %v2430, %v4245
    %v4247 = vlaneseq
    %v4248 = vshrl.u32 %v4247, 7
    %v4249 = vsub.s32 %v3585, %v4248
    %v4250 = vrot.slane %v2437, %v4249
    %v4251 = vsel %vm3590, %v4250, %v4246
    %v4252 = vlaneseq
    %v4253 = vshrl.u32 %v4252, 7
    %v4254 = vsub.s32 %v3592, %v4253
    %v4255 = vrot.slane %v2444, %v4254
    %v4256 = vsel %vm3597, %v4255, %v4251
    %v4257 = vlaneseq
    %v4258 = vshrl.u32 %v4257, 7
    %v4259 = vsub.s32 %v3599, %v4258
    %v4260 = vrot.slane %v2451, %v4259
    %v4261 = vsel %vm3604, %v4260, %v4256
    %v4262 = vlaneseq
    %v4263 = vshrl.u32 %v4262, 7
    %v4264 = vsub.s32 %v3606, %v4263
    %v4265 = vrot.slane %v2458, %v4264
    %v4266 = vsel %vm3611, %v4265, %v4261
    %v4267 = vlaneseq
    %v4268 = vshrl.u32 %v4267, 7
    %v4269 = vsub.s32 %v3613, %v4268
    %v4270 = vrot.slane %v2465, %v4269
    %v4271 = vsel %vm3618, %v4270, %v4266
    %v4272 = vlaneseq
    %v4273 = vshrl.u32 %v4272, 7
    %v4274 = vsub.s32 %v3620, %v4273
    %v4275 = vrot.slane %v2472, %v4274
    %v4276 = vsel %vm3625, %v4275, %v4271
    %v4277 = vlaneseq
    %v4278 = vshrl.u32 %v4277, 7
    %v4279 = vsub.s32 %v3627, %v4278
    %v4280 = vrot.slane %v2479, %v4279
    %v4281 = vsel %vm3632, %v4280, %v4276
    %v4282 = vlaneseq
    %v4283 = vshrl.u32 %v4282, 7
    %v4284 = vsub.s32 %v3634, %v4283
    %v4285 = vrot.slane %v2486, %v4284
    %v4286 = vsel %vm3639, %v4285, %v4281
    %v4287 = vlaneseq
    %v4288 = vshrl.u32 %v4287, 7
    %v4289 = vsub.s32 %v3641, %v4288
    %v4290 = vrot.slane %v2493, %v4289
    %v4291 = vsel %vm3646, %v4290, %v4286
    %v4292 = vlaneseq
    %v4293 = vshrl.u32 %v4292, 7
    %v4294 = vsub.s32 %v3648, %v4293
    %v4295 = vrot.slane %v2500, %v4294
    %v4296 = vsel %vm3653, %v4295, %v4291
    %v4297 = vlaneseq
    %v4298 = vshrl.u32 %v4297, 7
    %v4299 = vsub.s32 %v3655, %v4298
    %v4300 = vrot.slane %v2507, %v4299
    %v4301 = vsel %vm3660, %v4300, %v4296
    %v4302 = vlaneseq
    %v4303 = vshrl.u32 %v4302, 7
    %v4304 = vsub.s32 %v3662, %v4303
    %v4305 = vrot.slane %v2514, %v4304
    %v4306 = vsel %vm3667, %v4305, %v4301
    %v4307 = vlaneseq
    %v4308 = vshrl.u32 %v4307, 7
    %v4309 = vsub.s32 %v3669, %v4308
    %v4310 = vrot.slane %v2521, %v4309
    %v4311 = vsel %vm3674, %v4310, %v4306
    %v4312 = vlaneseq
    %v4313 = vshrl.u32 %v4312, 7
    %v4314 = vsub.s32 %v3676, %v4313
    %v4315 = vrot.slane %v2528, %v4314
    %v4316 = vsel %vm3681, %v4315, %v4311
    %v4317 = vlaneseq
    %v4318 = vshrl.u32 %v4317, 7
    %v4319 = vsub.s32 %v3683, %v4318
    %v4320 = vrot.slane %v2535, %v4319
    %v4321 = vsel %vm3688, %v4320, %v4316
    %v4322 = vlaneseq
    %v4323 = vshrl.u32 %v4322, 7
    %v4324 = vsub.s32 %v3580, %v4323
    %v4325 = vrot.slane %v2542, %v4324
    %v4326 = vlaneseq
    %v4327 = vshrl.u32 %v4326, 7
    %v4328 = vsub.s32 %v3585, %v4327
    %v4329 = vrot.slane %v2549, %v4328
    %v4330 = vsel %vm3590, %v4329, %v4325
    %v4331 = vlaneseq
    %v4332 = vshrl.u32 %v4331, 7
    %v4333 = vsub.s32 %v3592, %v4332
    %v4334 = vrot.slane %v2556, %v4333
    %v4335 = vsel %vm3597, %v4334, %v4330
    %v4336 = vlaneseq
    %v4337 = vshrl.u32 %v4336, 7
    %v4338 = vsub.s32 %v3599, %v4337
    %v4339 = vrot.slane %v2563, %v4338
    %v4340 = vsel %vm3604, %v4339, %v4335
    %v4341 = vlaneseq
    %v4342 = vshrl.u32 %v4341, 7
    %v4343 = vsub.s32 %v3606, %v4342
    %v4344 = vrot.slane %v2570, %v4343
    %v4345 = vsel %vm3611, %v4344, %v4340
    %v4346 = vlaneseq
    %v4347 = vshrl.u32 %v4346, 7
    %v4348 = vsub.s32 %v3613, %v4347
    %v4349 = vrot.slane %v2577, %v4348
    %v4350 = vsel %vm3618, %v4349, %v4345
    %v4351 = vlaneseq
    %v4352 = vshrl.u32 %v4351, 7
    %v4353 = vsub.s32 %v3620, %v4352
    %v4354 = vrot.slane %v2584, %v4353
    %v4355 = vsel %vm3625, %v4354, %v4350
    %v4356 = vlaneseq
    %v4357 = vshrl.u32 %v4356, 7
    %v4358 = vsub.s32 %v3627, %v4357
    %v4359 = vrot.slane %v2591, %v4358
    %v4360 = vsel %vm3632, %v4359, %v4355
    %v4361 = vlaneseq
    %v4362 = vshrl.u32 %v4361, 7
    %v4363 = vsub.s32 %v3634, %v4362
    %v4364 = vrot.slane %v2598, %v4363
    %v4365 = vsel %vm3639, %v4364, %v4360
    %v4366 = vlaneseq
    %v4367 = vshrl.u32 %v4366, 7
    %v4368 = vsub.s32 %v3641, %v4367
    %v4369 = vrot.slane %v2605, %v4368
    %v4370 = vsel %vm3646, %v4369, %v4365
    %v4371 = vlaneseq
    %v4372 = vshrl.u32 %v4371, 7
    %v4373 = vsub.s32 %v3648, %v4372
    %v4374 = vrot.slane %v2612, %v4373
    %v4375 = vsel %vm3653, %v4374, %v4370
    %v4376 = vlaneseq
    %v4377 = vshrl.u32 %v4376, 7
    %v4378 = vsub.s32 %v3655, %v4377
    %v4379 = vrot.slane %v2619, %v4378
    %v4380 = vsel %vm3660, %v4379, %v4375
    %v4381 = vlaneseq
    %v4382 = vshrl.u32 %v4381, 7
    %v4383 = vsub.s32 %v3662, %v4382
    %v4384 = vrot.slane %v2626, %v4383
    %v4385 = vsel %vm3667, %v4384, %v4380
    %v4386 = vlaneseq
    %v4387 = vshrl.u32 %v4386, 7
    %v4388 = vsub.s32 %v3669, %v4387
    %v4389 = vrot.slane %v2633, %v4388
    %v4390 = vsel %vm3674, %v4389, %v4385
    %v4391 = vlaneseq
    %v4392 = vshrl.u32 %v4391, 7
    %v4393 = vsub.s32 %v3676, %v4392
    %v4394 = vrot.slane %v2640, %v4393
    %v4395 = vsel %vm3681, %v4394, %v4390
    %v4396 = vlaneseq
    %v4397 = vshrl.u32 %v4396, 7
    %v4398 = vsub.s32 %v3683, %v4397
    %v4399 = vrot.slane %v2647, %v4398
    %v4400 = vsel %vm3688, %v4399, %v4395
    %v4401 = vlaneseq
    %v4402 = vshrl.u32 %v4401, 7
    %v4403 = vsub.s32 %v3580, %v4402
    %v4404 = vrot.slane %v2654, %v4403
    %v4405 = vlaneseq
    %v4406 = vshrl.u32 %v4405, 7
    %v4407 = vsub.s32 %v3585, %v4406
    %v4408 = vrot.slane %v2661, %v4407
    %v4409 = vsel %vm3590, %v4408, %v4404
    %v4410 = vlaneseq
    %v4411 = vshrl.u32 %v4410, 7
    %v4412 = vsub.s32 %v3592, %v4411
    %v4413 = vrot.slane %v2668, %v4412
    %v4414 = vsel %vm3597, %v4413, %v4409
    %v4415 = vlaneseq
    %v4416 = vshrl.u32 %v4415, 7
    %v4417 = vsub.s32 %v3599, %v4416
    %v4418 = vrot.slane %v2675, %v4417
    %v4419 = vsel %vm3604, %v4418, %v4414
    %v4420 = vlaneseq
    %v4421 = vshrl.u32 %v4420, 7
    %v4422 = vsub.s32 %v3606, %v4421
    %v4423 = vrot.slane %v2682, %v4422
    %v4424 = vsel %vm3611, %v4423, %v4419
    %v4425 = vlaneseq
    %v4426 = vshrl.u32 %v4425, 7
    %v4427 = vsub.s32 %v3613, %v4426
    %v4428 = vrot.slane %v2689, %v4427
    %v4429 = vsel %vm3618, %v4428, %v4424
    %v4430 = vlaneseq
    %v4431 = vshrl.u32 %v4430, 7
    %v4432 = vsub.s32 %v3620, %v4431
    %v4433 = vrot.slane %v2696, %v4432
    %v4434 = vsel %vm3625, %v4433, %v4429
    %v4435 = vlaneseq
    %v4436 = vshrl.u32 %v4435, 7
    %v4437 = vsub.s32 %v3627, %v4436
    %v4438 = vrot.slane %v2703, %v4437
    %v4439 = vsel %vm3632, %v4438, %v4434
    %v4440 = vlaneseq
    %v4441 = vshrl.u32 %v4440, 7
    %v4442 = vsub.s32 %v3634, %v4441
    %v4443 = vrot.slane %v2710, %v4442
    %v4444 = vsel %vm3639, %v4443, %v4439
    %v4445 = vlaneseq
    %v4446 = vshrl.u32 %v4445, 7
    %v4447 = vsub.s32 %v3641, %v4446
    %v4448 = vrot.slane %v2717, %v4447
    %v4449 = vsel %vm3646, %v4448, %v4444
    %v4450 = vlaneseq
    %v4451 = vshrl.u32 %v4450, 7
    %v4452 = vsub.s32 %v3648, %v4451
    %v4453 = vrot.slane %v2724, %v4452
    %v4454 = vsel %vm3653, %v4453, %v4449
    %v4455 = vlaneseq
    %v4456 = vshrl.u32 %v4455, 7
    %v4457 = vsub.s32 %v3655, %v4456
    %v4458 = vrot.slane %v2731, %v4457
    %v4459 = vsel %vm3660, %v4458, %v4454
    %v4460 = vlaneseq
    %v4461 = vshrl.u32 %v4460, 7
    %v4462 = vsub.s32 %v3662, %v4461
    %v4463 = vrot.slane %v2738, %v4462
    %v4464 = vsel %vm3667, %v4463, %v4459
    %v4465 = vlaneseq
    %v4466 = vshrl.u32 %v4465, 7
    %v4467 = vsub.s32 %v3669, %v4466
    %v4468 = vrot.slane %v2745, %v4467
    %v4469 = vsel %vm3674, %v4468, %v4464
    %v4470 = vlaneseq
    %v4471 = vshrl.u32 %v4470, 7
    %v4472 = vsub.s32 %v3676, %v4471
    %v4473 = vrot.slane %v2752, %v4472
    %v4474 = vsel %vm3681, %v4473, %v4469
    %v4475 = vlaneseq
    %v4476 = vshrl.u32 %v4475, 7
    %v4477 = vsub.s32 %v3683, %v4476
    %v4478 = vrot.slane %v2759, %v4477
    %v4479 = vsel %vm3688, %v4478, %v4474
    %v4480 = vlaneseq
    %v4481 = vshrl.u32 %v4480, 7
    %v4482 = vsub.s32 %v3580, %v4481
    %v4483 = vrot.slane %v2766, %v4482
    %v4484 = vlaneseq
    %v4485 = vshrl.u32 %v4484, 7
    %v4486 = vsub.s32 %v3585, %v4485
    %v4487 = vrot.slane %v2773, %v4486
    %v4488 = vsel %vm3590, %v4487, %v4483
    %v4489 = vlaneseq
    %v4490 = vshrl.u32 %v4489, 7
    %v4491 = vsub.s32 %v3592, %v4490
    %v4492 = vrot.slane %v2780, %v4491
    %v4493 = vsel %vm3597, %v4492, %v4488
    %v4494 = vlaneseq
    %v4495 = vshrl.u32 %v4494, 7
    %v4496 = vsub.s32 %v3599, %v4495
    %v4497 = vrot.slane %v2787, %v4496
    %v4498 = vsel %vm3604, %v4497, %v4493
    %v4499 = vlaneseq
    %v4500 = vshrl.u32 %v4499, 7
    %v4501 = vsub.s32 %v3606, %v4500
    %v4502 = vrot.slane %v2794, %v4501
    %v4503 = vsel %vm3611, %v4502, %v4498
    %v4504 = vlaneseq
    %v4505 = vshrl.u32 %v4504, 7
    %v4506 = vsub.s32 %v3613, %v4505
    %v4507 = vrot.slane %v2801, %v4506
    %v4508 = vsel %vm3618, %v4507, %v4503
    %v4509 = vlaneseq
    %v4510 = vshrl.u32 %v4509, 7
    %v4511 = vsub.s32 %v3620, %v4510
    %v4512 = vrot.slane %v2808, %v4511
    %v4513 = vsel %vm3625, %v4512, %v4508
    %v4514 = vlaneseq
    %v4515 = vshrl.u32 %v4514, 7
    %v4516 = vsub.s32 %v3627, %v4515
    %v4517 = vrot.slane %v2815, %v4516
    %v4518 = vsel %vm3632, %v4517, %v4513
    %v4519 = vlaneseq
    %v4520 = vshrl.u32 %v4519, 7
    %v4521 = vsub.s32 %v3634, %v4520
    %v4522 = vrot.slane %v2822, %v4521
    %v4523 = vsel %vm3639, %v4522, %v4518
    %v4524 = vlaneseq
    %v4525 = vshrl.u32 %v4524, 7
    %v4526 = vsub.s32 %v3641, %v4525
    %v4527 = vrot.slane %v2829, %v4526
    %v4528 = vsel %vm3646, %v4527, %v4523
    %v4529 = vlaneseq
    %v4530 = vshrl.u32 %v4529, 7
    %v4531 = vsub.s32 %v3648, %v4530
    %v4532 = vrot.slane %v2836, %v4531
    %v4533 = vsel %vm3653, %v4532, %v4528
    %v4534 = vlaneseq
    %v4535 = vshrl.u32 %v4534, 7
    %v4536 = vsub.s32 %v3655, %v4535
    %v4537 = vrot.slane %v2843, %v4536
    %v4538 = vsel %vm3660, %v4537, %v4533
    %v4539 = vlaneseq
    %v4540 = vshrl.u32 %v4539, 7
    %v4541 = vsub.s32 %v3662, %v4540
    %v4542 = vrot.slane %v2850, %v4541
    %v4543 = vsel %vm3667, %v4542, %v4538
    %v4544 = vlaneseq
    %v4545 = vshrl.u32 %v4544, 7
    %v4546 = vsub.s32 %v3669, %v4545
    %v4547 = vrot.slane %v2857, %v4546
    %v4548 = vsel %vm3674, %v4547, %v4543
    %v4549 = vlaneseq
    %v4550 = vshrl.u32 %v4549, 7
    %v4551 = vsub.s32 %v3676, %v4550
    %v4552 = vrot.slane %v2864, %v4551
    %v4553 = vsel %vm3681, %v4552, %v4548
    %v4554 = vlaneseq
    %v4555 = vshrl.u32 %v4554, 7
    %v4556 = vsub.s32 %v3683, %v4555
    %v4557 = vrot.slane %v2871, %v4556
    %v4558 = vsel %vm3688, %v4557, %v4553
    %v4559 = vlaneseq
    %v4560 = vshrl.u32 %v4559, 7
    %v4561 = vsub.s32 %v3580, %v4560
    %v4562 = vrot.slane %v2878, %v4561
    %v4563 = vlaneseq
    %v4564 = vshrl.u32 %v4563, 7
    %v4565 = vsub.s32 %v3585, %v4564
    %v4566 = vrot.slane %v2885, %v4565
    %v4567 = vsel %vm3590, %v4566, %v4562
    %v4568 = vlaneseq
    %v4569 = vshrl.u32 %v4568, 7
    %v4570 = vsub.s32 %v3592, %v4569
    %v4571 = vrot.slane %v2892, %v4570
    %v4572 = vsel %vm3597, %v4571, %v4567
    %v4573 = vlaneseq
    %v4574 = vshrl.u32 %v4573, 7
    %v4575 = vsub.s32 %v3599, %v4574
    %v4576 = vrot.slane %v2899, %v4575
    %v4577 = vsel %vm3604, %v4576, %v4572
    %v4578 = vlaneseq
    %v4579 = vshrl.u32 %v4578, 7
    %v4580 = vsub.s32 %v3606, %v4579
    %v4581 = vrot.slane %v2906, %v4580
    %v4582 = vsel %vm3611, %v4581, %v4577
    %v4583 = vlaneseq
    %v4584 = vshrl.u32 %v4583, 7
    %v4585 = vsub.s32 %v3613, %v4584
    %v4586 = vrot.slane %v2913, %v4585
    %v4587 = vsel %vm3618, %v4586, %v4582
    %v4588 = vlaneseq
    %v4589 = vshrl.u32 %v4588, 7
    %v4590 = vsub.s32 %v3620, %v4589
    %v4591 = vrot.slane %v2920, %v4590
    %v4592 = vsel %vm3625, %v4591, %v4587
    %v4593 = vlaneseq
    %v4594 = vshrl.u32 %v4593, 7
    %v4595 = vsub.s32 %v3627, %v4594
    %v4596 = vrot.slane %v2927, %v4595
    %v4597 = vsel %vm3632, %v4596, %v4592
    %v4598 = vlaneseq
    %v4599 = vshrl.u32 %v4598, 7
    %v4600 = vsub.s32 %v3634, %v4599
    %v4601 = vrot.slane %v2934, %v4600
    %v4602 = vsel %vm3639, %v4601, %v4597
    %v4603 = vlaneseq
    %v4604 = vshrl.u32 %v4603, 7
    %v4605 = vsub.s32 %v3641, %v4604
    %v4606 = vrot.slane %v2941, %v4605
    %v4607 = vsel %vm3646, %v4606, %v4602
    %v4608 = vlaneseq
    %v4609 = vshrl.u32 %v4608, 7
    %v4610 = vsub.s32 %v3648, %v4609
    %v4611 = vrot.slane %v2948, %v4610
    %v4612 = vsel %vm3653, %v4611, %v4607
    %v4613 = vlaneseq
    %v4614 = vshrl.u32 %v4613, 7
    %v4615 = vsub.s32 %v3655, %v4614
    %v4616 = vrot.slane %v2955, %v4615
    %v4617 = vsel %vm3660, %v4616, %v4612
    %v4618 = vlaneseq
    %v4619 = vshrl.u32 %v4618, 7
    %v4620 = vsub.s32 %v3662, %v4619
    %v4621 = vrot.slane %v2962, %v4620
    %v4622 = vsel %vm3667, %v4621, %v4617
    %v4623 = vlaneseq
    %v4624 = vshrl.u32 %v4623, 7
    %v4625 = vsub.s32 %v3669, %v4624
    %v4626 = vrot.slane %v2969, %v4625
    %v4627 = vsel %vm3674, %v4626, %v4622
    %v4628 = vlaneseq
    %v4629 = vshrl.u32 %v4628, 7
    %v4630 = vsub.s32 %v3676, %v4629
    %v4631 = vrot.slane %v2976, %v4630
    %v4632 = vsel %vm3681, %v4631, %v4627
    %v4633 = vlaneseq
    %v4634 = vshrl.u32 %v4633, 7
    %v4635 = vsub.s32 %v3683, %v4634
    %v4636 = vrot.slane %v2983, %v4635
    %v4637 = vsel %vm3688, %v4636, %v4632
    %v4638 = vlaneseq
    %v4639 = vshrl.u32 %v4638, 7
    %v4640 = vsub.s32 %v3580, %v4639
    %v4641 = vrot.slane %v2990, %v4640
    %v4642 = vlaneseq
    %v4643 = vshrl.u32 %v4642, 7
    %v4644 = vsub.s32 %v3585, %v4643
    %v4645 = vrot.slane %v2997, %v4644
    %v4646 = vsel %vm3590, %v4645, %v4641
    %v4647 = vlaneseq
    %v4648 = vshrl.u32 %v4647, 7
    %v4649 = vsub.s32 %v3592, %v4648
    %v4650 = vrot.slane %v3004, %v4649
    %v4651 = vsel %vm3597, %v4650, %v4646
    %v4652 = vlaneseq
    %v4653 = vshrl.u32 %v4652, 7
    %v4654 = vsub.s32 %v3599, %v4653
    %v4655 = vrot.slane %v3011, %v4654
    %v4656 = vsel %vm3604, %v4655, %v4651
    %v4657 = vlaneseq
    %v4658 = vshrl.u32 %v4657, 7
    %v4659 = vsub.s32 %v3606, %v4658
    %v4660 = vrot.slane %v3018, %v4659
    %v4661 = vsel %vm3611, %v4660, %v4656
    %v4662 = vlaneseq
    %v4663 = vshrl.u32 %v4662, 7
    %v4664 = vsub.s32 %v3613, %v4663
    %v4665 = vrot.slane %v3025, %v4664
    %v4666 = vsel %vm3618, %v4665, %v4661
    %v4667 = vlaneseq
    %v4668 = vshrl.u32 %v4667, 7
    %v4669 = vsub.s32 %v3620, %v4668
    %v4670 = vrot.slane %v3032, %v4669
    %v4671 = vsel %vm3625, %v4670, %v4666
    %v4672 = vlaneseq
    %v4673 = vshrl.u32 %v4672, 7
    %v4674 = vsub.s32 %v3627, %v4673
    %v4675 = vrot.slane %v3039, %v4674
    %v4676 = vsel %vm3632, %v4675, %v4671
    %v4677 = vlaneseq
    %v4678 = vshrl.u32 %v4677, 7
    %v4679 = vsub.s32 %v3634, %v4678
    %v4680 = vrot.slane %v3046, %v4679
    %v4681 = vsel %vm3639, %v4680, %v4676
    %v4682 = vlaneseq
    %v4683 = vshrl.u32 %v4682, 7
    %v4684 = vsub.s32 %v3641, %v4683
    %v4685 = vrot.slane %v3053, %v4684
    %v4686 = vsel %vm3646, %v4685, %v4681
    %v4687 = vlaneseq
    %v4688 = vshrl.u32 %v4687, 7
    %v4689 = vsub.s32 %v3648, %v4688
    %v4690 = vrot.slane %v3060, %v4689
    %v4691 = vsel %vm3653, %v4690, %v4686
    %v4692 = vlaneseq
    %v4693 = vshrl.u32 %v4692, 7
    %v4694 = vsub.s32 %v3655, %v4693
    %v4695 = vrot.slane %v3067, %v4694
    %v4696 = vsel %vm3660, %v4695, %v4691
    %v4697 = vlaneseq
    %v4698 = vshrl.u32 %v4697, 7
    %v4699 = vsub.s32 %v3662, %v4698
    %v4700 = vrot.slane %v3074, %v4699
    %v4701 = vsel %vm3667, %v4700, %v4696
    %v4702 = vlaneseq
    %v4703 = vshrl.u32 %v4702, 7
    %v4704 = vsub.s32 %v3669, %v4703
    %v4705 = vrot.slane %v3081, %v4704
    %v4706 = vsel %vm3674, %v4705, %v4701
    %v4707 = vlaneseq
    %v4708 = vshrl.u32 %v4707, 7
    %v4709 = vsub.s32 %v3676, %v4708
    %v4710 = vrot.slane %v3088, %v4709
    %v4711 = vsel %vm3681, %v4710, %v4706
    %v4712 = vlaneseq
    %v4713 = vshrl.u32 %v4712, 7
    %v4714 = vsub.s32 %v3683, %v4713
    %v4715 = vrot.slane %v3095, %v4714
    %v4716 = vsel %vm3688, %v4715, %v4711
    %v4717 = vlaneseq
    %v4718 = vshrl.u32 %v4717, 7
    %v4719 = vsub.s32 %v3580, %v4718
    %v4720 = vrot.slane %v3102, %v4719
    %v4721 = vlaneseq
    %v4722 = vshrl.u32 %v4721, 7
    %v4723 = vsub.s32 %v3585, %v4722
    %v4724 = vrot.slane %v3109, %v4723
    %v4725 = vsel %vm3590, %v4724, %v4720
    %v4726 = vlaneseq
    %v4727 = vshrl.u32 %v4726, 7
    %v4728 = vsub.s32 %v3592, %v4727
    %v4729 = vrot.slane %v3116, %v4728
    %v4730 = vsel %vm3597, %v4729, %v4725
    %v4731 = vlaneseq
    %v4732 = vshrl.u32 %v4731, 7
    %v4733 = vsub.s32 %v3599, %v4732
    %v4734 = vrot.slane %v3123, %v4733
    %v4735 = vsel %vm3604, %v4734, %v4730
    %v4736 = vlaneseq
    %v4737 = vshrl.u32 %v4736, 7
    %v4738 = vsub.s32 %v3606, %v4737
    %v4739 = vrot.slane %v3130, %v4738
    %v4740 = vsel %vm3611, %v4739, %v4735
    %v4741 = vlaneseq
    %v4742 = vshrl.u32 %v4741, 7
    %v4743 = vsub.s32 %v3613, %v4742
    %v4744 = vrot.slane %v3137, %v4743
    %v4745 = vsel %vm3618, %v4744, %v4740
    %v4746 = vlaneseq
    %v4747 = vshrl.u32 %v4746, 7
    %v4748 = vsub.s32 %v3620, %v4747
    %v4749 = vrot.slane %v3144, %v4748
    %v4750 = vsel %vm3625, %v4749, %v4745
    %v4751 = vlaneseq
    %v4752 = vshrl.u32 %v4751, 7
    %v4753 = vsub.s32 %v3627, %v4752
    %v4754 = vrot.slane %v3151, %v4753
    %v4755 = vsel %vm3632, %v4754, %v4750
    %v4756 = vlaneseq
    %v4757 = vshrl.u32 %v4756, 7
    %v4758 = vsub.s32 %v3634, %v4757
    %v4759 = vrot.slane %v3158, %v4758
    %v4760 = vsel %vm3639, %v4759, %v4755
    %v4761 = vlaneseq
    %v4762 = vshrl.u32 %v4761, 7
    %v4763 = vsub.s32 %v3641, %v4762
    %v4764 = vrot.slane %v3165, %v4763
    %v4765 = vsel %vm3646, %v4764, %v4760
    %v4766 = vlaneseq
    %v4767 = vshrl.u32 %v4766, 7
    %v4768 = vsub.s32 %v3648, %v4767
    %v4769 = vrot.slane %v3172, %v4768
    %v4770 = vsel %vm3653, %v4769, %v4765
    %v4771 = vlaneseq
    %v4772 = vshrl.u32 %v4771, 7
    %v4773 = vsub.s32 %v3655, %v4772
    %v4774 = vrot.slane %v3179, %v4773
    %v4775 = vsel %vm3660, %v4774, %v4770
    %v4776 = vlaneseq
    %v4777 = vshrl.u32 %v4776, 7
    %v4778 = vsub.s32 %v3662, %v4777
    %v4779 = vrot.slane %v3186, %v4778
    %v4780 = vsel %vm3667, %v4779, %v4775
    %v4781 = vlaneseq
    %v4782 = vshrl.u32 %v4781, 7
    %v4783 = vsub.s32 %v3669, %v4782
    %v4784 = vrot.slane %v3193, %v4783
    %v4785 = vsel %vm3674, %v4784, %v4780
    %v4786 = vlaneseq
    %v4787 = vshrl.u32 %v4786, 7
    %v4788 = vsub.s32 %v3676, %v4787
    %v4789 = vrot.slane %v3200, %v4788
    %v4790 = vsel %vm3681, %v4789, %v4785
    %v4791 = vlaneseq
    %v4792 = vshrl.u32 %v4791, 7
    %v4793 = vsub.s32 %v3683, %v4792
    %v4794 = vrot.slane %v3207, %v4793
    %v4795 = vsel %vm3688, %v4794, %v4790
    %v4796 = vlaneseq
    %v4797 = vshrl.u32 %v4796, 7
    %v4798 = vsub.s32 %v3580, %v4797
    %v4799 = vrot.slane %v3214, %v4798
    %v4800 = vlaneseq
    %v4801 = vshrl.u32 %v4800, 7
    %v4802 = vsub.s32 %v3585, %v4801
    %v4803 = vrot.slane %v3221, %v4802
    %v4804 = vsel %vm3590, %v4803, %v4799
    %v4805 = vlaneseq
    %v4806 = vshrl.u32 %v4805, 7
    %v4807 = vsub.s32 %v3592, %v4806
    %v4808 = vrot.slane %v3228, %v4807
    %v4809 = vsel %vm3597, %v4808, %v4804
    %v4810 = vlaneseq
    %v4811 = vshrl.u32 %v4810, 7
    %v4812 = vsub.s32 %v3599, %v4811
    %v4813 = vrot.slane %v3235, %v4812
    %v4814 = vsel %vm3604, %v4813, %v4809
    %v4815 = vlaneseq
    %v4816 = vshrl.u32 %v4815, 7
    %v4817 = vsub.s32 %v3606, %v4816
    %v4818 = vrot.slane %v3242, %v4817
    %v4819 = vsel %vm3611, %v4818, %v4814
    %v4820 = vlaneseq
    %v4821 = vshrl.u32 %v4820, 7
    %v4822 = vsub.s32 %v3613, %v4821
    %v4823 = vrot.slane %v3249, %v4822
    %v4824 = vsel %vm3618, %v4823, %v4819
    %v4825 = vlaneseq
    %v4826 = vshrl.u32 %v4825, 7
    %v4827 = vsub.s32 %v3620, %v4826
    %v4828 = vrot.slane %v3256, %v4827
    %v4829 = vsel %vm3625, %v4828, %v4824
    %v4830 = vlaneseq
    %v4831 = vshrl.u32 %v4830, 7
    %v4832 = vsub.s32 %v3627, %v4831
    %v4833 = vrot.slane %v3263, %v4832
    %v4834 = vsel %vm3632, %v4833, %v4829
    %v4835 = vlaneseq
    %v4836 = vshrl.u32 %v4835, 7
    %v4837 = vsub.s32 %v3634, %v4836
    %v4838 = vrot.slane %v3270, %v4837
    %v4839 = vsel %vm3639, %v4838, %v4834
    %v4840 = vlaneseq
    %v4841 = vshrl.u32 %v4840, 7
    %v4842 = vsub.s32 %v3641, %v4841
    %v4843 = vrot.slane %v3277, %v4842
    %v4844 = vsel %vm3646, %v4843, %v4839
    %v4845 = vlaneseq
    %v4846 = vshrl.u32 %v4845, 7
    %v4847 = vsub.s32 %v3648, %v4846
    %v4848 = vrot.slane %v3284, %v4847
    %v4849 = vsel %vm3653, %v4848, %v4844
    %v4850 = vlaneseq
    %v4851 = vshrl.u32 %v4850, 7
    %v4852 = vsub.s32 %v3655, %v4851
    %v4853 = vrot.slane %v3291, %v4852
    %v4854 = vsel %vm3660, %v4853, %v4849
    %v4855 = vlaneseq
    %v4856 = vshrl.u32 %v4855, 7
    %v4857 = vsub.s32 %v3662, %v4856
    %v4858 = vrot.slane %v3298, %v4857
    %v4859 = vsel %vm3667, %v4858, %v4854
    %v4860 = vlaneseq
    %v4861 = vshrl.u32 %v4860, 7
    %v4862 = vsub.s32 %v3669, %v4861
    %v4863 = vrot.slane %v3305, %v4862
    %v4864 = vsel %vm3674, %v4863, %v4859
    %v4865 = vlaneseq
    %v4866 = vshrl.u32 %v4865, 7
    %v4867 = vsub.s32 %v3676, %v4866
    %v4868 = vrot.slane %v3312, %v4867
    %v4869 = vsel %vm3681, %v4868, %v4864
    %v4870 = vlaneseq
    %v4871 = vshrl.u32 %v4870, 7
    %v4872 = vsub.s32 %v3683, %v4871
    %v4873 = vrot.slane %v3319, %v4872
    %v4874 = vsel %vm3688, %v4873, %v4869
    %vm4875 = vcmask 1041409
    %v4876 = vsel %vm4875, %v3847, %v3689
    %vm4877 = vcmask 1042434
    %v4878 = vsel %vm4877, %v4005, %v4876
    %vm4879 = vcmask 1043459
    %v4880 = vsel %vm4879, %v4163, %v4878
    %v4881 = vsel %vm4875, %v3926, %v3768
    %v4882 = vsel %vm4877, %v4084, %v4881
    %v4883 = vsel %vm4879, %v4242, %v4882
    %v4884 = vsel %vm4875, %v4479, %v4321
    %v4885 = vsel %vm4877, %v4637, %v4884
    %v4886 = vsel %vm4879, %v4795, %v4885
    %v4887 = vsel %vm4875, %v4558, %v4400
    %v4888 = vsel %vm4877, %v4716, %v4887
    %v4889 = vsel %vm4879, %v4874, %v4888
    %v4894 = vsel %vm3322, 0.0, %v4880
    %v4895 = vsel %vm3322, 0.0, %v4883
    %v4896 = vsel %vm3322, 0.0, %v4886
    %v4897 = vsel %vm3322, 0.0, %v4889
    %vm4898 = vcmask 1043456
    %v4899 = vsel %vm4898, %v4894, 0.0
    %v4900 = vsel %vm4898, %v4895, 0.0
    %v4901 = vadd.f32 %v4899, %v4900
    %v4902 = vsel %vm4898, %v4896, 0.0
    %v4903 = vadd.f32 %v4901, %v4902
    %v4904 = vsel %vm4898, %v4897, 0.0
    %v4905 = vadd.f32 %v4903, %v4904
    %4906 = vadd.xlane.f32.xlu0 %v4905
    %v4907 = vpop.xlane.xlu0 %4906
    %v4908 = vrot.slane %v4907, 4
    %v4909 = vadd.f32 %v4907, %v4908
    %v4910 = vrot.slane %v4909, 2
    %v4911 = vadd.f32 %v4909, %v4910
    %v4912 = vrot.slane %v4911, 1
    %v4913 = vadd.f32 %v4911, %v4912
    %s4914 = vtos %v4913
    %v4915 = vstv %s4914
    %v4916 = vmul.f32 %v4915, 0.00048828125
    %vm4917 = vcmp.gt.f32.partialorder %v4916, 0.0
    %v4918 = vrcp.pop %v4916
    %v4919 = vmul.f32 %v4916, %v4918
    %v4920 = vsub.f32 2.0, %v4919
    %v4921 = vmul.f32 %v4918, %v4920
    %v4922 = vmul.f32 %v4916, %v4921
    %v4923 = vsub.f32 2.0, %v4922
    %v4924 = vmul.f32 %v4921, %v4923
    %v4925 = vmul.f32 %v4894, %v4924
    %v4926 = vmul.f32 %v4895, %v4924
    %v4927 = vmul.f32 %v4896, %v4924
    %v4928 = vmul.f32 %v4897, %v4924
    %v4929 = vsel %vm4917, 1, 0
    %vm4930 = vcmp.eq.s32.totalorder %v4929, 1
    %v4931 = vsel %vm4930, %v4925, 0.0
    %v4932 = vsel %vm4930, %v4926, 0.0
    %v4933 = vsel %vm4930, %v4927, 0.0
    %v4934 = vsel %vm4930, %v4928, 0.0
    %v4935 = vld [vmem:[%s2] sm:$0xff]
    %v4936 = vld [vmem:[%s2 + $0x8] sm:$0xff]
    %v4939 = vcombine.high %v4935, %v4935
    %v4940 = vcombine.high %v4936, %v4936
    %v4943 = vsel %vm4898, %v4935, -inf
    %v4944 = vrot.slane %v4943, 4
    %v4945 = vmax.f32 %v4943, %v4944
    %v4946 = vrot.slane %v4945, 2
    %v4947 = vmax.f32 %v4945, %v4946
    %v4948 = vrot.slane %v4947, 1
    %v4949 = vmax.f32 %v4947, %v4948
    %v4950 = vsel %vm4898, %v4939, -inf
    %v4951 = vrot.slane %v4950, 4
    %v4952 = vmax.f32 %v4950, %v4951
    %v4953 = vrot.slane %v4952, 2
    %v4954 = vmax.f32 %v4952, %v4953
    %v4955 = vrot.slane %v4954, 1
    %v4956 = vmax.f32 %v4954, %v4955
    %v4957 = vsel %vm4898, %v4936, -inf
    %v4958 = vrot.slane %v4957, 4
    %v4959 = vmax.f32 %v4957, %v4958
    %v4960 = vrot.slane %v4959, 2
    %v4961 = vmax.f32 %v4959, %v4960
    %v4962 = vrot.slane %v4961, 1
    %v4963 = vmax.f32 %v4961, %v4962
    %v4964 = vsel %vm4898, %v4940, -inf
    %v4965 = vrot.slane %v4964, 4
    %v4966 = vmax.f32 %v4964, %v4965
    %v4967 = vrot.slane %v4966, 2
    %v4968 = vmax.f32 %v4966, %v4967
    %v4969 = vrot.slane %v4968, 1
    %v4970 = vmax.f32 %v4968, %v4969
    %v4975 = vcombine.low %v4949, %v4956
    %v4976 = vcombine.low %v4963, %v4970
    %v4979 = vsub.f32 %v4935, %v4975
    %v4980 = vsub.f32 %v4936, %v4976
    %v4981 = vmul.f32 %v4979, 1.442695
    %v4982 = vpow.pop %v4981
    %v4983 = vmul.f32 %v4980, 1.442695
    %v4984 = vpow.pop %v4983
    %v4987 = vcombine.high %v4982, %v4982
    %v4988 = vcombine.high %v4984, %v4984
    %v4991 = vsel %vm4898, %v4982, 0.0
    %v4992 = vrot.slane %v4991, 4
    %v4993 = vadd.f32 %v4991, %v4992
    %v4994 = vrot.slane %v4993, 2
    %v4995 = vadd.f32 %v4993, %v4994
    %v4996 = vrot.slane %v4995, 1
    %v4997 = vadd.f32 %v4995, %v4996
    %v4998 = vsel %vm4898, %v4987, 0.0
    %v4999 = vrot.slane %v4998, 4
    %v5000 = vadd.f32 %v4998, %v4999
    %v5001 = vrot.slane %v5000, 2
    %v5002 = vadd.f32 %v5000, %v5001
    %v5003 = vrot.slane %v5002, 1
    %v5004 = vadd.f32 %v5002, %v5003
    %v5005 = vsel %vm4898, %v4984, 0.0
    %v5006 = vrot.slane %v5005, 4
    %v5007 = vadd.f32 %v5005, %v5006
    %v5008 = vrot.slane %v5007, 2
    %v5009 = vadd.f32 %v5007, %v5008
    %v5010 = vrot.slane %v5009, 1
    %v5011 = vadd.f32 %v5009, %v5010
    %v5012 = vsel %vm4898, %v4988, 0.0
    %v5013 = vrot.slane %v5012, 4
    %v5014 = vadd.f32 %v5012, %v5013
    %v5015 = vrot.slane %v5014, 2
    %v5016 = vadd.f32 %v5014, %v5015
    %v5017 = vrot.slane %v5016, 1
    %v5018 = vadd.f32 %v5016, %v5017
    %v5019 = vrcp.pop %v4997
    %v5020 = vrcp.pop %v5004
    %v5021 = vrcp.pop %v5011
    %v5022 = vrcp.pop %v5018
    %v5023 = vmul.f32 %v4997, %v5019
    %v5024 = vmul.f32 %v5004, %v5020
    %v5025 = vmul.f32 %v5011, %v5021
    %v5026 = vmul.f32 %v5018, %v5022
    %v5027 = vsub.f32 2.0, %v5023
    %v5028 = vsub.f32 2.0, %v5024
    %v5029 = vsub.f32 2.0, %v5025
    %v5030 = vsub.f32 2.0, %v5026
    %v5031 = vmul.f32 %v5019, %v5027
    %v5032 = vmul.f32 %v5020, %v5028
    %v5033 = vmul.f32 %v5021, %v5029
    %v5034 = vmul.f32 %v5022, %v5030
    %v5035 = vmul.f32 %v4997, %v5031
    %v5036 = vmul.f32 %v5004, %v5032
    %v5037 = vmul.f32 %v5011, %v5033
    %v5038 = vmul.f32 %v5018, %v5034
    %v5039 = vsub.f32 2.0, %v5035
    %v5040 = vsub.f32 2.0, %v5036
    %v5041 = vsub.f32 2.0, %v5037
    %v5042 = vsub.f32 2.0, %v5038
    %v5043 = vmul.f32 %v5031, %v5039
    %v5044 = vmul.f32 %v5032, %v5040
    %v5045 = vmul.f32 %v5033, %v5041
    %v5046 = vmul.f32 %v5034, %v5042
    %v5051 = vcombine.low %v5043, %v5044
    %v5052 = vcombine.low %v5045, %v5046
    %v5055 = vmul.f32 %v4982, %v5051
    %v5056 = vmul.f32 %v4984, %v5052
    %v5059 = vcombine.high %v5055, %v5055
    %v5060 = vcombine.high %v5056, %v5056
    %v5063 = vmul.f32 %v4931, %v5055
    %v5064 = vmul.f32 %v4932, %v5059
    %v5065 = vmul.f32 %v4933, %v5056
    %v5066 = vmul.f32 %v4934, %v5060
    %v5071 = vcombine.low %v5063, %v5064
    %v5072 = vcombine.low %v5065, %v5066
    %5075 = vst [vmem:[%s3] sm:$0xff] %v5071
    %5076 = vst [vmem:[%s3 + $0x8] sm:$0xff] %v5072
    // Predicated region
    $region18: #{boundary_loss.1} parent=1 // pred_check
      _
    $region19: #{boundary_loss.1} parent=1 // pred_check_branch
      %5078 = sbr.rel (0) target = $region21
    $region20: #{boundary_loss.1} parent=1 // pred_region
      _
    $region21: #{boundary_loss.1} parent=1 // pred_fallthru
      _
    // Predicated region
    $region22: #{boundary_loss.1} parent=1 // pred_check
      _
    $region23: #{boundary_loss.1} parent=1 // pred_check_branch
      %5080 = sbr.rel (0) target = $region25
    $region24: #{boundary_loss.1} parent=1 // pred_region
      _
    $region25: #{boundary_loss.1} parent=1 // pred_fallthru
      _
    %5081 = vsyncpa [#allocation3], 1

</llo_original>
